<compile_context>
chip_gen: v7x
topology: tpu7x:2x2x1
jax: 0.10.0
libtpu: 0.0.40
codegen_flags: <defaults>
</compile_context>

<pallas_src>
import jax
import jax.numpy as jnp
from jax.experimental import pallas as pl
from jax.experimental.pallas import tpu as pltpu


def _conv1x1_kernel(w_ref, x_ref, o_ref):
    # w_ref: (Cout, Cin)   resident weights
    # x_ref: (Cin, HW)     one batch element's activations
    # o_ref: (Cout, HW)    output tile
    o_ref[...] = jnp.dot(
        w_ref[...], x_ref[...], preferred_element_type=jnp.float32
    ).astype(o_ref.dtype)


def conv2d_1x1(x_nchw, weight_oihw):
    """1x1 stride-1 conv, no bias.

    x_nchw:      [N, Cin, H, W]
    weight_oihw: [Cout, Cin, 1, 1]  (PyTorch Conv2d weight layout)
    returns:     [N, Cout, H, W]
    """
    N, Cin, H, W = x_nchw.shape
    Cout = weight_oihw.shape[0]
    HW = H * W

    # Free reshapes only (no transposes, no extra XLA copy kernels).
    x3 = x_nchw.reshape(N, Cin, HW)          # (N, Cin, HW)
    w2 = weight_oihw.reshape(Cout, Cin)      # (Cout, Cin)

    itemsize = jnp.dtype(x_nchw.dtype).itemsize
    cost = pl.CostEstimate(
        flops=2 * N * Cout * Cin * HW,
        transcendentals=0,
        bytes_accessed=(w2.size + x3.size + N * Cout * HW) * itemsize,
    )

    out3 = pl.pallas_call(
        _conv1x1_kernel,
        out_shape=jax.ShapeDtypeStruct((N, Cout, HW), x_nchw.dtype),
        grid=(N,),
        in_specs=[
            # Weight: same block every grid step -> stays resident in VMEM.
            pl.BlockSpec((Cout, Cin), lambda n: (0, 0)),
            # One batch element per grid step; batch dim squeezed away.
            pl.BlockSpec((None, Cin, HW), lambda n: (n, 0, 0)),
        ],
        out_specs=pl.BlockSpec((None, Cout, HW), lambda n: (n, 0, 0)),
        compiler_params=pltpu.CompilerParams(
            dimension_semantics=("parallel",)
        ),
        cost_estimate=cost,
    )(w2, x3)

    # Free reshape back to NCHW.
    return out3.reshape(N, Cout, H, W)


if __name__ == "__main__":
    key = jax.random.PRNGKey(0)
    kx, kw = jax.random.split(key)

    # Shapes implied by the module's forward: x442 = randn(1, 1824, 7, 7),
    # Conv2d(1824, 304, kernel_size=1, bias=False).
    N, Cin, H, W, Cout = 1, 1824, 7, 7, 304

    x = jax.random.normal(kx, (N, Cin, H, W), dtype=jnp.float32)
    # Deterministic synthetic weights (kaiming-ish scale).
    w = jax.random.normal(kw, (Cout, Cin, 1, 1), dtype=jnp.float32) * (
        1.0 / jnp.sqrt(Cin)
    )

    y = conv2d_1x1(x, w)
    y = jax.block_until_ready(y)

    # Sanity check against plain-JAX reference (1x1 conv == channel matmul).
    ref = jnp.einsum("nchw,oc->nohw", x, w.reshape(Cout, Cin))
    assert y.shape == (N, Cout, H, W)
    assert jnp.allclose(y, ref, atol=1e-3, rtol=1e-3)

    print("KERNEL_OK")
</pallas_src>

<mosaic_0001>
module attributes {stable_mosaic.version = 11 : i64} {
  func.func @_conv1x1_kernel(%arg0: i32, %arg1: memref<304x1824xf32, #tpu.memory_space<vmem>>, %arg2: memref<1x1824x49xf32, #tpu.memory_space<vmem>>, %arg3: memref<1x304x49xf32, #tpu.memory_space<vmem>>) attributes {dimension_semantics = [#tpu.dimension_semantics<parallel>], iteration_bounds = array<i64: 1>, scalar_prefetch = 0 : i64, scratch_operands = 0 : i64, tpu.core_type = #tpu.core_type<tc>, window_params = [{pipeline_mode = #tpu.pipeline_mode<synchronous>, transform_indices = @transform_0, window_bounds = array<i64: 304, 1824>}, {transform_indices = @transform_1, window_bounds = array<i64: 1, 1824, 49>}, {transform_indices = @transform_2, window_bounds = array<i64: 1, 304, 49>}]} {
    %c0 = arith.constant 0 : index
    %c0_0 = arith.constant 0 : index
    %0 = vector.load %arg1[%c0, %c0_0] : memref<304x1824xf32, #tpu.memory_space<vmem>>, vector<304x1824xf32>
    %c0_1 = arith.constant 0 : index
    %c0_2 = arith.constant 0 : index
    %c0_3 = arith.constant 0 : index
    %1 = vector.load %arg2[%c0_1, %c0_2, %c0_3] : memref<1x1824x49xf32, #tpu.memory_space<vmem>>, vector<1x1824x49xf32>
    %2 = vector.shape_cast %1 : vector<1x1824x49xf32> to vector<1824x49xf32>
    %cst = arith.constant dense<0.000000e+00> : vector<304x49xf32>
    %3 = tpu.matmul %0, %2, %cst {dimension_numbers = #tpu.dot_dimension_numbers<[1], [0], [0], [1], [0, 0, 1, 1], [], []>} : vector<304x1824xf32>, vector<1824x49xf32>, vector<304x49xf32> -> vector<304x49xf32>
    %c0_4 = arith.constant 0 : index
    %c0_5 = arith.constant 0 : index
    %c0_6 = arith.constant 0 : index
    %4 = vector.load %arg3[%c0_4, %c0_5, %c0_6] : memref<1x304x49xf32, #tpu.memory_space<vmem>>, vector<1x304x49xf32>
    %5 = vector.shape_cast %4 : vector<1x304x49xf32> to vector<304x49xf32>
    %6 = vector.shape_cast %3 : vector<304x49xf32> to vector<1x304x49xf32>
    tpu.vector_store %arg3[%c0_4, %c0_5, %c0_6], %6 {strides = array<i32>} : memref<1x304x49xf32, #tpu.memory_space<vmem>>, vector<1x304x49xf32>,
    return
  }
  func.func @transform_0(%arg0: i32) -> (i32, i32) {
    %c0_i32 = arith.constant 0 : i32
    %c0_i32_0 = arith.constant 0 : i32
    %c0_i32_1 = arith.constant 0 : i32
    return %c0_i32, %c0_i32_0 : i32, i32
  }
  func.func @transform_1(%arg0: i32) -> (i32, i32, i32) {
    %c0_i32 = arith.constant 0 : i32
    %c0_i32_0 = arith.constant 0 : i32
    %c0_i32_1 = arith.constant 0 : i32
    return %arg0, %c0_i32, %c0_i32_0 : i32, i32, i32
  }
  func.func @transform_2(%arg0: i32) -> (i32, i32, i32) {
    %c0_i32 = arith.constant 0 : i32
    %c0_i32_0 = arith.constant 0 : i32
    %c0_i32_1 = arith.constant 0 : i32
    return %arg0, %c0_i32, %c0_i32_0 : i32, i32, i32
  }
}

</mosaic_0001>

<llo_original>
// kernel: tpu_custom_call.1
$region0: #{tpu_custom_call.1}
  #allocation0 [shape = 'u32[]', space=smem, size = 0x4, offset = 0x4, fixed_abs, tag = 'smem constant byte address 0x4 - core index']
  #allocation1 [shape = 'u32[144,128]{1,0:T(1,128)}', space=vmem, size = 0x12000, scoped, tag = 'internal scratch']
  %s0 = inlined_call_operand.hbm [shape: f32[304,1824], index: 0, kind: input, shape index: {}]
  %s1 = inlined_call_operand.vmem [shape: f32[1,1824,49], index: 1, kind: input, shape index: {}]
  %s2 = inlined_call_operand.vmem [shape: f32[1,304,49], index: 2, kind: output, shape index: {}]
  %s3 = sld [smem:[#allocation0]]
  $region22: #{tpu_custom_call.1} parent=0
    _
  %s5 = ssub.s32 1, %s3
  %s6 = scalar_select 0, %s5, %s3
  $region1: #{tpu_custom_call.1} parent=0
    #allocation2 [shape = 'u8[2334720]{0}', space=vmem, size = 0x23a000, scoped, tag = 'input window, operand 0, single buffered']
    #allocation3 [shape = 's32[1]{0}', space=sflag, size = 0x4, scoped, tag = 'scoped memory for tpu_custom_call.1']
    %7 = vsyncpa [#allocation3], 0
    // Predicated region
    $region2: #{tpu_custom_call.1} parent=1 // pred_check
      _
    $region3: #{tpu_custom_call.1} parent=1 // pred_check_branch
      %9 = sbr.rel (0) target = $region5
    $region4: #{tpu_custom_call.1} parent=1 // pred_region
      %s11 = ssub.s32 72960, 72960
      %12 = vsyncadd [#allocation3], %s11
      %s13 = sshll.u32 [#allocation2], 4
      %s14 = int_to_ptr.vmem [resolvable:$true] %s13
      %19 = dma.hbm_to_vmem [thread:$0]  %s0, 72960, %s14, [#allocation3], 1920, 1920, 120
    $region5: #{tpu_custom_call.1} parent=1 // pred_fallthru
      _
    // Predicated region
    $region6: #{tpu_custom_call.1} parent=1 // pred_check
      _
    $region7: #{tpu_custom_call.1} parent=1 // pred_check_branch
      %21 = sbr.rel (0) target = $region9
    $region8: #{tpu_custom_call.1} parent=1 // pred_region
      _
    $region9: #{tpu_custom_call.1} parent=1 // pred_fallthru
      _
    // Predicated region
    $region10: #{tpu_custom_call.1} parent=1 // pred_check
      _
    $region11: #{tpu_custom_call.1} parent=1 // pred_check_branch
      %23 = sbr.rel (0) target = $region13
    $region12: #{tpu_custom_call.1} parent=1 // pred_region
      %24 = dma.done [#allocation3], 72960
    $region13: #{tpu_custom_call.1} parent=1 // pred_fallthru
      _
    %v25 = vld [vmem:[#allocation2] sm:$0xff]
    %v26 = vld [vmem:[#allocation2 + $0x8] sm:$0xff]
    %v27 = vld [vmem:[#allocation2 + $0x10] sm:$0xff]
    %v28 = vld [vmem:[#allocation2 + $0x18] sm:$0xff]
    %v29 = vld [vmem:[#allocation2 + $0x20] sm:$0xff]
    %v30 = vld [vmem:[#allocation2 + $0x28] sm:$0xff]
    %v31 = vld [vmem:[#allocation2 + $0x30] sm:$0xff]
    %v32 = vld [vmem:[#allocation2 + $0x38] sm:$0xff]
    %v33 = vld [vmem:[#allocation2 + $0x40] sm:$0xff]
    %v34 = vld [vmem:[#allocation2 + $0x48] sm:$0xff]
    %v35 = vld [vmem:[#allocation2 + $0x50] sm:$0xff]
    %v36 = vld [vmem:[#allocation2 + $0x58] sm:$0xff]
    %v37 = vld [vmem:[#allocation2 + $0x60] sm:$0xff]
    %v38 = vld [vmem:[#allocation2 + $0x68] sm:$0xff]
    %v39 = vld [vmem:[#allocation2 + $0x70] sm:$0xff]
    %v40 = vld [vmem:[#allocation2 + $0x78] sm:$0xff]
    %v41 = vld [vmem:[#allocation2 + $0x80] sm:$0xff]
    %v42 = vld [vmem:[#allocation2 + $0x88] sm:$0xff]
    %v43 = vld [vmem:[#allocation2 + $0x90] sm:$0xff]
    %v44 = vld [vmem:[#allocation2 + $0x98] sm:$0xff]
    %v45 = vld [vmem:[#allocation2 + $0xa0] sm:$0xff]
    %v46 = vld [vmem:[#allocation2 + $0xa8] sm:$0xff]
    %v47 = vld [vmem:[#allocation2 + $0xb0] sm:$0xff]
    %v48 = vld [vmem:[#allocation2 + $0xb8] sm:$0xff]
    %v49 = vld [vmem:[#allocation2 + $0xc0] sm:$0xff]
    %v50 = vld [vmem:[#allocation2 + $0xc8] sm:$0xff]
    %v51 = vld [vmem:[#allocation2 + $0xd0] sm:$0xff]
    %v52 = vld [vmem:[#allocation2 + $0xd8] sm:$0xff]
    %v53 = vld [vmem:[#allocation2 + $0xe0] sm:$0xff]
    %v54 = vld [vmem:[#allocation2 + $0xe8] sm:$0xff]
    %v55 = vld [vmem:[#allocation2 + $0xf0] sm:$0xff]
    %v56 = vld [vmem:[#allocation2 + $0xf8] sm:$0xff]
    %v57 = vld [vmem:[#allocation2 + $0x100] sm:$0xff]
    %v58 = vld [vmem:[#allocation2 + $0x108] sm:$0xff]
    %v59 = vld [vmem:[#allocation2 + $0x110] sm:$0xff]
    %v60 = vld [vmem:[#allocation2 + $0x118] sm:$0xff]
    %v61 = vld [vmem:[#allocation2 + $0x120] sm:$0xff]
    %v62 = vld [vmem:[#allocation2 + $0x128] sm:$0xff]
    %v63 = vld [vmem:[#allocation2 + $0x130] sm:$0xff]
    %v64 = vld [vmem:[#allocation2 + $0x138] sm:$0xff]
    %v65 = vld [vmem:[#allocation2 + $0x140] sm:$0xff]
    %v66 = vld [vmem:[#allocation2 + $0x148] sm:$0xff]
    %v67 = vld [vmem:[#allocation2 + $0x150] sm:$0xff]
    %v68 = vld [vmem:[#allocation2 + $0x158] sm:$0xff]
    %v69 = vld [vmem:[#allocation2 + $0x160] sm:$0xff]
    %v70 = vld [vmem:[#allocation2 + $0x168] sm:$0xff]
    %v71 = vld [vmem:[#allocation2 + $0x170] sm:$0xff]
    %v72 = vld [vmem:[#allocation2 + $0x178] sm:$0xff]
    %v73 = vld [vmem:[#allocation2 + $0x180] sm:$0xff]
    %v74 = vld [vmem:[#allocation2 + $0x188] sm:$0xff]
    %v75 = vld [vmem:[#allocation2 + $0x190] sm:$0xff]
    %v76 = vld [vmem:[#allocation2 + $0x198] sm:$0xff]
    %v77 = vld [vmem:[#allocation2 + $0x1a0] sm:$0xff]
    %v78 = vld [vmem:[#allocation2 + $0x1a8] sm:$0xff]
    %v79 = vld [vmem:[#allocation2 + $0x1b0] sm:$0xff]
    %v80 = vld [vmem:[#allocation2 + $0x1b8] sm:$0xff]
    %v81 = vld [vmem:[#allocation2 + $0x1c0] sm:$0xff]
    %v82 = vld [vmem:[#allocation2 + $0x1c8] sm:$0xff]
    %v83 = vld [vmem:[#allocation2 + $0x1d0] sm:$0xff]
    %v84 = vld [vmem:[#allocation2 + $0x1d8] sm:$0xff]
    %v85 = vld [vmem:[#allocation2 + $0x1e0] sm:$0xff]
    %v86 = vld [vmem:[#allocation2 + $0x1e8] sm:$0xff]
    %v87 = vld [vmem:[#allocation2 + $0x1f0] sm:$0xff]
    %v88 = vld [vmem:[#allocation2 + $0x1f8] sm:$0xff]
    %v89 = vld [vmem:[#allocation2 + $0x200] sm:$0xff]
    %v90 = vld [vmem:[#allocation2 + $0x208] sm:$0xff]
    %v91 = vld [vmem:[#allocation2 + $0x210] sm:$0xff]
    %v92 = vld [vmem:[#allocation2 + $0x218] sm:$0xff]
    %v93 = vld [vmem:[#allocation2 + $0x220] sm:$0xff]
    %v94 = vld [vmem:[#allocation2 + $0x228] sm:$0xff]
    %v95 = vld [vmem:[#allocation2 + $0x230] sm:$0xff]
    %v96 = vld [vmem:[#allocation2 + $0x238] sm:$0xff]
    %v97 = vld [vmem:[#allocation2 + $0x240] sm:$0xff]
    %v98 = vld [vmem:[#allocation2 + $0x248] sm:$0xff]
    %v99 = vld [vmem:[#allocation2 + $0x250] sm:$0xff]
    %v100 = vld [vmem:[#allocation2 + $0x258] sm:$0xff]
    %v101 = vld [vmem:[#allocation2 + $0x260] sm:$0xff]
    %v102 = vld [vmem:[#allocation2 + $0x268] sm:$0xff]
    %v103 = vld [vmem:[#allocation2 + $0x270] sm:$0xff]
    %v104 = vld [vmem:[#allocation2 + $0x278] sm:$0xff]
    %v105 = vld [vmem:[#allocation2 + $0x280] sm:$0xff]
    %v106 = vld [vmem:[#allocation2 + $0x288] sm:$0xff]
    %v107 = vld [vmem:[#allocation2 + $0x290] sm:$0xff]
    %v108 = vld [vmem:[#allocation2 + $0x298] sm:$0xff]
    %v109 = vld [vmem:[#allocation2 + $0x2a0] sm:$0xff]
    %v110 = vld [vmem:[#allocation2 + $0x2a8] sm:$0xff]
    %v111 = vld [vmem:[#allocation2 + $0x2b0] sm:$0xff]
    %v112 = vld [vmem:[#allocation2 + $0x2b8] sm:$0xff]
    %v113 = vld [vmem:[#allocation2 + $0x2c0] sm:$0xff]
    %v114 = vld [vmem:[#allocation2 + $0x2c8] sm:$0xff]
    %v115 = vld [vmem:[#allocation2 + $0x2d0] sm:$0xff]
    %v116 = vld [vmem:[#allocation2 + $0x2d8] sm:$0xff]
    %v117 = vld [vmem:[#allocation2 + $0x2e0] sm:$0xff]
    %v118 = vld [vmem:[#allocation2 + $0x2e8] sm:$0xff]
    %v119 = vld [vmem:[#allocation2 + $0x2f0] sm:$0xff]
    %v120 = vld [vmem:[#allocation2 + $0x2f8] sm:$0xff]
    %v121 = vld [vmem:[#allocation2 + $0x300] sm:$0xff]
    %v122 = vld [vmem:[#allocation2 + $0x308] sm:$0xff]
    %v123 = vld [vmem:[#allocation2 + $0x310] sm:$0xff]
    %v124 = vld [vmem:[#allocation2 + $0x318] sm:$0xff]
    %v125 = vld [vmem:[#allocation2 + $0x320] sm:$0xff]
    %v126 = vld [vmem:[#allocation2 + $0x328] sm:$0xff]
    %v127 = vld [vmem:[#allocation2 + $0x330] sm:$0xff]
    %v128 = vld [vmem:[#allocation2 + $0x338] sm:$0xff]
    %v129 = vld [vmem:[#allocation2 + $0x340] sm:$0xff]
    %v130 = vld [vmem:[#allocation2 + $0x348] sm:$0xff]
    %v131 = vld [vmem:[#allocation2 + $0x350] sm:$0xff]
    %v132 = vld [vmem:[#allocation2 + $0x358] sm:$0xff]
    %v133 = vld [vmem:[#allocation2 + $0x360] sm:$0xff]
    %v134 = vld [vmem:[#allocation2 + $0x368] sm:$0xff]
    %v135 = vld [vmem:[#allocation2 + $0x370] sm:$0xff]
    %v136 = vld [vmem:[#allocation2 + $0x378] sm:$0xff]
    %v137 = vld [vmem:[#allocation2 + $0x380] sm:$0xff]
    %v138 = vld [vmem:[#allocation2 + $0x388] sm:$0xff]
    %v139 = vld [vmem:[#allocation2 + $0x390] sm:$0xff]
    %v140 = vld [vmem:[#allocation2 + $0x398] sm:$0xff]
    %v141 = vld [vmem:[#allocation2 + $0x3a0] sm:$0xff]
    %v142 = vld [vmem:[#allocation2 + $0x3a8] sm:$0xff]
    %v143 = vld [vmem:[#allocation2 + $0x3b0] sm:$0xff]
    %v144 = vld [vmem:[#allocation2 + $0x3b8] sm:$0xff]
    %v145 = vld [vmem:[#allocation2 + $0x3c0] sm:$0xff]
    %v146 = vld [vmem:[#allocation2 + $0x3c8] sm:$0xff]
    %v147 = vld [vmem:[#allocation2 + $0x3d0] sm:$0xff]
    %v148 = vld [vmem:[#allocation2 + $0x3d8] sm:$0xff]
    %v149 = vld [vmem:[#allocation2 + $0x3e0] sm:$0xff]
    %v150 = vld [vmem:[#allocation2 + $0x3e8] sm:$0xff]
    %v151 = vld [vmem:[#allocation2 + $0x3f0] sm:$0xff]
    %v152 = vld [vmem:[#allocation2 + $0x3f8] sm:$0xff]
    %v153 = vld [vmem:[#allocation2 + $0x400] sm:$0xff]
    %v154 = vld [vmem:[#allocation2 + $0x408] sm:$0xff]
    %v155 = vld [vmem:[#allocation2 + $0x410] sm:$0xff]
    %v156 = vld [vmem:[#allocation2 + $0x418] sm:$0xff]
    %v157 = vld [vmem:[#allocation2 + $0x420] sm:$0xff]
    %v158 = vld [vmem:[#allocation2 + $0x428] sm:$0xff]
    %v159 = vld [vmem:[#allocation2 + $0x430] sm:$0xff]
    %v160 = vld [vmem:[#allocation2 + $0x438] sm:$0xff]
    %v161 = vld [vmem:[#allocation2 + $0x440] sm:$0xff]
    %v162 = vld [vmem:[#allocation2 + $0x448] sm:$0xff]
    %v163 = vld [vmem:[#allocation2 + $0x450] sm:$0xff]
    %v164 = vld [vmem:[#allocation2 + $0x458] sm:$0xff]
    %v165 = vld [vmem:[#allocation2 + $0x460] sm:$0xff]
    %v166 = vld [vmem:[#allocation2 + $0x468] sm:$0xff]
    %v167 = vld [vmem:[#allocation2 + $0x470] sm:$0xff]
    %v168 = vld [vmem:[#allocation2 + $0x478] sm:$0xff]
    %v169 = vld [vmem:[#allocation2 + $0x480] sm:$0xff]
    %v170 = vld [vmem:[#allocation2 + $0x488] sm:$0xff]
    %v171 = vld [vmem:[#allocation2 + $0x490] sm:$0xff]
    %v172 = vld [vmem:[#allocation2 + $0x498] sm:$0xff]
    %v173 = vld [vmem:[#allocation2 + $0x4a0] sm:$0xff]
    %v174 = vld [vmem:[#allocation2 + $0x4a8] sm:$0xff]
    %v175 = vld [vmem:[#allocation2 + $0x4b0] sm:$0xff]
    %v176 = vld [vmem:[#allocation2 + $0x4b8] sm:$0xff]
    %v177 = vld [vmem:[#allocation2 + $0x4c0] sm:$0xff]
    %v178 = vld [vmem:[#allocation2 + $0x4c8] sm:$0xff]
    %v179 = vld [vmem:[#allocation2 + $0x4d0] sm:$0xff]
    %v180 = vld [vmem:[#allocation2 + $0x4d8] sm:$0xff]
    %v181 = vld [vmem:[#allocation2 + $0x4e0] sm:$0xff]
    %v182 = vld [vmem:[#allocation2 + $0x4e8] sm:$0xff]
    %v183 = vld [vmem:[#allocation2 + $0x4f0] sm:$0xff]
    %v184 = vld [vmem:[#allocation2 + $0x4f8] sm:$0xff]
    %v185 = vld [vmem:[#allocation2 + $0x500] sm:$0xff]
    %v186 = vld [vmem:[#allocation2 + $0x508] sm:$0xff]
    %v187 = vld [vmem:[#allocation2 + $0x510] sm:$0xff]
    %v188 = vld [vmem:[#allocation2 + $0x518] sm:$0xff]
    %v189 = vld [vmem:[#allocation2 + $0x520] sm:$0xff]
    %v190 = vld [vmem:[#allocation2 + $0x528] sm:$0xff]
    %v191 = vld [vmem:[#allocation2 + $0x530] sm:$0xff]
    %v192 = vld [vmem:[#allocation2 + $0x538] sm:$0xff]
    %v193 = vld [vmem:[#allocation2 + $0x540] sm:$0xff]
    %v194 = vld [vmem:[#allocation2 + $0x548] sm:$0xff]
    %v195 = vld [vmem:[#allocation2 + $0x550] sm:$0xff]
    %v196 = vld [vmem:[#allocation2 + $0x558] sm:$0xff]
    %v197 = vld [vmem:[#allocation2 + $0x560] sm:$0xff]
    %v198 = vld [vmem:[#allocation2 + $0x568] sm:$0xff]
    %v199 = vld [vmem:[#allocation2 + $0x570] sm:$0xff]
    %v200 = vld [vmem:[#allocation2 + $0x578] sm:$0xff]
    %v201 = vld [vmem:[#allocation2 + $0x580] sm:$0xff]
    %v202 = vld [vmem:[#allocation2 + $0x588] sm:$0xff]
    %v203 = vld [vmem:[#allocation2 + $0x590] sm:$0xff]
    %v204 = vld [vmem:[#allocation2 + $0x598] sm:$0xff]
    %v205 = vld [vmem:[#allocation2 + $0x5a0] sm:$0xff]
    %v206 = vld [vmem:[#allocation2 + $0x5a8] sm:$0xff]
    %v207 = vld [vmem:[#allocation2 + $0x5b0] sm:$0xff]
    %v208 = vld [vmem:[#allocation2 + $0x5b8] sm:$0xff]
    %v209 = vld [vmem:[#allocation2 + $0x5c0] sm:$0xff]
    %v210 = vld [vmem:[#allocation2 + $0x5c8] sm:$0xff]
    %v211 = vld [vmem:[#allocation2 + $0x5d0] sm:$0xff]
    %v212 = vld [vmem:[#allocation2 + $0x5d8] sm:$0xff]
    %v213 = vld [vmem:[#allocation2 + $0x5e0] sm:$0xff]
    %v214 = vld [vmem:[#allocation2 + $0x5e8] sm:$0xff]
    %v215 = vld [vmem:[#allocation2 + $0x5f0] sm:$0xff]
    %v216 = vld [vmem:[#allocation2 + $0x5f8] sm:$0xff]
    %v217 = vld [vmem:[#allocation2 + $0x600] sm:$0xff]
    %v218 = vld [vmem:[#allocation2 + $0x608] sm:$0xff]
    %v219 = vld [vmem:[#allocation2 + $0x610] sm:$0xff]
    %v220 = vld [vmem:[#allocation2 + $0x618] sm:$0xff]
    %v221 = vld [vmem:[#allocation2 + $0x620] sm:$0xff]
    %v222 = vld [vmem:[#allocation2 + $0x628] sm:$0xff]
    %v223 = vld [vmem:[#allocation2 + $0x630] sm:$0xff]
    %v224 = vld [vmem:[#allocation2 + $0x638] sm:$0xff]
    %v225 = vld [vmem:[#allocation2 + $0x640] sm:$0xff]
    %v226 = vld [vmem:[#allocation2 + $0x648] sm:$0xff]
    %v227 = vld [vmem:[#allocation2 + $0x650] sm:$0xff]
    %v228 = vld [vmem:[#allocation2 + $0x658] sm:$0xff]
    %v229 = vld [vmem:[#allocation2 + $0x660] sm:$0xff]
    %v230 = vld [vmem:[#allocation2 + $0x668] sm:$0xff]
    %v231 = vld [vmem:[#allocation2 + $0x670] sm:$0xff]
    %v232 = vld [vmem:[#allocation2 + $0x678] sm:$0xff]
    %v233 = vld [vmem:[#allocation2 + $0x680] sm:$0xff]
    %v234 = vld [vmem:[#allocation2 + $0x688] sm:$0xff]
    %v235 = vld [vmem:[#allocation2 + $0x690] sm:$0xff]
    %v236 = vld [vmem:[#allocation2 + $0x698] sm:$0xff]
    %v237 = vld [vmem:[#allocation2 + $0x6a0] sm:$0xff]
    %v238 = vld [vmem:[#allocation2 + $0x6a8] sm:$0xff]
    %v239 = vld [vmem:[#allocation2 + $0x6b0] sm:$0xff]
    %v240 = vld [vmem:[#allocation2 + $0x6b8] sm:$0xff]
    %v241 = vld [vmem:[#allocation2 + $0x6c0] sm:$0xff]
    %v242 = vld [vmem:[#allocation2 + $0x6c8] sm:$0xff]
    %v243 = vld [vmem:[#allocation2 + $0x6d0] sm:$0xff]
    %v244 = vld [vmem:[#allocation2 + $0x6d8] sm:$0xff]
    %v245 = vld [vmem:[#allocation2 + $0x6e0] sm:$0xff]
    %v246 = vld [vmem:[#allocation2 + $0x6e8] sm:$0xff]
    %v247 = vld [vmem:[#allocation2 + $0x6f0] sm:$0xff]
    %v248 = vld [vmem:[#allocation2 + $0x6f8] sm:$0xff]
    %v249 = vld [vmem:[#allocation2 + $0x700] sm:$0xff]
    %v250 = vld [vmem:[#allocation2 + $0x708] sm:$0xff]
    %v251 = vld [vmem:[#allocation2 + $0x710] sm:$0xff]
    %v252 = vld [vmem:[#allocation2 + $0x718] sm:$0xff]
    %v253 = vld [vmem:[#allocation2 + $0x720] sm:$0xff]
    %v254 = vld [vmem:[#allocation2 + $0x728] sm:$0xff]
    %v255 = vld [vmem:[#allocation2 + $0x730] sm:$0xff]
    %v256 = vld [vmem:[#allocation2 + $0x738] sm:$0xff]
    %v257 = vld [vmem:[#allocation2 + $0x740] sm:$0xff]
    %v258 = vld [vmem:[#allocation2 + $0x748] sm:$0xff]
    %v259 = vld [vmem:[#allocation2 + $0x750] sm:$0xff]
    %v260 = vld [vmem:[#allocation2 + $0x758] sm:$0xff]
    %v261 = vld [vmem:[#allocation2 + $0x760] sm:$0xff]
    %v262 = vld [vmem:[#allocation2 + $0x768] sm:$0xff]
    %v263 = vld [vmem:[#allocation2 + $0x770] sm:$0xff]
    %v264 = vld [vmem:[#allocation2 + $0x778] sm:$0xff]
    %v265 = vld [vmem:[#allocation2 + $0x780] sm:$0xff]
    %v266 = vld [vmem:[#allocation2 + $0x788] sm:$0xff]
    %v267 = vld [vmem:[#allocation2 + $0x790] sm:$0xff]
    %v268 = vld [vmem:[#allocation2 + $0x798] sm:$0xff]
    %v269 = vld [vmem:[#allocation2 + $0x7a0] sm:$0xff]
    %v270 = vld [vmem:[#allocation2 + $0x7a8] sm:$0xff]
    %v271 = vld [vmem:[#allocation2 + $0x7b0] sm:$0xff]
    %v272 = vld [vmem:[#allocation2 + $0x7b8] sm:$0xff]
    %v273 = vld [vmem:[#allocation2 + $0x7c0] sm:$0xff]
    %v274 = vld [vmem:[#allocation2 + $0x7c8] sm:$0xff]
    %v275 = vld [vmem:[#allocation2 + $0x7d0] sm:$0xff]
    %v276 = vld [vmem:[#allocation2 + $0x7d8] sm:$0xff]
    %v277 = vld [vmem:[#allocation2 + $0x7e0] sm:$0xff]
    %v278 = vld [vmem:[#allocation2 + $0x7e8] sm:$0xff]
    %v279 = vld [vmem:[#allocation2 + $0x7f0] sm:$0xff]
    %v280 = vld [vmem:[#allocation2 + $0x7f8] sm:$0xff]
    %v281 = vld [vmem:[#allocation2 + $0x800] sm:$0xff]
    %v282 = vld [vmem:[#allocation2 + $0x808] sm:$0xff]
    %v283 = vld [vmem:[#allocation2 + $0x810] sm:$0xff]
    %v284 = vld [vmem:[#allocation2 + $0x818] sm:$0xff]
    %v285 = vld [vmem:[#allocation2 + $0x820] sm:$0xff]
    %v286 = vld [vmem:[#allocation2 + $0x828] sm:$0xff]
    %v287 = vld [vmem:[#allocation2 + $0x830] sm:$0xff]
    %v288 = vld [vmem:[#allocation2 + $0x838] sm:$0xff]
    %v289 = vld [vmem:[#allocation2 + $0x840] sm:$0xff]
    %v290 = vld [vmem:[#allocation2 + $0x848] sm:$0xff]
    %v291 = vld [vmem:[#allocation2 + $0x850] sm:$0xff]
    %v292 = vld [vmem:[#allocation2 + $0x858] sm:$0xff]
    %v293 = vld [vmem:[#allocation2 + $0x860] sm:$0xff]
    %v294 = vld [vmem:[#allocation2 + $0x868] sm:$0xff]
    %v295 = vld [vmem:[#allocation2 + $0x870] sm:$0xff]
    %v296 = vld [vmem:[#allocation2 + $0x878] sm:$0xff]
    %v297 = vld [vmem:[#allocation2 + $0x880] sm:$0xff]
    %v298 = vld [vmem:[#allocation2 + $0x888] sm:$0xff]
    %v299 = vld [vmem:[#allocation2 + $0x890] sm:$0xff]
    %v300 = vld [vmem:[#allocation2 + $0x898] sm:$0xff]
    %v301 = vld [vmem:[#allocation2 + $0x8a0] sm:$0xff]
    %v302 = vld [vmem:[#allocation2 + $0x8a8] sm:$0xff]
    %v303 = vld [vmem:[#allocation2 + $0x8b0] sm:$0xff]
    %v304 = vld [vmem:[#allocation2 + $0x8b8] sm:$0xff]
    %v305 = vld [vmem:[#allocation2 + $0x8c0] sm:$0xff]
    %v306 = vld [vmem:[#allocation2 + $0x8c8] sm:$0xff]
    %v307 = vld [vmem:[#allocation2 + $0x8d0] sm:$0xff]
    %v308 = vld [vmem:[#allocation2 + $0x8d8] sm:$0xff]
    %v309 = vld [vmem:[#allocation2 + $0x8e0] sm:$0xff]
    %v310 = vld [vmem:[#allocation2 + $0x8e8] sm:$0xff]
    %v311 = vld [vmem:[#allocation2 + $0x8f0] sm:$0xff]
    %v312 = vld [vmem:[#allocation2 + $0x8f8] sm:$0xff]
    %v313 = vld [vmem:[#allocation2 + $0x900] sm:$0xff]
    %v314 = vld [vmem:[#allocation2 + $0x908] sm:$0xff]
    %v315 = vld [vmem:[#allocation2 + $0x910] sm:$0xff]
    %v316 = vld [vmem:[#allocation2 + $0x918] sm:$0xff]
    %v317 = vld [vmem:[#allocation2 + $0x920] sm:$0xff]
    %v318 = vld [vmem:[#allocation2 + $0x928] sm:$0xff]
    %v319 = vld [vmem:[#allocation2 + $0x930] sm:$0xff]
    %v320 = vld [vmem:[#allocation2 + $0x938] sm:$0xff]
    %v321 = vld [vmem:[#allocation2 + $0x940] sm:$0xff]
    %v322 = vld [vmem:[#allocation2 + $0x948] sm:$0xff]
    %v323 = vld [vmem:[#allocation2 + $0x950] sm:$0xff]
    %v324 = vld [vmem:[#allocation2 + $0x958] sm:$0xff]
    %v325 = vld [vmem:[#allocation2 + $0x960] sm:$0xff]
    %v326 = vld [vmem:[#allocation2 + $0x968] sm:$0xff]
    %v327 = vld [vmem:[#allocation2 + $0x970] sm:$0xff]
    %v328 = vld [vmem:[#allocation2 + $0x978] sm:$0xff]
    %v329 = vld [vmem:[#allocation2 + $0x980] sm:$0xff]
    %v330 = vld [vmem:[#allocation2 + $0x988] sm:$0xff]
    %v331 = vld [vmem:[#allocation2 + $0x990] sm:$0xff]
    %v332 = vld [vmem:[#allocation2 + $0x998] sm:$0xff]
    %v333 = vld [vmem:[#allocation2 + $0x9a0] sm:$0xff]
    %v334 = vld [vmem:[#allocation2 + $0x9a8] sm:$0xff]
    %v335 = vld [vmem:[#allocation2 + $0x9b0] sm:$0xff]
    %v336 = vld [vmem:[#allocation2 + $0x9b8] sm:$0xff]
    %v337 = vld [vmem:[#allocation2 + $0x9c0] sm:$0xff]
    %v338 = vld [vmem:[#allocation2 + $0x9c8] sm:$0xff]
    %v339 = vld [vmem:[#allocation2 + $0x9d0] sm:$0xff]
    %v340 = vld [vmem:[#allocation2 + $0x9d8] sm:$0xff]
    %v341 = vld [vmem:[#allocation2 + $0x9e0] sm:$0xff]
    %v342 = vld [vmem:[#allocation2 + $0x9e8] sm:$0xff]
    %v343 = vld [vmem:[#allocation2 + $0x9f0] sm:$0xff]
    %v344 = vld [vmem:[#allocation2 + $0x9f8] sm:$0xff]
    %v345 = vld [vmem:[#allocation2 + $0xa00] sm:$0xff]
    %v346 = vld [vmem:[#allocation2 + $0xa08] sm:$0xff]
    %v347 = vld [vmem:[#allocation2 + $0xa10] sm:$0xff]
    %v348 = vld [vmem:[#allocation2 + $0xa18] sm:$0xff]
    %v349 = vld [vmem:[#allocation2 + $0xa20] sm:$0xff]
    %v350 = vld [vmem:[#allocation2 + $0xa28] sm:$0xff]
    %v351 = vld [vmem:[#allocation2 + $0xa30] sm:$0xff]
    %v352 = vld [vmem:[#allocation2 + $0xa38] sm:$0xff]
    %v353 = vld [vmem:[#allocation2 + $0xa40] sm:$0xff]
    %v354 = vld [vmem:[#allocation2 + $0xa48] sm:$0xff]
    %v355 = vld [vmem:[#allocation2 + $0xa50] sm:$0xff]
    %v356 = vld [vmem:[#allocation2 + $0xa58] sm:$0xff]
    %v357 = vld [vmem:[#allocation2 + $0xa60] sm:$0xff]
    %v358 = vld [vmem:[#allocation2 + $0xa68] sm:$0xff]
    %v359 = vld [vmem:[#allocation2 + $0xa70] sm:$0xff]
    %v360 = vld [vmem:[#allocation2 + $0xa78] sm:$0xff]
    %v361 = vld [vmem:[#allocation2 + $0xa80] sm:$0xff]
    %v362 = vld [vmem:[#allocation2 + $0xa88] sm:$0xff]
    %v363 = vld [vmem:[#allocation2 + $0xa90] sm:$0xff]
    %v364 = vld [vmem:[#allocation2 + $0xa98] sm:$0xff]
    %v365 = vld [vmem:[#allocation2 + $0xaa0] sm:$0xff]
    %v366 = vld [vmem:[#allocation2 + $0xaa8] sm:$0xff]
    %v367 = vld [vmem:[#allocation2 + $0xab0] sm:$0xff]
    %v368 = vld [vmem:[#allocation2 + $0xab8] sm:$0xff]
    %v369 = vld [vmem:[#allocation2 + $0xac0] sm:$0xff]
    %v370 = vld [vmem:[#allocation2 + $0xac8] sm:$0xff]
    %v371 = vld [vmem:[#allocation2 + $0xad0] sm:$0xff]
    %v372 = vld [vmem:[#allocation2 + $0xad8] sm:$0xff]
    %v373 = vld [vmem:[#allocation2 + $0xae0] sm:$0xff]
    %v374 = vld [vmem:[#allocation2 + $0xae8] sm:$0xff]
    %v375 = vld [vmem:[#allocation2 + $0xaf0] sm:$0xff]
    %v376 = vld [vmem:[#allocation2 + $0xaf8] sm:$0xff]
    %v377 = vld [vmem:[#allocation2 + $0xb00] sm:$0xff]
    %v378 = vld [vmem:[#allocation2 + $0xb08] sm:$0xff]
    %v379 = vld [vmem:[#allocation2 + $0xb10] sm:$0xff]
    %v380 = vld [vmem:[#allocation2 + $0xb18] sm:$0xff]
    %v381 = vld [vmem:[#allocation2 + $0xb20] sm:$0xff]
    %v382 = vld [vmem:[#allocation2 + $0xb28] sm:$0xff]
    %v383 = vld [vmem:[#allocation2 + $0xb30] sm:$0xff]
    %v384 = vld [vmem:[#allocation2 + $0xb38] sm:$0xff]
    %v385 = vld [vmem:[#allocation2 + $0xb40] sm:$0xff]
    %v386 = vld [vmem:[#allocation2 + $0xb48] sm:$0xff]
    %v387 = vld [vmem:[#allocation2 + $0xb50] sm:$0xff]
    %v388 = vld [vmem:[#allocation2 + $0xb58] sm:$0xff]
    %v389 = vld [vmem:[#allocation2 + $0xb60] sm:$0xff]
    %v390 = vld [vmem:[#allocation2 + $0xb68] sm:$0xff]
    %v391 = vld [vmem:[#allocation2 + $0xb70] sm:$0xff]
    %v392 = vld [vmem:[#allocation2 + $0xb78] sm:$0xff]
    %v393 = vld [vmem:[#allocation2 + $0xb80] sm:$0xff]
    %v394 = vld [vmem:[#allocation2 + $0xb88] sm:$0xff]
    %v395 = vld [vmem:[#allocation2 + $0xb90] sm:$0xff]
    %v396 = vld [vmem:[#allocation2 + $0xb98] sm:$0xff]
    %v397 = vld [vmem:[#allocation2 + $0xba0] sm:$0xff]
    %v398 = vld [vmem:[#allocation2 + $0xba8] sm:$0xff]
    %v399 = vld [vmem:[#allocation2 + $0xbb0] sm:$0xff]
    %v400 = vld [vmem:[#allocation2 + $0xbb8] sm:$0xff]
    %v401 = vld [vmem:[#allocation2 + $0xbc0] sm:$0xff]
    %v402 = vld [vmem:[#allocation2 + $0xbc8] sm:$0xff]
    %v403 = vld [vmem:[#allocation2 + $0xbd0] sm:$0xff]
    %v404 = vld [vmem:[#allocation2 + $0xbd8] sm:$0xff]
    %v405 = vld [vmem:[#allocation2 + $0xbe0] sm:$0xff]
    %v406 = vld [vmem:[#allocation2 + $0xbe8] sm:$0xff]
    %v407 = vld [vmem:[#allocation2 + $0xbf0] sm:$0xff]
    %v408 = vld [vmem:[#allocation2 + $0xbf8] sm:$0xff]
    %v409 = vld [vmem:[#allocation2 + $0xc00] sm:$0xff]
    %v410 = vld [vmem:[#allocation2 + $0xc08] sm:$0xff]
    %v411 = vld [vmem:[#allocation2 + $0xc10] sm:$0xff]
    %v412 = vld [vmem:[#allocation2 + $0xc18] sm:$0xff]
    %v413 = vld [vmem:[#allocation2 + $0xc20] sm:$0xff]
    %v414 = vld [vmem:[#allocation2 + $0xc28] sm:$0xff]
    %v415 = vld [vmem:[#allocation2 + $0xc30] sm:$0xff]
    %v416 = vld [vmem:[#allocation2 + $0xc38] sm:$0xff]
    %v417 = vld [vmem:[#allocation2 + $0xc40] sm:$0xff]
    %v418 = vld [vmem:[#allocation2 + $0xc48] sm:$0xff]
    %v419 = vld [vmem:[#allocation2 + $0xc50] sm:$0xff]
    %v420 = vld [vmem:[#allocation2 + $0xc58] sm:$0xff]
    %v421 = vld [vmem:[#allocation2 + $0xc60] sm:$0xff]
    %v422 = vld [vmem:[#allocation2 + $0xc68] sm:$0xff]
    %v423 = vld [vmem:[#allocation2 + $0xc70] sm:$0xff]
    %v424 = vld [vmem:[#allocation2 + $0xc78] sm:$0xff]
    %v425 = vld [vmem:[#allocation2 + $0xc80] sm:$0xff]
    %v426 = vld [vmem:[#allocation2 + $0xc88] sm:$0xff]
    %v427 = vld [vmem:[#allocation2 + $0xc90] sm:$0xff]
    %v428 = vld [vmem:[#allocation2 + $0xc98] sm:$0xff]
    %v429 = vld [vmem:[#allocation2 + $0xca0] sm:$0xff]
    %v430 = vld [vmem:[#allocation2 + $0xca8] sm:$0xff]
    %v431 = vld [vmem:[#allocation2 + $0xcb0] sm:$0xff]
    %v432 = vld [vmem:[#allocation2 + $0xcb8] sm:$0xff]
    %v433 = vld [vmem:[#allocation2 + $0xcc0] sm:$0xff]
    %v434 = vld [vmem:[#allocation2 + $0xcc8] sm:$0xff]
    %v435 = vld [vmem:[#allocation2 + $0xcd0] sm:$0xff]
    %v436 = vld [vmem:[#allocation2 + $0xcd8] sm:$0xff]
    %v437 = vld [vmem:[#allocation2 + $0xce0] sm:$0xff]
    %v438 = vld [vmem:[#allocation2 + $0xce8] sm:$0xff]
    %v439 = vld [vmem:[#allocation2 + $0xcf0] sm:$0xff]
    %v440 = vld [vmem:[#allocation2 + $0xcf8] sm:$0xff]
    %v441 = vld [vmem:[#allocation2 + $0xd00] sm:$0xff]
    %v442 = vld [vmem:[#allocation2 + $0xd08] sm:$0xff]
    %v443 = vld [vmem:[#allocation2 + $0xd10] sm:$0xff]
    %v444 = vld [vmem:[#allocation2 + $0xd18] sm:$0xff]
    %v445 = vld [vmem:[#allocation2 + $0xd20] sm:$0xff]
    %v446 = vld [vmem:[#allocation2 + $0xd28] sm:$0xff]
    %v447 = vld [vmem:[#allocation2 + $0xd30] sm:$0xff]
    %v448 = vld [vmem:[#allocation2 + $0xd38] sm:$0xff]
    %v449 = vld [vmem:[#allocation2 + $0xd40] sm:$0xff]
    %v450 = vld [vmem:[#allocation2 + $0xd48] sm:$0xff]
    %v451 = vld [vmem:[#allocation2 + $0xd50] sm:$0xff]
    %v452 = vld [vmem:[#allocation2 + $0xd58] sm:$0xff]
    %v453 = vld [vmem:[#allocation2 + $0xd60] sm:$0xff]
    %v454 = vld [vmem:[#allocation2 + $0xd68] sm:$0xff]
    %v455 = vld [vmem:[#allocation2 + $0xd70] sm:$0xff]
    %v456 = vld [vmem:[#allocation2 + $0xd78] sm:$0xff]
    %v457 = vld [vmem:[#allocation2 + $0xd80] sm:$0xff]
    %v458 = vld [vmem:[#allocation2 + $0xd88] sm:$0xff]
    %v459 = vld [vmem:[#allocation2 + $0xd90] sm:$0xff]
    %v460 = vld [vmem:[#allocation2 + $0xd98] sm:$0xff]
    %v461 = vld [vmem:[#allocation2 + $0xda0] sm:$0xff]
    %v462 = vld [vmem:[#allocation2 + $0xda8] sm:$0xff]
    %v463 = vld [vmem:[#allocation2 + $0xdb0] sm:$0xff]
    %v464 = vld [vmem:[#allocation2 + $0xdb8] sm:$0xff]
    %v465 = vld [vmem:[#allocation2 + $0xdc0] sm:$0xff]
    %v466 = vld [vmem:[#allocation2 + $0xdc8] sm:$0xff]
    %v467 = vld [vmem:[#allocation2 + $0xdd0] sm:$0xff]
    %v468 = vld [vmem:[#allocation2 + $0xdd8] sm:$0xff]
    %v469 = vld [vmem:[#allocation2 + $0xde0] sm:$0xff]
    %v470 = vld [vmem:[#allocation2 + $0xde8] sm:$0xff]
    %v471 = vld [vmem:[#allocation2 + $0xdf0] sm:$0xff]
    %v472 = vld [vmem:[#allocation2 + $0xdf8] sm:$0xff]
    %v473 = vld [vmem:[#allocation2 + $0xe00] sm:$0xff]
    %v474 = vld [vmem:[#allocation2 + $0xe08] sm:$0xff]
    %v475 = vld [vmem:[#allocation2 + $0xe10] sm:$0xff]
    %v476 = vld [vmem:[#allocation2 + $0xe18] sm:$0xff]
    %v477 = vld [vmem:[#allocation2 + $0xe20] sm:$0xff]
    %v478 = vld [vmem:[#allocation2 + $0xe28] sm:$0xff]
    %v479 = vld [vmem:[#allocation2 + $0xe30] sm:$0xff]
    %v480 = vld [vmem:[#allocation2 + $0xe38] sm:$0xff]
    %v481 = vld [vmem:[#allocation2 + $0xe40] sm:$0xff]
    %v482 = vld [vmem:[#allocation2 + $0xe48] sm:$0xff]
    %v483 = vld [vmem:[#allocation2 + $0xe50] sm:$0xff]
    %v484 = vld [vmem:[#allocation2 + $0xe58] sm:$0xff]
    %v485 = vld [vmem:[#allocation2 + $0xe60] sm:$0xff]
    %v486 = vld [vmem:[#allocation2 + $0xe68] sm:$0xff]
    %v487 = vld [vmem:[#allocation2 + $0xe70] sm:$0xff]
    %v488 = vld [vmem:[#allocation2 + $0xe78] sm:$0xff]
    %v489 = vld [vmem:[#allocation2 + $0xe80] sm:$0xff]
    %v490 = vld [vmem:[#allocation2 + $0xe88] sm:$0xff]
    %v491 = vld [vmem:[#allocation2 + $0xe90] sm:$0xff]
    %v492 = vld [vmem:[#allocation2 + $0xe98] sm:$0xff]
    %v493 = vld [vmem:[#allocation2 + $0xea0] sm:$0xff]
    %v494 = vld [vmem:[#allocation2 + $0xea8] sm:$0xff]
    %v495 = vld [vmem:[#allocation2 + $0xeb0] sm:$0xff]
    %v496 = vld [vmem:[#allocation2 + $0xeb8] sm:$0xff]
    %v497 = vld [vmem:[#allocation2 + $0xec0] sm:$0xff]
    %v498 = vld [vmem:[#allocation2 + $0xec8] sm:$0xff]
    %v499 = vld [vmem:[#allocation2 + $0xed0] sm:$0xff]
    %v500 = vld [vmem:[#allocation2 + $0xed8] sm:$0xff]
    %v501 = vld [vmem:[#allocation2 + $0xee0] sm:$0xff]
    %v502 = vld [vmem:[#allocation2 + $0xee8] sm:$0xff]
    %v503 = vld [vmem:[#allocation2 + $0xef0] sm:$0xff]
    %v504 = vld [vmem:[#allocation2 + $0xef8] sm:$0xff]
    %v505 = vld [vmem:[#allocation2 + $0xf00] sm:$0xff]
    %v506 = vld [vmem:[#allocation2 + $0xf08] sm:$0xff]
    %v507 = vld [vmem:[#allocation2 + $0xf10] sm:$0xff]
    %v508 = vld [vmem:[#allocation2 + $0xf18] sm:$0xff]
    %v509 = vld [vmem:[#allocation2 + $0xf20] sm:$0xff]
    %v510 = vld [vmem:[#allocation2 + $0xf28] sm:$0xff]
    %v511 = vld [vmem:[#allocation2 + $0xf30] sm:$0xff]
    %v512 = vld [vmem:[#allocation2 + $0xf38] sm:$0xff]
    %v513 = vld [vmem:[#allocation2 + $0xf40] sm:$0xff]
    %v514 = vld [vmem:[#allocation2 + $0xf48] sm:$0xff]
    %v515 = vld [vmem:[#allocation2 + $0xf50] sm:$0xff]
    %v516 = vld [vmem:[#allocation2 + $0xf58] sm:$0xff]
    %v517 = vld [vmem:[#allocation2 + $0xf60] sm:$0xff]
    %v518 = vld [vmem:[#allocation2 + $0xf68] sm:$0xff]
    %v519 = vld [vmem:[#allocation2 + $0xf70] sm:$0xff]
    %v520 = vld [vmem:[#allocation2 + $0xf78] sm:$0xff]
    %v521 = vld [vmem:[#allocation2 + $0xf80] sm:$0xff]
    %v522 = vld [vmem:[#allocation2 + $0xf88] sm:$0xff]
    %v523 = vld [vmem:[#allocation2 + $0xf90] sm:$0xff]
    %v524 = vld [vmem:[#allocation2 + $0xf98] sm:$0xff]
    %v525 = vld [vmem:[#allocation2 + $0xfa0] sm:$0xff]
    %v526 = vld [vmem:[#allocation2 + $0xfa8] sm:$0xff]
    %v527 = vld [vmem:[#allocation2 + $0xfb0] sm:$0xff]
    %v528 = vld [vmem:[#allocation2 + $0xfb8] sm:$0xff]
    %v529 = vld [vmem:[#allocation2 + $0xfc0] sm:$0xff]
    %v530 = vld [vmem:[#allocation2 + $0xfc8] sm:$0xff]
    %v531 = vld [vmem:[#allocation2 + $0xfd0] sm:$0xff]
    %v532 = vld [vmem:[#allocation2 + $0xfd8] sm:$0xff]
    %v533 = vld [vmem:[#allocation2 + $0xfe0] sm:$0xff]
    %v534 = vld [vmem:[#allocation2 + $0xfe8] sm:$0xff]
    %v535 = vld [vmem:[#allocation2 + $0xff0] sm:$0xff]
    %v536 = vld [vmem:[#allocation2 + $0xff8] sm:$0xff]
    %v537 = vld [vmem:[#allocation2 + $0x1000] sm:$0xff]
    %v538 = vld [vmem:[#allocation2 + $0x1008] sm:$0xff]
    %v539 = vld [vmem:[#allocation2 + $0x1010] sm:$0xff]
    %v540 = vld [vmem:[#allocation2 + $0x1018] sm:$0xff]
    %v541 = vld [vmem:[#allocation2 + $0x1020] sm:$0xff]
    %v542 = vld [vmem:[#allocation2 + $0x1028] sm:$0xff]
    %v543 = vld [vmem:[#allocation2 + $0x1030] sm:$0xff]
    %v544 = vld [vmem:[#allocation2 + $0x1038] sm:$0xff]
    %v545 = vld [vmem:[#allocation2 + $0x1040] sm:$0xff]
    %v546 = vld [vmem:[#allocation2 + $0x1048] sm:$0xff]
    %v547 = vld [vmem:[#allocation2 + $0x1050] sm:$0xff]
    %v548 = vld [vmem:[#allocation2 + $0x1058] sm:$0xff]
    %v549 = vld [vmem:[#allocation2 + $0x1060] sm:$0xff]
    %v550 = vld [vmem:[#allocation2 + $0x1068] sm:$0xff]
    %v551 = vld [vmem:[#allocation2 + $0x1070] sm:$0xff]
    %v552 = vld [vmem:[#allocation2 + $0x1078] sm:$0xff]
    %v553 = vld [vmem:[#allocation2 + $0x1080] sm:$0xff]
    %v554 = vld [vmem:[#allocation2 + $0x1088] sm:$0xff]
    %v555 = vld [vmem:[#allocation2 + $0x1090] sm:$0xff]
    %v556 = vld [vmem:[#allocation2 + $0x1098] sm:$0xff]
    %v557 = vld [vmem:[#allocation2 + $0x10a0] sm:$0xff]
    %v558 = vld [vmem:[#allocation2 + $0x10a8] sm:$0xff]
    %v559 = vld [vmem:[#allocation2 + $0x10b0] sm:$0xff]
    %v560 = vld [vmem:[#allocation2 + $0x10b8] sm:$0xff]
    %v561 = vld [vmem:[#allocation2 + $0x10c0] sm:$0xff]
    %v562 = vld [vmem:[#allocation2 + $0x10c8] sm:$0xff]
    %v563 = vld [vmem:[#allocation2 + $0x10d0] sm:$0xff]
    %v564 = vld [vmem:[#allocation2 + $0x10d8] sm:$0xff]
    %v565 = vld [vmem:[#allocation2 + $0x10e0] sm:$0xff]
    %v566 = vld [vmem:[#allocation2 + $0x10e8] sm:$0xff]
    %v567 = vld [vmem:[#allocation2 + $0x10f0] sm:$0xff]
    %v568 = vld [vmem:[#allocation2 + $0x10f8] sm:$0xff]
    %v569 = vld [vmem:[#allocation2 + $0x1100] sm:$0xff]
    %v570 = vld [vmem:[#allocation2 + $0x1108] sm:$0xff]
    %v571 = vld [vmem:[#allocation2 + $0x1110] sm:$0xff]
    %v572 = vld [vmem:[#allocation2 + $0x1118] sm:$0xff]
    %v573 = vld [vmem:[#allocation2 + $0x1120] sm:$0xff]
    %v574 = vld [vmem:[#allocation2 + $0x1128] sm:$0xff]
    %v575 = vld [vmem:[#allocation2 + $0x1130] sm:$0xff]
    %v576 = vld [vmem:[#allocation2 + $0x1138] sm:$0xff]
    %v577 = vld [vmem:[#allocation2 + $0x1140] sm:$0xff]
    %v578 = vld [vmem:[#allocation2 + $0x1148] sm:$0xff]
    %v579 = vld [vmem:[#allocation2 + $0x1150] sm:$0xff]
    %v580 = vld [vmem:[#allocation2 + $0x1158] sm:$0xff]
    %v581 = vld [vmem:[#allocation2 + $0x1160] sm:$0xff]
    %v582 = vld [vmem:[#allocation2 + $0x1168] sm:$0xff]
    %v583 = vld [vmem:[#allocation2 + $0x1170] sm:$0xff]
    %v584 = vld [vmem:[#allocation2 + $0x1178] sm:$0xff]
    %v585 = vld [vmem:[#allocation2 + $0x1180] sm:$0xff]
    %v586 = vld [vmem:[#allocation2 + $0x1188] sm:$0xff]
    %v587 = vld [vmem:[#allocation2 + $0x1190] sm:$0xff]
    %v588 = vld [vmem:[#allocation2 + $0x1198] sm:$0xff]
    %v589 = vld [vmem:[#allocation2 + $0x11a0] sm:$0xff]
    %v590 = vld [vmem:[#allocation2 + $0x11a8] sm:$0xff]
    %v591 = vld [vmem:[#allocation2 + $0x11b0] sm:$0xff]
    %v592 = vld [vmem:[#allocation2 + $0x11b8] sm:$0xff]
    %v593 = vld [vmem:[#allocation2 + $0x11c0] sm:$0xff]
    %v594 = vld [vmem:[#allocation2 + $0x11c8] sm:$0xff]
    %v595 = vld [vmem:[%s1] sm:$0xff]
    %v596 = vld [vmem:[%s1 + $0x8] sm:$0xff]
    %v597 = vld [vmem:[%s1 + $0x10] sm:$0xff]
    %v598 = vld [vmem:[%s1 + $0x18] sm:$0xff]
    %v599 = vld [vmem:[%s1 + $0x20] sm:$0xff]
    %v600 = vld [vmem:[%s1 + $0x28] sm:$0xff]
    %v601 = vld [vmem:[%s1 + $0x30] sm:$0xff]
    %v602 = vld [vmem:[%s1 + $0x38] sm:$0xff]
    %v603 = vld [vmem:[%s1 + $0x40] sm:$0xff]
    %v604 = vld [vmem:[%s1 + $0x48] sm:$0xff]
    %v605 = vld [vmem:[%s1 + $0x50] sm:$0xff]
    %v606 = vld [vmem:[%s1 + $0x58] sm:$0xff]
    %v607 = vld [vmem:[%s1 + $0x60] sm:$0xff]
    %v608 = vld [vmem:[%s1 + $0x68] sm:$0xff]
    %v609 = vld [vmem:[%s1 + $0x70] sm:$0xff]
    %v610 = vld [vmem:[%s1 + $0x78] sm:$0xff]
    %v611 = vld [vmem:[%s1 + $0x80] sm:$0xff]
    %v612 = vld [vmem:[%s1 + $0x88] sm:$0xff]
    %v613 = vld [vmem:[%s1 + $0x90] sm:$0xff]
    %v614 = vld [vmem:[%s1 + $0x98] sm:$0xff]
    %v615 = vld [vmem:[%s1 + $0xa0] sm:$0xff]
    %v616 = vld [vmem:[%s1 + $0xa8] sm:$0xff]
    %v617 = vld [vmem:[%s1 + $0xb0] sm:$0xff]
    %v618 = vld [vmem:[%s1 + $0xb8] sm:$0xff]
    %v619 = vld [vmem:[%s1 + $0xc0] sm:$0xff]
    %v620 = vld [vmem:[%s1 + $0xc8] sm:$0xff]
    %v621 = vld [vmem:[%s1 + $0xd0] sm:$0xff]
    %v622 = vld [vmem:[%s1 + $0xd8] sm:$0xff]
    %v623 = vld [vmem:[%s1 + $0xe0] sm:$0xff]
    %v624 = vld [vmem:[%s1 + $0xe8] sm:$0xff]
    %v625 = vld [vmem:[%s1 + $0xf0] sm:$0xff]
    %v626 = vld [vmem:[%s1 + $0xf8] sm:$0xff]
    %v627 = vld [vmem:[%s1 + $0x100] sm:$0xff]
    %v628 = vld [vmem:[%s1 + $0x108] sm:$0xff]
    %v629 = vld [vmem:[%s1 + $0x110] sm:$0xff]
    %v630 = vld [vmem:[%s1 + $0x118] sm:$0xff]
    %v631 = vld [vmem:[%s1 + $0x120] sm:$0xff]
    %v632 = vld [vmem:[%s1 + $0x128] sm:$0xff]
    %v633 = vld [vmem:[%s1 + $0x130] sm:$0xff]
    %v634 = vld [vmem:[%s1 + $0x138] sm:$0xff]
    %v635 = vld [vmem:[%s1 + $0x140] sm:$0xff]
    %v636 = vld [vmem:[%s1 + $0x148] sm:$0xff]
    %v637 = vld [vmem:[%s1 + $0x150] sm:$0xff]
    %v638 = vld [vmem:[%s1 + $0x158] sm:$0xff]
    %v639 = vld [vmem:[%s1 + $0x160] sm:$0xff]
    %v640 = vld [vmem:[%s1 + $0x168] sm:$0xff]
    %v641 = vld [vmem:[%s1 + $0x170] sm:$0xff]
    %v642 = vld [vmem:[%s1 + $0x178] sm:$0xff]
    %v643 = vld [vmem:[%s1 + $0x180] sm:$0xff]
    %v644 = vld [vmem:[%s1 + $0x188] sm:$0xff]
    %v645 = vld [vmem:[%s1 + $0x190] sm:$0xff]
    %v646 = vld [vmem:[%s1 + $0x198] sm:$0xff]
    %v647 = vld [vmem:[%s1 + $0x1a0] sm:$0xff]
    %v648 = vld [vmem:[%s1 + $0x1a8] sm:$0xff]
    %v649 = vld [vmem:[%s1 + $0x1b0] sm:$0xff]
    %v650 = vld [vmem:[%s1 + $0x1b8] sm:$0xff]
    %v651 = vld [vmem:[%s1 + $0x1c0] sm:$0xff]
    %v652 = vld [vmem:[%s1 + $0x1c8] sm:$0xff]
    %v653 = vld [vmem:[%s1 + $0x1d0] sm:$0xff]
    %v654 = vld [vmem:[%s1 + $0x1d8] sm:$0xff]
    %v655 = vld [vmem:[%s1 + $0x1e0] sm:$0xff]
    %v656 = vld [vmem:[%s1 + $0x1e8] sm:$0xff]
    %v657 = vld [vmem:[%s1 + $0x1f0] sm:$0xff]
    %v658 = vld [vmem:[%s1 + $0x1f8] sm:$0xff]
    %v659 = vld [vmem:[%s1 + $0x200] sm:$0xff]
    %v660 = vld [vmem:[%s1 + $0x208] sm:$0xff]
    %v661 = vld [vmem:[%s1 + $0x210] sm:$0xff]
    %v662 = vld [vmem:[%s1 + $0x218] sm:$0xff]
    %v663 = vld [vmem:[%s1 + $0x220] sm:$0xff]
    %v664 = vld [vmem:[%s1 + $0x228] sm:$0xff]
    %v665 = vld [vmem:[%s1 + $0x230] sm:$0xff]
    %v666 = vld [vmem:[%s1 + $0x238] sm:$0xff]
    %v667 = vld [vmem:[%s1 + $0x240] sm:$0xff]
    %v668 = vld [vmem:[%s1 + $0x248] sm:$0xff]
    %v669 = vld [vmem:[%s1 + $0x250] sm:$0xff]
    %v670 = vld [vmem:[%s1 + $0x258] sm:$0xff]
    %v671 = vld [vmem:[%s1 + $0x260] sm:$0xff]
    %v672 = vld [vmem:[%s1 + $0x268] sm:$0xff]
    %v673 = vld [vmem:[%s1 + $0x270] sm:$0xff]
    %v674 = vld [vmem:[%s1 + $0x278] sm:$0xff]
    %v675 = vld [vmem:[%s1 + $0x280] sm:$0xff]
    %v676 = vld [vmem:[%s1 + $0x288] sm:$0xff]
    %v677 = vld [vmem:[%s1 + $0x290] sm:$0xff]
    %v678 = vld [vmem:[%s1 + $0x298] sm:$0xff]
    %v679 = vld [vmem:[%s1 + $0x2a0] sm:$0xff]
    %v680 = vld [vmem:[%s1 + $0x2a8] sm:$0xff]
    %v681 = vld [vmem:[%s1 + $0x2b0] sm:$0xff]
    %v682 = vld [vmem:[%s1 + $0x2b8] sm:$0xff]
    %v683 = vld [vmem:[%s1 + $0x2c0] sm:$0xff]
    %v684 = vld [vmem:[%s1 + $0x2c8] sm:$0xff]
    %v685 = vld [vmem:[%s1 + $0x2d0] sm:$0xff]
    %v686 = vld [vmem:[%s1 + $0x2d8] sm:$0xff]
    %v687 = vld [vmem:[%s1 + $0x2e0] sm:$0xff]
    %v688 = vld [vmem:[%s1 + $0x2e8] sm:$0xff]
    %v689 = vld [vmem:[%s1 + $0x2f0] sm:$0xff]
    %v690 = vld [vmem:[%s1 + $0x2f8] sm:$0xff]
    %v691 = vld [vmem:[%s1 + $0x300] sm:$0xff]
    %v692 = vld [vmem:[%s1 + $0x308] sm:$0xff]
    %v693 = vld [vmem:[%s1 + $0x310] sm:$0xff]
    %v694 = vld [vmem:[%s1 + $0x318] sm:$0xff]
    %v695 = vld [vmem:[%s1 + $0x320] sm:$0xff]
    %v696 = vld [vmem:[%s1 + $0x328] sm:$0xff]
    %v697 = vld [vmem:[%s1 + $0x330] sm:$0xff]
    %v698 = vld [vmem:[%s1 + $0x338] sm:$0xff]
    %v699 = vld [vmem:[%s1 + $0x340] sm:$0xff]
    %v700 = vld [vmem:[%s1 + $0x348] sm:$0xff]
    %v701 = vld [vmem:[%s1 + $0x350] sm:$0xff]
    %v702 = vld [vmem:[%s1 + $0x358] sm:$0xff]
    %v703 = vld [vmem:[%s1 + $0x360] sm:$0xff]
    %v704 = vld [vmem:[%s1 + $0x368] sm:$0xff]
    %v705 = vld [vmem:[%s1 + $0x370] sm:$0xff]
    %v706 = vld [vmem:[%s1 + $0x378] sm:$0xff]
    %v707 = vld [vmem:[%s1 + $0x380] sm:$0xff]
    %v708 = vld [vmem:[%s1 + $0x388] sm:$0xff]
    %v709 = vld [vmem:[%s1 + $0x390] sm:$0xff]
    %v710 = vld [vmem:[%s1 + $0x398] sm:$0xff]
    %v711 = vld [vmem:[%s1 + $0x3a0] sm:$0xff]
    %v712 = vld [vmem:[%s1 + $0x3a8] sm:$0xff]
    %v713 = vld [vmem:[%s1 + $0x3b0] sm:$0xff]
    %v714 = vld [vmem:[%s1 + $0x3b8] sm:$0xff]
    %v715 = vld [vmem:[%s1 + $0x3c0] sm:$0xff]
    %v716 = vld [vmem:[%s1 + $0x3c8] sm:$0xff]
    %v717 = vld [vmem:[%s1 + $0x3d0] sm:$0xff]
    %v718 = vld [vmem:[%s1 + $0x3d8] sm:$0xff]
    %v719 = vld [vmem:[%s1 + $0x3e0] sm:$0xff]
    %v720 = vld [vmem:[%s1 + $0x3e8] sm:$0xff]
    %v721 = vld [vmem:[%s1 + $0x3f0] sm:$0xff]
    %v722 = vld [vmem:[%s1 + $0x3f8] sm:$0xff]
    %v723 = vld [vmem:[%s1 + $0x400] sm:$0xff]
    %v724 = vld [vmem:[%s1 + $0x408] sm:$0xff]
    %v725 = vld [vmem:[%s1 + $0x410] sm:$0xff]
    %v726 = vld [vmem:[%s1 + $0x418] sm:$0xff]
    %v727 = vld [vmem:[%s1 + $0x420] sm:$0xff]
    %v728 = vld [vmem:[%s1 + $0x428] sm:$0xff]
    %v729 = vld [vmem:[%s1 + $0x430] sm:$0xff]
    %v730 = vld [vmem:[%s1 + $0x438] sm:$0xff]
    %v731 = vld [vmem:[%s1 + $0x440] sm:$0xff]
    %v732 = vld [vmem:[%s1 + $0x448] sm:$0xff]
    %v733 = vld [vmem:[%s1 + $0x450] sm:$0xff]
    %v734 = vld [vmem:[%s1 + $0x458] sm:$0xff]
    %v735 = vld [vmem:[%s1 + $0x460] sm:$0xff]
    %v736 = vld [vmem:[%s1 + $0x468] sm:$0xff]
    %v737 = vld [vmem:[%s1 + $0x470] sm:$0xff]
    %v738 = vld [vmem:[%s1 + $0x478] sm:$0xff]
    %v739 = vld [vmem:[%s1 + $0x480] sm:$0xff]
    %v740 = vld [vmem:[%s1 + $0x488] sm:$0xff]
    %v741 = vld [vmem:[%s1 + $0x490] sm:$0xff]
    %v742 = vld [vmem:[%s1 + $0x498] sm:$0xff]
    %v743 = vld [vmem:[%s1 + $0x4a0] sm:$0xff]
    %v744 = vld [vmem:[%s1 + $0x4a8] sm:$0xff]
    %v745 = vld [vmem:[%s1 + $0x4b0] sm:$0xff]
    %v746 = vld [vmem:[%s1 + $0x4b8] sm:$0xff]
    %v747 = vld [vmem:[%s1 + $0x4c0] sm:$0xff]
    %v748 = vld [vmem:[%s1 + $0x4c8] sm:$0xff]
    %v749 = vld [vmem:[%s1 + $0x4d0] sm:$0xff]
    %v750 = vld [vmem:[%s1 + $0x4d8] sm:$0xff]
    %v751 = vld [vmem:[%s1 + $0x4e0] sm:$0xff]
    %v752 = vld [vmem:[%s1 + $0x4e8] sm:$0xff]
    %v753 = vld [vmem:[%s1 + $0x4f0] sm:$0xff]
    %v754 = vld [vmem:[%s1 + $0x4f8] sm:$0xff]
    %v755 = vld [vmem:[%s1 + $0x500] sm:$0xff]
    %v756 = vld [vmem:[%s1 + $0x508] sm:$0xff]
    %v757 = vld [vmem:[%s1 + $0x510] sm:$0xff]
    %v758 = vld [vmem:[%s1 + $0x518] sm:$0xff]
    %v759 = vld [vmem:[%s1 + $0x520] sm:$0xff]
    %v760 = vld [vmem:[%s1 + $0x528] sm:$0xff]
    %v761 = vld [vmem:[%s1 + $0x530] sm:$0xff]
    %v762 = vld [vmem:[%s1 + $0x538] sm:$0xff]
    %v763 = vld [vmem:[%s1 + $0x540] sm:$0xff]
    %v764 = vld [vmem:[%s1 + $0x548] sm:$0xff]
    %v765 = vld [vmem:[%s1 + $0x550] sm:$0xff]
    %v766 = vld [vmem:[%s1 + $0x558] sm:$0xff]
    %v767 = vld [vmem:[%s1 + $0x560] sm:$0xff]
    %v768 = vld [vmem:[%s1 + $0x568] sm:$0xff]
    %v769 = vld [vmem:[%s1 + $0x570] sm:$0xff]
    %v770 = vld [vmem:[%s1 + $0x578] sm:$0xff]
    %v771 = vld [vmem:[%s1 + $0x580] sm:$0xff]
    %v772 = vld [vmem:[%s1 + $0x588] sm:$0xff]
    %v773 = vld [vmem:[%s1 + $0x590] sm:$0xff]
    %v774 = vld [vmem:[%s1 + $0x598] sm:$0xff]
    %v775 = vld [vmem:[%s1 + $0x5a0] sm:$0xff]
    %v776 = vld [vmem:[%s1 + $0x5a8] sm:$0xff]
    %v777 = vld [vmem:[%s1 + $0x5b0] sm:$0xff]
    %v778 = vld [vmem:[%s1 + $0x5b8] sm:$0xff]
    %v779 = vld [vmem:[%s1 + $0x5c0] sm:$0xff]
    %v780 = vld [vmem:[%s1 + $0x5c8] sm:$0xff]
    %v781 = vld [vmem:[%s1 + $0x5d0] sm:$0xff]
    %v782 = vld [vmem:[%s1 + $0x5d8] sm:$0xff]
    %v783 = vld [vmem:[%s1 + $0x5e0] sm:$0xff]
    %v784 = vld [vmem:[%s1 + $0x5e8] sm:$0xff]
    %v785 = vld [vmem:[%s1 + $0x5f0] sm:$0xff]
    %v786 = vld [vmem:[%s1 + $0x5f8] sm:$0xff]
    %v787 = vld [vmem:[%s1 + $0x600] sm:$0xff]
    %v788 = vld [vmem:[%s1 + $0x608] sm:$0xff]
    %v789 = vld [vmem:[%s1 + $0x610] sm:$0xff]
    %v790 = vld [vmem:[%s1 + $0x618] sm:$0xff]
    %v791 = vld [vmem:[%s1 + $0x620] sm:$0xff]
    %v792 = vld [vmem:[%s1 + $0x628] sm:$0xff]
    %v793 = vld [vmem:[%s1 + $0x630] sm:$0xff]
    %v794 = vld [vmem:[%s1 + $0x638] sm:$0xff]
    %v795 = vld [vmem:[%s1 + $0x640] sm:$0xff]
    %v796 = vld [vmem:[%s1 + $0x648] sm:$0xff]
    %v797 = vld [vmem:[%s1 + $0x650] sm:$0xff]
    %v798 = vld [vmem:[%s1 + $0x658] sm:$0xff]
    %v799 = vld [vmem:[%s1 + $0x660] sm:$0xff]
    %v800 = vld [vmem:[%s1 + $0x668] sm:$0xff]
    %v801 = vld [vmem:[%s1 + $0x670] sm:$0xff]
    %v802 = vld [vmem:[%s1 + $0x678] sm:$0xff]
    %v803 = vld [vmem:[%s1 + $0x680] sm:$0xff]
    %v804 = vld [vmem:[%s1 + $0x688] sm:$0xff]
    %v805 = vld [vmem:[%s1 + $0x690] sm:$0xff]
    %v806 = vld [vmem:[%s1 + $0x698] sm:$0xff]
    %v807 = vld [vmem:[%s1 + $0x6a0] sm:$0xff]
    %v808 = vld [vmem:[%s1 + $0x6a8] sm:$0xff]
    %v809 = vld [vmem:[%s1 + $0x6b0] sm:$0xff]
    %v810 = vld [vmem:[%s1 + $0x6b8] sm:$0xff]
    %v811 = vld [vmem:[%s1 + $0x6c0] sm:$0xff]
    %v812 = vld [vmem:[%s1 + $0x6c8] sm:$0xff]
    %v813 = vld [vmem:[%s1 + $0x6d0] sm:$0xff]
    %v814 = vld [vmem:[%s1 + $0x6d8] sm:$0xff]
    %v815 = vld [vmem:[%s1 + $0x6e0] sm:$0xff]
    %v816 = vld [vmem:[%s1 + $0x6e8] sm:$0xff]
    %v817 = vld [vmem:[%s1 + $0x6f0] sm:$0xff]
    %v818 = vld [vmem:[%s1 + $0x6f8] sm:$0xff]
    %v819 = vld [vmem:[%s1 + $0x700] sm:$0xff]
    %v820 = vld [vmem:[%s1 + $0x708] sm:$0xff]
    %v821 = vld [vmem:[%s1 + $0x710] sm:$0xff]
    %v822 = vld [vmem:[%s1 + $0x718] sm:$0xff]
    %vm823 = vcmask 261120
    %v825 = vsel %vm823, %v39, 0
    %v828 = vsel %vm823, %v54, 0
    %v831 = vsel %vm823, %v69, 0
    %v834 = vsel %vm823, %v84, 0
    %v837 = vsel %vm823, %v99, 0
    %v840 = vsel %vm823, %v114, 0
    %v843 = vsel %vm823, %v129, 0
    %v846 = vsel %vm823, %v144, 0
    %v849 = vsel %vm823, %v159, 0
    %v852 = vsel %vm823, %v174, 0
    %v855 = vsel %vm823, %v189, 0
    %v858 = vsel %vm823, %v204, 0
    %v861 = vsel %vm823, %v219, 0
    %v864 = vsel %vm823, %v234, 0
    %v867 = vsel %vm823, %v249, 0
    %v870 = vsel %vm823, %v264, 0
    %v873 = vsel %vm823, %v279, 0
    %v876 = vsel %vm823, %v294, 0
    %v879 = vsel %vm823, %v309, 0
    %v882 = vsel %vm823, %v324, 0
    %v885 = vsel %vm823, %v339, 0
    %v888 = vsel %vm823, %v354, 0
    %v891 = vsel %vm823, %v369, 0
    %v894 = vsel %vm823, %v384, 0
    %v897 = vsel %vm823, %v399, 0
    %v900 = vsel %vm823, %v414, 0
    %v903 = vsel %vm823, %v429, 0
    %v906 = vsel %vm823, %v444, 0
    %v909 = vsel %vm823, %v459, 0
    %v912 = vsel %vm823, %v474, 0
    %v915 = vsel %vm823, %v489, 0
    %v918 = vsel %vm823, %v504, 0
    %v921 = vsel %vm823, %v519, 0
    %v924 = vsel %vm823, %v534, 0
    %v927 = vsel %vm823, %v549, 0
    %v930 = vsel %vm823, %v564, 0
    %v933 = vsel %vm823, %v579, 0
    %v936 = vsel %vm823, %v594, 0
    %938 = vmatprep.subr.mxu0 0.0
    %939 = vmatpush1.msra.mxu0 %v595
    %940 = vmatprep.subr.mxu0 0.0
    %941 = vmatpush1.msra.mxu0 %v596
    %942 = vmatprep.subr.mxu0 0.0
    %943 = vmatpush1.msra.mxu0 %v597
    %944 = vmatprep.subr.mxu0 0.0
    %945 = vmatpush1.msra.mxu0 %v598
    %946 = vmatprep.subr.mxu0 0.0
    %947 = vmatpush1.msra.mxu0 %v599
    %948 = vmatprep.subr.mxu0 0.0
    %949 = vmatpush1.msra.mxu0 %v600
    %950 = vmatprep.subr.mxu0 0.0
    %951 = vmatpush1.msra.mxu0 %v601
    %952 = vmatprep.subr.mxu0 0.0
    %953 = vmatpush1.msra.mxu0 %v602
    %954 = vmatprep.subr.mxu0 0.0
    %955 = vmatpush1.msra.mxu0 %v603
    %956 = vmatprep.subr.mxu0 0.0
    %957 = vmatpush1.msra.mxu0 %v604
    %958 = vmatprep.subr.mxu0 0.0
    %959 = vmatpush1.msra.mxu0 %v605
    %960 = vmatprep.subr.mxu0 0.0
    %961 = vmatpush1.msra.mxu0 %v606
    %962 = vmatprep.subr.mxu0 0.0
    %963 = vmatpush1.msra.mxu0 %v607
    %964 = vmatprep.subr.mxu0 0.0
    %965 = vmatpush1.msra.mxu0 %v608
    %966 = vmatprep.subr.mxu0 0.0
    %967 = vmatpush1.msra.mxu0 %v609
    %968 = vmatprep.subr.mxu0 0.0
    %969 = vmatpush1.msra.mxu0 %v610
    %970 = vmatprep.subr.mxu0 0.0
    %971 = vmatpush1.msra.mxu0 %v611
    %972 = vmatprep.subr.mxu0 0.0
    %973 = vmatpush1.msra.mxu0 %v612
    %974 = vmatprep.subr.mxu0 0.0
    %975 = vmatpush1.msra.mxu0 %v613
    %976 = vmatprep.subr.mxu0 0.0
    %977 = vmatpush1.msra.mxu0 %v614
    %978 = vmatprep.subr.mxu0 0.0
    %979 = vmatpush1.msra.mxu0 %v615
    %980 = vmatprep.subr.mxu0 0.0
    %981 = vmatpush1.msra.mxu0 %v616
    %982 = vmatprep.subr.mxu0 0.0
    %983 = vmatpush1.msra.mxu0 %v617
    %984 = vmatprep.subr.mxu0 0.0
    %985 = vmatpush1.msra.mxu0 %v618
    %986 = vmatprep.subr.mxu0 0.0
    %987 = vmatpush1.msra.mxu0 %v619
    %988 = vmatprep.subr.mxu0 0.0
    %989 = vmatpush1.msra.mxu0 %v620
    %990 = vmatprep.subr.mxu0 0.0
    %991 = vmatpush1.msra.mxu0 %v621
    %992 = vmatprep.subr.mxu0 0.0
    %993 = vmatpush1.msra.mxu0 %v622
    %994 = vmatprep.subr.mxu0 0.0
    %995 = vmatpush1.msra.mxu0 %v623
    %996 = vmatprep.subr.mxu0 0.0
    %997 = vmatpush1.msra.mxu0 %v624
    %998 = vmatprep.subr.mxu0 0.0
    %999 = vmatpush1.msra.mxu0 %v625
    %1000 = vmatprep.subr.mxu0 0.0
    %1001 = vmatpush1.msra.mxu0 %v626
    %1002 = vmatprep.mubr.f32.mxu0 %v26
    %1003 = vmatmul.mubr.f32.gmra.mrb[0].mxu0 %v25
    %v1004 = vpop.f32.mrb[0].mxu0
    %v1005 = vadd.f32 0.0, %v1004
    %v1006 = vpop.f32.mrb[0].mxu0
    %1007 = vmatprep.mubr.f32.mxu0 %v41
    %1008 = vmatmul.mubr.f32.gmra.mrb[0].mxu0 %v40
    %v1009 = vpop.f32.mrb[0].mxu0
    %v1010 = vadd.f32 0.0, %v1009
    %v1011 = vpop.f32.mrb[0].mxu0
    %1012 = vmatprep.mubr.f32.mxu0 %v56
    %1013 = vmatmul.mubr.f32.gmra.mrb[0].mxu0 %v55
    %v1014 = vpop.f32.mrb[0].mxu0
    %v1015 = vadd.f32 0.0, %v1014
    %v1016 = vpop.f32.mrb[0].mxu0
    %1017 = vmatprep.mubr.f32.mxu0 %v71
    %1018 = vmatmul.mubr.f32.gmra.mrb[0].mxu0 %v70
    %v1019 = vpop.f32.mrb[0].mxu0
    %v1020 = vadd.f32 0.0, %v1019
    %v1021 = vpop.f32.mrb[0].mxu0
    %1022 = vmatprep.mubr.f32.mxu0 %v86
    %1023 = vmatmul.mubr.f32.gmra.mrb[0].mxu0 %v85
    %v1024 = vpop.f32.mrb[0].mxu0
    %v1025 = vadd.f32 0.0, %v1024
    %v1026 = vpop.f32.mrb[0].mxu0
    %1027 = vmatprep.mubr.f32.mxu0 %v101
    %1028 = vmatmul.mubr.f32.gmra.mrb[0].mxu0 %v100
    %v1029 = vpop.f32.mrb[0].mxu0
    %v1030 = vadd.f32 0.0, %v1029
    %v1031 = vpop.f32.mrb[0].mxu0
    %1032 = vmatprep.mubr.f32.mxu0 %v116
    %1033 = vmatmul.mubr.f32.gmra.mrb[0].mxu0 %v115
    %v1034 = vpop.f32.mrb[0].mxu0
    %v1035 = vadd.f32 0.0, %v1034
    %v1036 = vpop.f32.mrb[0].mxu0
    %1037 = vmatprep.mubr.f32.mxu0 %v131
    %1038 = vmatmul.mubr.f32.gmra.mrb[0].mxu0 %v130
    %v1039 = vpop.f32.mrb[0].mxu0
    %v1040 = vadd.f32 0.0, %v1039
    %v1041 = vpop.f32.mrb[0].mxu0
    %1042 = vmatprep.mubr.f32.mxu0 %v146
    %1043 = vmatmul.mubr.f32.gmra.mrb[0].mxu0 %v145
    %v1044 = vpop.f32.mrb[0].mxu0
    %v1045 = vadd.f32 0.0, %v1044
    %v1046 = vpop.f32.mrb[0].mxu0
    %1047 = vmatprep.mubr.f32.mxu0 %v161
    %1048 = vmatmul.mubr.f32.gmra.mrb[0].mxu0 %v160
    %v1049 = vpop.f32.mrb[0].mxu0
    %v1050 = vadd.f32 0.0, %v1049
    %v1051 = vpop.f32.mrb[0].mxu0
    %1052 = vmatprep.mubr.f32.mxu0 %v176
    %1053 = vmatmul.mubr.f32.gmra.mrb[0].mxu0 %v175
    %v1054 = vpop.f32.mrb[0].mxu0
    %v1055 = vadd.f32 0.0, %v1054
    %v1056 = vpop.f32.mrb[0].mxu0
    %1057 = vmatprep.mubr.f32.mxu0 %v191
    %1058 = vmatmul.mubr.f32.gmra.mrb[0].mxu0 %v190
    %v1059 = vpop.f32.mrb[0].mxu0
    %v1060 = vadd.f32 0.0, %v1059
    %v1061 = vpop.f32.mrb[0].mxu0
    %1062 = vmatprep.mubr.f32.mxu0 %v206
    %1063 = vmatmul.mubr.f32.gmra.mrb[0].mxu0 %v205
    %v1064 = vpop.f32.mrb[0].mxu0
    %v1065 = vadd.f32 0.0, %v1064
    %v1066 = vpop.f32.mrb[0].mxu0
    %1067 = vmatprep.mubr.f32.mxu0 %v221
    %1068 = vmatmul.mubr.f32.gmra.mrb[0].mxu0 %v220
    %v1069 = vpop.f32.mrb[0].mxu0
    %v1070 = vadd.f32 0.0, %v1069
    %v1071 = vpop.f32.mrb[0].mxu0
    %1072 = vmatprep.mubr.f32.mxu0 %v236
    %1073 = vmatmul.mubr.f32.gmra.mrb[0].mxu0 %v235
    %v1074 = vpop.f32.mrb[0].mxu0
    %v1075 = vadd.f32 0.0, %v1074
    %v1076 = vpop.f32.mrb[0].mxu0
    %1077 = vmatprep.mubr.f32.mxu0 %v251
    %1078 = vmatmul.mubr.f32.gmra.mrb[0].mxu0 %v250
    %v1079 = vpop.f32.mrb[0].mxu0
    %v1080 = vadd.f32 0.0, %v1079
    %v1081 = vpop.f32.mrb[0].mxu0
    %1082 = vmatprep.mubr.f32.mxu0 %v266
    %1083 = vmatmul.mubr.f32.gmra.mrb[0].mxu0 %v265
    %v1084 = vpop.f32.mrb[0].mxu0
    %v1085 = vadd.f32 0.0, %v1084
    %v1086 = vpop.f32.mrb[0].mxu0
    %1087 = vmatprep.mubr.f32.mxu0 %v281
    %1088 = vmatmul.mubr.f32.gmra.mrb[0].mxu0 %v280
    %v1089 = vpop.f32.mrb[0].mxu0
    %v1090 = vadd.f32 0.0, %v1089
    %v1091 = vpop.f32.mrb[0].mxu0
    %1092 = vmatprep.mubr.f32.mxu0 %v296
    %1093 = vmatmul.mubr.f32.gmra.mrb[0].mxu0 %v295
    %v1094 = vpop.f32.mrb[0].mxu0
    %v1095 = vadd.f32 0.0, %v1094
    %v1096 = vpop.f32.mrb[0].mxu0
    %1097 = vmatprep.mubr.f32.mxu0 %v311
    %1098 = vmatmul.mubr.f32.gmra.mrb[0].mxu0 %v310
    %v1099 = vpop.f32.mrb[0].mxu0
    %v1100 = vadd.f32 0.0, %v1099
    %v1101 = vpop.f32.mrb[0].mxu0
    %1102 = vmatprep.mubr.f32.mxu0 %v326
    %1103 = vmatmul.mubr.f32.gmra.mrb[0].mxu0 %v325
    %v1104 = vpop.f32.mrb[0].mxu0
    %v1105 = vadd.f32 0.0, %v1104
    %v1106 = vpop.f32.mrb[0].mxu0
    %1107 = vmatprep.mubr.f32.mxu0 %v341
    %1108 = vmatmul.mubr.f32.gmra.mrb[0].mxu0 %v340
    %v1109 = vpop.f32.mrb[0].mxu0
    %v1110 = vadd.f32 0.0, %v1109
    %v1111 = vpop.f32.mrb[0].mxu0
    %1112 = vmatprep.mubr.f32.mxu0 %v356
    %1113 = vmatmul.mubr.f32.gmra.mrb[0].mxu0 %v355
    %v1114 = vpop.f32.mrb[0].mxu0
    %v1115 = vadd.f32 0.0, %v1114
    %v1116 = vpop.f32.mrb[0].mxu0
    %1117 = vmatprep.mubr.f32.mxu0 %v371
    %1118 = vmatmul.mubr.f32.gmra.mrb[0].mxu0 %v370
    %v1119 = vpop.f32.mrb[0].mxu0
    %v1120 = vadd.f32 0.0, %v1119
    %v1121 = vpop.f32.mrb[0].mxu0
    %1122 = vmatprep.mubr.f32.mxu0 %v386
    %1123 = vmatmul.mubr.f32.gmra.mrb[0].mxu0 %v385
    %v1124 = vpop.f32.mrb[0].mxu0
    %v1125 = vadd.f32 0.0, %v1124
    %v1126 = vpop.f32.mrb[0].mxu0
    %1127 = vmatprep.mubr.f32.mxu0 %v401
    %1128 = vmatmul.mubr.f32.gmra.mrb[0].mxu0 %v400
    %v1129 = vpop.f32.mrb[0].mxu0
    %v1130 = vadd.f32 0.0, %v1129
    %v1131 = vpop.f32.mrb[0].mxu0
    %1132 = vmatprep.mubr.f32.mxu0 %v416
    %1133 = vmatmul.mubr.f32.gmra.mrb[0].mxu0 %v415
    %v1134 = vpop.f32.mrb[0].mxu0
    %v1135 = vadd.f32 0.0, %v1134
    %v1136 = vpop.f32.mrb[0].mxu0
    %1137 = vmatprep.mubr.f32.mxu0 %v431
    %1138 = vmatmul.mubr.f32.gmra.mrb[0].mxu0 %v430
    %v1139 = vpop.f32.mrb[0].mxu0
    %v1140 = vadd.f32 0.0, %v1139
    %v1141 = vpop.f32.mrb[0].mxu0
    %1142 = vmatprep.mubr.f32.mxu0 %v446
    %1143 = vmatmul.mubr.f32.gmra.mrb[0].mxu0 %v445
    %v1144 = vpop.f32.mrb[0].mxu0
    %v1145 = vadd.f32 0.0, %v1144
    %v1146 = vpop.f32.mrb[0].mxu0
    %1147 = vmatprep.mubr.f32.mxu0 %v461
    %1148 = vmatmul.mubr.f32.gmra.mrb[0].mxu0 %v460
    %v1149 = vpop.f32.mrb[0].mxu0
    %v1150 = vadd.f32 0.0, %v1149
    %v1151 = vpop.f32.mrb[0].mxu0
    %1152 = vmatprep.mubr.f32.mxu0 %v476
    %1153 = vmatmul.mubr.f32.gmra.mrb[0].mxu0 %v475
    %v1154 = vpop.f32.mrb[0].mxu0
    %v1155 = vadd.f32 0.0, %v1154
    %v1156 = vpop.f32.mrb[0].mxu0
    %1157 = vmatprep.mubr.f32.mxu0 %v491
    %1158 = vmatmul.mubr.f32.gmra.mrb[0].mxu0 %v490
    %v1159 = vpop.f32.mrb[0].mxu0
    %v1160 = vadd.f32 0.0, %v1159
    %v1161 = vpop.f32.mrb[0].mxu0
    %1162 = vmatprep.mubr.f32.mxu0 %v506
    %1163 = vmatmul.mubr.f32.gmra.mrb[0].mxu0 %v505
    %v1164 = vpop.f32.mrb[0].mxu0
    %v1165 = vadd.f32 0.0, %v1164
    %v1166 = vpop.f32.mrb[0].mxu0
    %1167 = vmatprep.mubr.f32.mxu0 %v521
    %1168 = vmatmul.mubr.f32.gmra.mrb[0].mxu0 %v520
    %v1169 = vpop.f32.mrb[0].mxu0
    %v1170 = vadd.f32 0.0, %v1169
    %v1171 = vpop.f32.mrb[0].mxu0
    %1172 = vmatprep.mubr.f32.mxu0 %v536
    %1173 = vmatmul.mubr.f32.gmra.mrb[0].mxu0 %v535
    %v1174 = vpop.f32.mrb[0].mxu0
    %v1175 = vadd.f32 0.0, %v1174
    %v1176 = vpop.f32.mrb[0].mxu0
    %1177 = vmatprep.mubr.f32.mxu0 %v551
    %1178 = vmatmul.mubr.f32.gmra.mrb[0].mxu0 %v550
    %v1179 = vpop.f32.mrb[0].mxu0
    %v1180 = vadd.f32 0.0, %v1179
    %v1181 = vpop.f32.mrb[0].mxu0
    %1182 = vmatprep.mubr.f32.mxu0 %v566
    %1183 = vmatmul.mubr.f32.gmra.mrb[0].mxu0 %v565
    %v1184 = vpop.f32.mrb[0].mxu0
    %v1185 = vadd.f32 0.0, %v1184
    %v1186 = vpop.f32.mrb[0].mxu0
    %1187 = vmatprep.mubr.f32.mxu0 %v581
    %1188 = vmatmul.mubr.f32.gmra.mrb[0].mxu0 %v580
    %v1189 = vpop.f32.mrb[0].mxu0
    %v1190 = vadd.f32 0.0, %v1189
    %v1191 = vpop.f32.mrb[0].mxu0
    %1192 = vdwg.mxu0
    %1193 = vmatprep.subr.mxu0 0.0
    %1194 = vmatpush1.msra.mxu0 %v627
    %1195 = vmatprep.subr.mxu0 0.0
    %1196 = vmatpush1.msra.mxu0 %v628
    %1197 = vmatprep.subr.mxu0 0.0
    %1198 = vmatpush1.msra.mxu0 %v629
    %1199 = vmatprep.subr.mxu0 0.0
    %1200 = vmatpush1.msra.mxu0 %v630
    %1201 = vmatprep.subr.mxu0 0.0
    %1202 = vmatpush1.msra.mxu0 %v631
    %1203 = vmatprep.subr.mxu0 0.0
    %1204 = vmatpush1.msra.mxu0 %v632
    %1205 = vmatprep.subr.mxu0 0.0
    %1206 = vmatpush1.msra.mxu0 %v633
    %1207 = vmatprep.subr.mxu0 0.0
    %1208 = vmatpush1.msra.mxu0 %v634
    %1209 = vmatprep.subr.mxu0 0.0
    %1210 = vmatpush1.msra.mxu0 %v635
    %1211 = vmatprep.subr.mxu0 0.0
    %1212 = vmatpush1.msra.mxu0 %v636
    %1213 = vmatprep.subr.mxu0 0.0
    %1214 = vmatpush1.msra.mxu0 %v637
    %1215 = vmatprep.subr.mxu0 0.0
    %1216 = vmatpush1.msra.mxu0 %v638
    %1217 = vmatprep.subr.mxu0 0.0
    %1218 = vmatpush1.msra.mxu0 %v639
    %1219 = vmatprep.subr.mxu0 0.0
    %1220 = vmatpush1.msra.mxu0 %v640
    %1221 = vmatprep.subr.mxu0 0.0
    %1222 = vmatpush1.msra.mxu0 %v641
    %1223 = vmatprep.subr.mxu0 0.0
    %1224 = vmatpush1.msra.mxu0 %v642
    %1225 = vmatprep.subr.mxu0 0.0
    %1226 = vmatpush1.msra.mxu0 %v643
    %1227 = vmatprep.subr.mxu0 0.0
    %1228 = vmatpush1.msra.mxu0 %v644
    %1229 = vmatprep.subr.mxu0 0.0
    %1230 = vmatpush1.msra.mxu0 %v645
    %1231 = vmatprep.subr.mxu0 0.0
    %1232 = vmatpush1.msra.mxu0 %v646
    %1233 = vmatprep.subr.mxu0 0.0
    %1234 = vmatpush1.msra.mxu0 %v647
    %1235 = vmatprep.subr.mxu0 0.0
    %1236 = vmatpush1.msra.mxu0 %v648
    %1237 = vmatprep.subr.mxu0 0.0
    %1238 = vmatpush1.msra.mxu0 %v649
    %1239 = vmatprep.subr.mxu0 0.0
    %1240 = vmatpush1.msra.mxu0 %v650
    %1241 = vmatprep.subr.mxu0 0.0
    %1242 = vmatpush1.msra.mxu0 %v651
    %1243 = vmatprep.subr.mxu0 0.0
    %1244 = vmatpush1.msra.mxu0 %v652
    %1245 = vmatprep.subr.mxu0 0.0
    %1246 = vmatpush1.msra.mxu0 %v653
    %1247 = vmatprep.subr.mxu0 0.0
    %1248 = vmatpush1.msra.mxu0 %v654
    %1249 = vmatprep.subr.mxu0 0.0
    %1250 = vmatpush1.msra.mxu0 %v655
    %1251 = vmatprep.subr.mxu0 0.0
    %1252 = vmatpush1.msra.mxu0 %v656
    %1253 = vmatprep.subr.mxu0 0.0
    %1254 = vmatpush1.msra.mxu0 %v657
    %1255 = vmatprep.subr.mxu0 0.0
    %1256 = vmatpush1.msra.mxu0 %v658
    %1257 = vmatprep.mubr.f32.mxu0 %v28
    %1258 = vmatmul.mubr.f32.gmra.mrb[0].mxu0 %v27
    %v1259 = vpop.f32.mrb[0].mxu0
    %v1260 = vadd.f32 %v1005, %v1259
    %v1261 = vpop.f32.mrb[0].mxu0
    %1262 = vmatprep.mubr.f32.mxu0 %v43
    %1263 = vmatmul.mubr.f32.gmra.mrb[0].mxu0 %v42
    %v1264 = vpop.f32.mrb[0].mxu0
    %v1265 = vadd.f32 %v1010, %v1264
    %v1266 = vpop.f32.mrb[0].mxu0
    %1267 = vmatprep.mubr.f32.mxu0 %v58
    %1268 = vmatmul.mubr.f32.gmra.mrb[0].mxu0 %v57
    %v1269 = vpop.f32.mrb[0].mxu0
    %v1270 = vadd.f32 %v1015, %v1269
    %v1271 = vpop.f32.mrb[0].mxu0
    %1272 = vmatprep.mubr.f32.mxu0 %v73
    %1273 = vmatmul.mubr.f32.gmra.mrb[0].mxu0 %v72
    %v1274 = vpop.f32.mrb[0].mxu0
    %v1275 = vadd.f32 %v1020, %v1274
    %v1276 = vpop.f32.mrb[0].mxu0
    %1277 = vmatprep.mubr.f32.mxu0 %v88
    %1278 = vmatmul.mubr.f32.gmra.mrb[0].mxu0 %v87
    %v1279 = vpop.f32.mrb[0].mxu0
    %v1280 = vadd.f32 %v1025, %v1279
    %v1281 = vpop.f32.mrb[0].mxu0
    %1282 = vmatprep.mubr.f32.mxu0 %v103
    %1283 = vmatmul.mubr.f32.gmra.mrb[0].mxu0 %v102
    %v1284 = vpop.f32.mrb[0].mxu0
    %v1285 = vadd.f32 %v1030, %v1284
    %v1286 = vpop.f32.mrb[0].mxu0
    %1287 = vmatprep.mubr.f32.mxu0 %v118
    %1288 = vmatmul.mubr.f32.gmra.mrb[0].mxu0 %v117
    %v1289 = vpop.f32.mrb[0].mxu0
    %v1290 = vadd.f32 %v1035, %v1289
    %v1291 = vpop.f32.mrb[0].mxu0
    %1292 = vmatprep.mubr.f32.mxu0 %v133
    %1293 = vmatmul.mubr.f32.gmra.mrb[0].mxu0 %v132
    %v1294 = vpop.f32.mrb[0].mxu0
    %v1295 = vadd.f32 %v1040, %v1294
    %v1296 = vpop.f32.mrb[0].mxu0
    %1297 = vmatprep.mubr.f32.mxu0 %v148
    %1298 = vmatmul.mubr.f32.gmra.mrb[0].mxu0 %v147
    %v1299 = vpop.f32.mrb[0].mxu0
    %v1300 = vadd.f32 %v1045, %v1299
    %v1301 = vpop.f32.mrb[0].mxu0
    %1302 = vmatprep.mubr.f32.mxu0 %v163
    %1303 = vmatmul.mubr.f32.gmra.mrb[0].mxu0 %v162
    %v1304 = vpop.f32.mrb[0].mxu0
    %v1305 = vadd.f32 %v1050, %v1304
    %v1306 = vpop.f32.mrb[0].mxu0
    %1307 = vmatprep.mubr.f32.mxu0 %v178
    %1308 = vmatmul.mubr.f32.gmra.mrb[0].mxu0 %v177
    %v1309 = vpop.f32.mrb[0].mxu0
    %v1310 = vadd.f32 %v1055, %v1309
    %v1311 = vpop.f32.mrb[0].mxu0
    %1312 = vmatprep.mubr.f32.mxu0 %v193
    %1313 = vmatmul.mubr.f32.gmra.mrb[0].mxu0 %v192
    %v1314 = vpop.f32.mrb[0].mxu0
    %v1315 = vadd.f32 %v1060, %v1314
    %v1316 = vpop.f32.mrb[0].mxu0
    %1317 = vmatprep.mubr.f32.mxu0 %v208
    %1318 = vmatmul.mubr.f32.gmra.mrb[0].mxu0 %v207
    %v1319 = vpop.f32.mrb[0].mxu0
    %v1320 = vadd.f32 %v1065, %v1319
    %v1321 = vpop.f32.mrb[0].mxu0
    %1322 = vmatprep.mubr.f32.mxu0 %v223
    %1323 = vmatmul.mubr.f32.gmra.mrb[0].mxu0 %v222
    %v1324 = vpop.f32.mrb[0].mxu0
    %v1325 = vadd.f32 %v1070, %v1324
    %v1326 = vpop.f32.mrb[0].mxu0
    %1327 = vmatprep.mubr.f32.mxu0 %v238
    %1328 = vmatmul.mubr.f32.gmra.mrb[0].mxu0 %v237
    %v1329 = vpop.f32.mrb[0].mxu0
    %v1330 = vadd.f32 %v1075, %v1329
    %v1331 = vpop.f32.mrb[0].mxu0
    %1332 = vmatprep.mubr.f32.mxu0 %v253
    %1333 = vmatmul.mubr.f32.gmra.mrb[0].mxu0 %v252
    %v1334 = vpop.f32.mrb[0].mxu0
    %v1335 = vadd.f32 %v1080, %v1334
    %v1336 = vpop.f32.mrb[0].mxu0
    %1337 = vmatprep.mubr.f32.mxu0 %v268
    %1338 = vmatmul.mubr.f32.gmra.mrb[0].mxu0 %v267
    %v1339 = vpop.f32.mrb[0].mxu0
    %v1340 = vadd.f32 %v1085, %v1339
    %v1341 = vpop.f32.mrb[0].mxu0
    %1342 = vmatprep.mubr.f32.mxu0 %v283
    %1343 = vmatmul.mubr.f32.gmra.mrb[0].mxu0 %v282
    %v1344 = vpop.f32.mrb[0].mxu0
    %v1345 = vadd.f32 %v1090, %v1344
    %v1346 = vpop.f32.mrb[0].mxu0
    %1347 = vmatprep.mubr.f32.mxu0 %v298
    %1348 = vmatmul.mubr.f32.gmra.mrb[0].mxu0 %v297
    %v1349 = vpop.f32.mrb[0].mxu0
    %v1350 = vadd.f32 %v1095, %v1349
    %v1351 = vpop.f32.mrb[0].mxu0
    %1352 = vmatprep.mubr.f32.mxu0 %v313
    %1353 = vmatmul.mubr.f32.gmra.mrb[0].mxu0 %v312
    %v1354 = vpop.f32.mrb[0].mxu0
    %v1355 = vadd.f32 %v1100, %v1354
    %v1356 = vpop.f32.mrb[0].mxu0
    %1357 = vmatprep.mubr.f32.mxu0 %v328
    %1358 = vmatmul.mubr.f32.gmra.mrb[0].mxu0 %v327
    %v1359 = vpop.f32.mrb[0].mxu0
    %v1360 = vadd.f32 %v1105, %v1359
    %v1361 = vpop.f32.mrb[0].mxu0
    %1362 = vmatprep.mubr.f32.mxu0 %v343
    %1363 = vmatmul.mubr.f32.gmra.mrb[0].mxu0 %v342
    %v1364 = vpop.f32.mrb[0].mxu0
    %v1365 = vadd.f32 %v1110, %v1364
    %v1366 = vpop.f32.mrb[0].mxu0
    %1367 = vmatprep.mubr.f32.mxu0 %v358
    %1368 = vmatmul.mubr.f32.gmra.mrb[0].mxu0 %v357
    %v1369 = vpop.f32.mrb[0].mxu0
    %v1370 = vadd.f32 %v1115, %v1369
    %v1371 = vpop.f32.mrb[0].mxu0
    %1372 = vmatprep.mubr.f32.mxu0 %v373
    %1373 = vmatmul.mubr.f32.gmra.mrb[0].mxu0 %v372
    %v1374 = vpop.f32.mrb[0].mxu0
    %v1375 = vadd.f32 %v1120, %v1374
    %v1376 = vpop.f32.mrb[0].mxu0
    %1377 = vmatprep.mubr.f32.mxu0 %v388
    %1378 = vmatmul.mubr.f32.gmra.mrb[0].mxu0 %v387
    %v1379 = vpop.f32.mrb[0].mxu0
    %v1380 = vadd.f32 %v1125, %v1379
    %v1381 = vpop.f32.mrb[0].mxu0
    %1382 = vmatprep.mubr.f32.mxu0 %v403
    %1383 = vmatmul.mubr.f32.gmra.mrb[0].mxu0 %v402
    %v1384 = vpop.f32.mrb[0].mxu0
    %v1385 = vadd.f32 %v1130, %v1384
    %v1386 = vpop.f32.mrb[0].mxu0
    %1387 = vmatprep.mubr.f32.mxu0 %v418
    %1388 = vmatmul.mubr.f32.gmra.mrb[0].mxu0 %v417
    %v1389 = vpop.f32.mrb[0].mxu0
    %v1390 = vadd.f32 %v1135, %v1389
    %v1391 = vpop.f32.mrb[0].mxu0
    %1392 = vmatprep.mubr.f32.mxu0 %v433
    %1393 = vmatmul.mubr.f32.gmra.mrb[0].mxu0 %v432
    %v1394 = vpop.f32.mrb[0].mxu0
    %v1395 = vadd.f32 %v1140, %v1394
    %v1396 = vpop.f32.mrb[0].mxu0
    %1397 = vmatprep.mubr.f32.mxu0 %v448
    %1398 = vmatmul.mubr.f32.gmra.mrb[0].mxu0 %v447
    %v1399 = vpop.f32.mrb[0].mxu0
    %v1400 = vadd.f32 %v1145, %v1399
    %v1401 = vpop.f32.mrb[0].mxu0
    %1402 = vmatprep.mubr.f32.mxu0 %v463
    %1403 = vmatmul.mubr.f32.gmra.mrb[0].mxu0 %v462
    %v1404 = vpop.f32.mrb[0].mxu0
    %v1405 = vadd.f32 %v1150, %v1404
    %v1406 = vpop.f32.mrb[0].mxu0
    %1407 = vmatprep.mubr.f32.mxu0 %v478
    %1408 = vmatmul.mubr.f32.gmra.mrb[0].mxu0 %v477
    %v1409 = vpop.f32.mrb[0].mxu0
    %v1410 = vadd.f32 %v1155, %v1409
    %v1411 = vpop.f32.mrb[0].mxu0
    %1412 = vmatprep.mubr.f32.mxu0 %v493
    %1413 = vmatmul.mubr.f32.gmra.mrb[0].mxu0 %v492
    %v1414 = vpop.f32.mrb[0].mxu0
    %v1415 = vadd.f32 %v1160, %v1414
    %v1416 = vpop.f32.mrb[0].mxu0
    %1417 = vmatprep.mubr.f32.mxu0 %v508
    %1418 = vmatmul.mubr.f32.gmra.mrb[0].mxu0 %v507
    %v1419 = vpop.f32.mrb[0].mxu0
    %v1420 = vadd.f32 %v1165, %v1419
    %v1421 = vpop.f32.mrb[0].mxu0
    %1422 = vmatprep.mubr.f32.mxu0 %v523
    %1423 = vmatmul.mubr.f32.gmra.mrb[0].mxu0 %v522
    %v1424 = vpop.f32.mrb[0].mxu0
    %v1425 = vadd.f32 %v1170, %v1424
    %v1426 = vpop.f32.mrb[0].mxu0
    %1427 = vmatprep.mubr.f32.mxu0 %v538
    %1428 = vmatmul.mubr.f32.gmra.mrb[0].mxu0 %v537
    %v1429 = vpop.f32.mrb[0].mxu0
    %v1430 = vadd.f32 %v1175, %v1429
    %v1431 = vpop.f32.mrb[0].mxu0
    %1432 = vmatprep.mubr.f32.mxu0 %v553
    %1433 = vmatmul.mubr.f32.gmra.mrb[0].mxu0 %v552
    %v1434 = vpop.f32.mrb[0].mxu0
    %v1435 = vadd.f32 %v1180, %v1434
    %v1436 = vpop.f32.mrb[0].mxu0
    %1437 = vmatprep.mubr.f32.mxu0 %v568
    %1438 = vmatmul.mubr.f32.gmra.mrb[0].mxu0 %v567
    %v1439 = vpop.f32.mrb[0].mxu0
    %v1440 = vadd.f32 %v1185, %v1439
    %v1441 = vpop.f32.mrb[0].mxu0
    %1442 = vmatprep.mubr.f32.mxu0 %v583
    %1443 = vmatmul.mubr.f32.gmra.mrb[0].mxu0 %v582
    %v1444 = vpop.f32.mrb[0].mxu0
    %v1445 = vadd.f32 %v1190, %v1444
    %v1446 = vpop.f32.mrb[0].mxu0
    %1447 = vdwg.mxu0
    %1448 = vmatprep.subr.mxu0 0.0
    %1449 = vmatpush1.msra.mxu0 %v659
    %1450 = vmatprep.subr.mxu0 0.0
    %1451 = vmatpush1.msra.mxu0 %v660
    %1452 = vmatprep.subr.mxu0 0.0
    %1453 = vmatpush1.msra.mxu0 %v661
    %1454 = vmatprep.subr.mxu0 0.0
    %1455 = vmatpush1.msra.mxu0 %v662
    %1456 = vmatprep.subr.mxu0 0.0
    %1457 = vmatpush1.msra.mxu0 %v663
    %1458 = vmatprep.subr.mxu0 0.0
    %1459 = vmatpush1.msra.mxu0 %v664
    %1460 = vmatprep.subr.mxu0 0.0
    %1461 = vmatpush1.msra.mxu0 %v665
    %1462 = vmatprep.subr.mxu0 0.0
    %1463 = vmatpush1.msra.mxu0 %v666
    %1464 = vmatprep.subr.mxu0 0.0
    %1465 = vmatpush1.msra.mxu0 %v667
    %1466 = vmatprep.subr.mxu0 0.0
    %1467 = vmatpush1.msra.mxu0 %v668
    %1468 = vmatprep.subr.mxu0 0.0
    %1469 = vmatpush1.msra.mxu0 %v669
    %1470 = vmatprep.subr.mxu0 0.0
    %1471 = vmatpush1.msra.mxu0 %v670
    %1472 = vmatprep.subr.mxu0 0.0
    %1473 = vmatpush1.msra.mxu0 %v671
    %1474 = vmatprep.subr.mxu0 0.0
    %1475 = vmatpush1.msra.mxu0 %v672
    %1476 = vmatprep.subr.mxu0 0.0
    %1477 = vmatpush1.msra.mxu0 %v673
    %1478 = vmatprep.subr.mxu0 0.0
    %1479 = vmatpush1.msra.mxu0 %v674
    %1480 = vmatprep.subr.mxu0 0.0
    %1481 = vmatpush1.msra.mxu0 %v675
    %1482 = vmatprep.subr.mxu0 0.0
    %1483 = vmatpush1.msra.mxu0 %v676
    %1484 = vmatprep.subr.mxu0 0.0
    %1485 = vmatpush1.msra.mxu0 %v677
    %1486 = vmatprep.subr.mxu0 0.0
    %1487 = vmatpush1.msra.mxu0 %v678
    %1488 = vmatprep.subr.mxu0 0.0
    %1489 = vmatpush1.msra.mxu0 %v679
    %1490 = vmatprep.subr.mxu0 0.0
    %1491 = vmatpush1.msra.mxu0 %v680
    %1492 = vmatprep.subr.mxu0 0.0
    %1493 = vmatpush1.msra.mxu0 %v681
    %1494 = vmatprep.subr.mxu0 0.0
    %1495 = vmatpush1.msra.mxu0 %v682
    %1496 = vmatprep.subr.mxu0 0.0
    %1497 = vmatpush1.msra.mxu0 %v683
    %1498 = vmatprep.subr.mxu0 0.0
    %1499 = vmatpush1.msra.mxu0 %v684
    %1500 = vmatprep.subr.mxu0 0.0
    %1501 = vmatpush1.msra.mxu0 %v685
    %1502 = vmatprep.subr.mxu0 0.0
    %1503 = vmatpush1.msra.mxu0 %v686
    %1504 = vmatprep.subr.mxu0 0.0
    %1505 = vmatpush1.msra.mxu0 %v687
    %1506 = vmatprep.subr.mxu0 0.0
    %1507 = vmatpush1.msra.mxu0 %v688
    %1508 = vmatprep.subr.mxu0 0.0
    %1509 = vmatpush1.msra.mxu0 %v689
    %1510 = vmatprep.subr.mxu0 0.0
    %1511 = vmatpush1.msra.mxu0 %v690
    %1512 = vmatprep.mubr.f32.mxu0 %v30
    %1513 = vmatmul.mubr.f32.gmra.mrb[0].mxu0 %v29
    %v1514 = vpop.f32.mrb[0].mxu0
    %v1515 = vadd.f32 %v1260, %v1514
    %v1516 = vpop.f32.mrb[0].mxu0
    %1517 = vmatprep.mubr.f32.mxu0 %v45
    %1518 = vmatmul.mubr.f32.gmra.mrb[0].mxu0 %v44
    %v1519 = vpop.f32.mrb[0].mxu0
    %v1520 = vadd.f32 %v1265, %v1519
    %v1521 = vpop.f32.mrb[0].mxu0
    %1522 = vmatprep.mubr.f32.mxu0 %v60
    %1523 = vmatmul.mubr.f32.gmra.mrb[0].mxu0 %v59
    %v1524 = vpop.f32.mrb[0].mxu0
    %v1525 = vadd.f32 %v1270, %v1524
    %v1526 = vpop.f32.mrb[0].mxu0
    %1527 = vmatprep.mubr.f32.mxu0 %v75
    %1528 = vmatmul.mubr.f32.gmra.mrb[0].mxu0 %v74
    %v1529 = vpop.f32.mrb[0].mxu0
    %v1530 = vadd.f32 %v1275, %v1529
    %v1531 = vpop.f32.mrb[0].mxu0
    %1532 = vmatprep.mubr.f32.mxu0 %v90
    %1533 = vmatmul.mubr.f32.gmra.mrb[0].mxu0 %v89
    %v1534 = vpop.f32.mrb[0].mxu0
    %v1535 = vadd.f32 %v1280, %v1534
    %v1536 = vpop.f32.mrb[0].mxu0
    %1537 = vmatprep.mubr.f32.mxu0 %v105
    %1538 = vmatmul.mubr.f32.gmra.mrb[0].mxu0 %v104
    %v1539 = vpop.f32.mrb[0].mxu0
    %v1540 = vadd.f32 %v1285, %v1539
    %v1541 = vpop.f32.mrb[0].mxu0
    %1542 = vmatprep.mubr.f32.mxu0 %v120
    %1543 = vmatmul.mubr.f32.gmra.mrb[0].mxu0 %v119
    %v1544 = vpop.f32.mrb[0].mxu0
    %v1545 = vadd.f32 %v1290, %v1544
    %v1546 = vpop.f32.mrb[0].mxu0
    %1547 = vmatprep.mubr.f32.mxu0 %v135
    %1548 = vmatmul.mubr.f32.gmra.mrb[0].mxu0 %v134
    %v1549 = vpop.f32.mrb[0].mxu0
    %v1550 = vadd.f32 %v1295, %v1549
    %v1551 = vpop.f32.mrb[0].mxu0
    %1552 = vmatprep.mubr.f32.mxu0 %v150
    %1553 = vmatmul.mubr.f32.gmra.mrb[0].mxu0 %v149
    %v1554 = vpop.f32.mrb[0].mxu0
    %v1555 = vadd.f32 %v1300, %v1554
    %v1556 = vpop.f32.mrb[0].mxu0
    %1557 = vmatprep.mubr.f32.mxu0 %v165
    %1558 = vmatmul.mubr.f32.gmra.mrb[0].mxu0 %v164
    %v1559 = vpop.f32.mrb[0].mxu0
    %v1560 = vadd.f32 %v1305, %v1559
    %v1561 = vpop.f32.mrb[0].mxu0
    %1562 = vmatprep.mubr.f32.mxu0 %v180
    %1563 = vmatmul.mubr.f32.gmra.mrb[0].mxu0 %v179
    %v1564 = vpop.f32.mrb[0].mxu0
    %v1565 = vadd.f32 %v1310, %v1564
    %v1566 = vpop.f32.mrb[0].mxu0
    %1567 = vmatprep.mubr.f32.mxu0 %v195
    %1568 = vmatmul.mubr.f32.gmra.mrb[0].mxu0 %v194
    %v1569 = vpop.f32.mrb[0].mxu0
    %v1570 = vadd.f32 %v1315, %v1569
    %v1571 = vpop.f32.mrb[0].mxu0
    %1572 = vmatprep.mubr.f32.mxu0 %v210
    %1573 = vmatmul.mubr.f32.gmra.mrb[0].mxu0 %v209
    %v1574 = vpop.f32.mrb[0].mxu0
    %v1575 = vadd.f32 %v1320, %v1574
    %v1576 = vpop.f32.mrb[0].mxu0
    %1577 = vmatprep.mubr.f32.mxu0 %v225
    %1578 = vmatmul.mubr.f32.gmra.mrb[0].mxu0 %v224
    %v1579 = vpop.f32.mrb[0].mxu0
    %v1580 = vadd.f32 %v1325, %v1579
    %v1581 = vpop.f32.mrb[0].mxu0
    %1582 = vmatprep.mubr.f32.mxu0 %v240
    %1583 = vmatmul.mubr.f32.gmra.mrb[0].mxu0 %v239
    %v1584 = vpop.f32.mrb[0].mxu0
    %v1585 = vadd.f32 %v1330, %v1584
    %v1586 = vpop.f32.mrb[0].mxu0
    %1587 = vmatprep.mubr.f32.mxu0 %v255
    %1588 = vmatmul.mubr.f32.gmra.mrb[0].mxu0 %v254
    %v1589 = vpop.f32.mrb[0].mxu0
    %v1590 = vadd.f32 %v1335, %v1589
    %v1591 = vpop.f32.mrb[0].mxu0
    %1592 = vmatprep.mubr.f32.mxu0 %v270
    %1593 = vmatmul.mubr.f32.gmra.mrb[0].mxu0 %v269
    %v1594 = vpop.f32.mrb[0].mxu0
    %v1595 = vadd.f32 %v1340, %v1594
    %v1596 = vpop.f32.mrb[0].mxu0
    %1597 = vmatprep.mubr.f32.mxu0 %v285
    %1598 = vmatmul.mubr.f32.gmra.mrb[0].mxu0 %v284
    %v1599 = vpop.f32.mrb[0].mxu0
    %v1600 = vadd.f32 %v1345, %v1599
    %v1601 = vpop.f32.mrb[0].mxu0
    %1602 = vmatprep.mubr.f32.mxu0 %v300
    %1603 = vmatmul.mubr.f32.gmra.mrb[0].mxu0 %v299
    %v1604 = vpop.f32.mrb[0].mxu0
    %v1605 = vadd.f32 %v1350, %v1604
    %v1606 = vpop.f32.mrb[0].mxu0
    %1607 = vmatprep.mubr.f32.mxu0 %v315
    %1608 = vmatmul.mubr.f32.gmra.mrb[0].mxu0 %v314
    %v1609 = vpop.f32.mrb[0].mxu0
    %v1610 = vadd.f32 %v1355, %v1609
    %v1611 = vpop.f32.mrb[0].mxu0
    %1612 = vmatprep.mubr.f32.mxu0 %v330
    %1613 = vmatmul.mubr.f32.gmra.mrb[0].mxu0 %v329
    %v1614 = vpop.f32.mrb[0].mxu0
    %v1615 = vadd.f32 %v1360, %v1614
    %v1616 = vpop.f32.mrb[0].mxu0
    %1617 = vmatprep.mubr.f32.mxu0 %v345
    %1618 = vmatmul.mubr.f32.gmra.mrb[0].mxu0 %v344
    %v1619 = vpop.f32.mrb[0].mxu0
    %v1620 = vadd.f32 %v1365, %v1619
    %v1621 = vpop.f32.mrb[0].mxu0
    %1622 = vmatprep.mubr.f32.mxu0 %v360
    %1623 = vmatmul.mubr.f32.gmra.mrb[0].mxu0 %v359
    %v1624 = vpop.f32.mrb[0].mxu0
    %v1625 = vadd.f32 %v1370, %v1624
    %v1626 = vpop.f32.mrb[0].mxu0
    %1627 = vmatprep.mubr.f32.mxu0 %v375
    %1628 = vmatmul.mubr.f32.gmra.mrb[0].mxu0 %v374
    %v1629 = vpop.f32.mrb[0].mxu0
    %v1630 = vadd.f32 %v1375, %v1629
    %v1631 = vpop.f32.mrb[0].mxu0
    %1632 = vmatprep.mubr.f32.mxu0 %v390
    %1633 = vmatmul.mubr.f32.gmra.mrb[0].mxu0 %v389
    %v1634 = vpop.f32.mrb[0].mxu0
    %v1635 = vadd.f32 %v1380, %v1634
    %v1636 = vpop.f32.mrb[0].mxu0
    %1637 = vmatprep.mubr.f32.mxu0 %v405
    %1638 = vmatmul.mubr.f32.gmra.mrb[0].mxu0 %v404
    %v1639 = vpop.f32.mrb[0].mxu0
    %v1640 = vadd.f32 %v1385, %v1639
    %v1641 = vpop.f32.mrb[0].mxu0
    %1642 = vmatprep.mubr.f32.mxu0 %v420
    %1643 = vmatmul.mubr.f32.gmra.mrb[0].mxu0 %v419
    %v1644 = vpop.f32.mrb[0].mxu0
    %v1645 = vadd.f32 %v1390, %v1644
    %v1646 = vpop.f32.mrb[0].mxu0
    %1647 = vmatprep.mubr.f32.mxu0 %v435
    %1648 = vmatmul.mubr.f32.gmra.mrb[0].mxu0 %v434
    %v1649 = vpop.f32.mrb[0].mxu0
    %v1650 = vadd.f32 %v1395, %v1649
    %v1651 = vpop.f32.mrb[0].mxu0
    %1652 = vmatprep.mubr.f32.mxu0 %v450
    %1653 = vmatmul.mubr.f32.gmra.mrb[0].mxu0 %v449
    %v1654 = vpop.f32.mrb[0].mxu0
    %v1655 = vadd.f32 %v1400, %v1654
    %v1656 = vpop.f32.mrb[0].mxu0
    %1657 = vmatprep.mubr.f32.mxu0 %v465
    %1658 = vmatmul.mubr.f32.gmra.mrb[0].mxu0 %v464
    %v1659 = vpop.f32.mrb[0].mxu0
    %v1660 = vadd.f32 %v1405, %v1659
    %v1661 = vpop.f32.mrb[0].mxu0
    %1662 = vmatprep.mubr.f32.mxu0 %v480
    %1663 = vmatmul.mubr.f32.gmra.mrb[0].mxu0 %v479
    %v1664 = vpop.f32.mrb[0].mxu0
    %v1665 = vadd.f32 %v1410, %v1664
    %v1666 = vpop.f32.mrb[0].mxu0
    %1667 = vmatprep.mubr.f32.mxu0 %v495
    %1668 = vmatmul.mubr.f32.gmra.mrb[0].mxu0 %v494
    %v1669 = vpop.f32.mrb[0].mxu0
    %v1670 = vadd.f32 %v1415, %v1669
    %v1671 = vpop.f32.mrb[0].mxu0
    %1672 = vmatprep.mubr.f32.mxu0 %v510
    %1673 = vmatmul.mubr.f32.gmra.mrb[0].mxu0 %v509
    %v1674 = vpop.f32.mrb[0].mxu0
    %v1675 = vadd.f32 %v1420, %v1674
    %v1676 = vpop.f32.mrb[0].mxu0
    %1677 = vmatprep.mubr.f32.mxu0 %v525
    %1678 = vmatmul.mubr.f32.gmra.mrb[0].mxu0 %v524
    %v1679 = vpop.f32.mrb[0].mxu0
    %v1680 = vadd.f32 %v1425, %v1679
    %v1681 = vpop.f32.mrb[0].mxu0
    %1682 = vmatprep.mubr.f32.mxu0 %v540
    %1683 = vmatmul.mubr.f32.gmra.mrb[0].mxu0 %v539
    %v1684 = vpop.f32.mrb[0].mxu0
    %v1685 = vadd.f32 %v1430, %v1684
    %v1686 = vpop.f32.mrb[0].mxu0
    %1687 = vmatprep.mubr.f32.mxu0 %v555
    %1688 = vmatmul.mubr.f32.gmra.mrb[0].mxu0 %v554
    %v1689 = vpop.f32.mrb[0].mxu0
    %v1690 = vadd.f32 %v1435, %v1689
    %v1691 = vpop.f32.mrb[0].mxu0
    %1692 = vmatprep.mubr.f32.mxu0 %v570
    %1693 = vmatmul.mubr.f32.gmra.mrb[0].mxu0 %v569
    %v1694 = vpop.f32.mrb[0].mxu0
    %v1695 = vadd.f32 %v1440, %v1694
    %v1696 = vpop.f32.mrb[0].mxu0
    %1697 = vmatprep.mubr.f32.mxu0 %v585
    %1698 = vmatmul.mubr.f32.gmra.mrb[0].mxu0 %v584
    %v1699 = vpop.f32.mrb[0].mxu0
    %v1700 = vadd.f32 %v1445, %v1699
    %v1701 = vpop.f32.mrb[0].mxu0
    %1702 = vdwg.mxu0
    %1703 = vmatprep.subr.mxu0 0.0
    %1704 = vmatpush1.msra.mxu0 %v691
    %1705 = vmatprep.subr.mxu0 0.0
    %1706 = vmatpush1.msra.mxu0 %v692
    %1707 = vmatprep.subr.mxu0 0.0
    %1708 = vmatpush1.msra.mxu0 %v693
    %1709 = vmatprep.subr.mxu0 0.0
    %1710 = vmatpush1.msra.mxu0 %v694
    %1711 = vmatprep.subr.mxu0 0.0
    %1712 = vmatpush1.msra.mxu0 %v695
    %1713 = vmatprep.subr.mxu0 0.0
    %1714 = vmatpush1.msra.mxu0 %v696
    %1715 = vmatprep.subr.mxu0 0.0
    %1716 = vmatpush1.msra.mxu0 %v697
    %1717 = vmatprep.subr.mxu0 0.0
    %1718 = vmatpush1.msra.mxu0 %v698
    %1719 = vmatprep.subr.mxu0 0.0
    %1720 = vmatpush1.msra.mxu0 %v699
    %1721 = vmatprep.subr.mxu0 0.0
    %1722 = vmatpush1.msra.mxu0 %v700
    %1723 = vmatprep.subr.mxu0 0.0
    %1724 = vmatpush1.msra.mxu0 %v701
    %1725 = vmatprep.subr.mxu0 0.0
    %1726 = vmatpush1.msra.mxu0 %v702
    %1727 = vmatprep.subr.mxu0 0.0
    %1728 = vmatpush1.msra.mxu0 %v703
    %1729 = vmatprep.subr.mxu0 0.0
    %1730 = vmatpush1.msra.mxu0 %v704
    %1731 = vmatprep.subr.mxu0 0.0
    %1732 = vmatpush1.msra.mxu0 %v705
    %1733 = vmatprep.subr.mxu0 0.0
    %1734 = vmatpush1.msra.mxu0 %v706
    %1735 = vmatprep.subr.mxu0 0.0
    %1736 = vmatpush1.msra.mxu0 %v707
    %1737 = vmatprep.subr.mxu0 0.0
    %1738 = vmatpush1.msra.mxu0 %v708
    %1739 = vmatprep.subr.mxu0 0.0
    %1740 = vmatpush1.msra.mxu0 %v709
    %1741 = vmatprep.subr.mxu0 0.0
    %1742 = vmatpush1.msra.mxu0 %v710
    %1743 = vmatprep.subr.mxu0 0.0
    %1744 = vmatpush1.msra.mxu0 %v711
    %1745 = vmatprep.subr.mxu0 0.0
    %1746 = vmatpush1.msra.mxu0 %v712
    %1747 = vmatprep.subr.mxu0 0.0
    %1748 = vmatpush1.msra.mxu0 %v713
    %1749 = vmatprep.subr.mxu0 0.0
    %1750 = vmatpush1.msra.mxu0 %v714
    %1751 = vmatprep.subr.mxu0 0.0
    %1752 = vmatpush1.msra.mxu0 %v715
    %1753 = vmatprep.subr.mxu0 0.0
    %1754 = vmatpush1.msra.mxu0 %v716
    %1755 = vmatprep.subr.mxu0 0.0
    %1756 = vmatpush1.msra.mxu0 %v717
    %1757 = vmatprep.subr.mxu0 0.0
    %1758 = vmatpush1.msra.mxu0 %v718
    %1759 = vmatprep.subr.mxu0 0.0
    %1760 = vmatpush1.msra.mxu0 %v719
    %1761 = vmatprep.subr.mxu0 0.0
    %1762 = vmatpush1.msra.mxu0 %v720
    %1763 = vmatprep.subr.mxu0 0.0
    %1764 = vmatpush1.msra.mxu0 %v721
    %1765 = vmatprep.subr.mxu0 0.0
    %1766 = vmatpush1.msra.mxu0 %v722
    %1767 = vmatprep.mubr.f32.mxu0 %v32
    %1768 = vmatmul.mubr.f32.gmra.mrb[0].mxu0 %v31
    %v1769 = vpop.f32.mrb[0].mxu0
    %v1770 = vadd.f32 %v1515, %v1769
    %v1771 = vpop.f32.mrb[0].mxu0
    %1772 = vmatprep.mubr.f32.mxu0 %v47
    %1773 = vmatmul.mubr.f32.gmra.mrb[0].mxu0 %v46
    %v1774 = vpop.f32.mrb[0].mxu0
    %v1775 = vadd.f32 %v1520, %v1774
    %v1776 = vpop.f32.mrb[0].mxu0
    %1777 = vmatprep.mubr.f32.mxu0 %v62
    %1778 = vmatmul.mubr.f32.gmra.mrb[0].mxu0 %v61
    %v1779 = vpop.f32.mrb[0].mxu0
    %v1780 = vadd.f32 %v1525, %v1779
    %v1781 = vpop.f32.mrb[0].mxu0
    %1782 = vmatprep.mubr.f32.mxu0 %v77
    %1783 = vmatmul.mubr.f32.gmra.mrb[0].mxu0 %v76
    %v1784 = vpop.f32.mrb[0].mxu0
    %v1785 = vadd.f32 %v1530, %v1784
    %v1786 = vpop.f32.mrb[0].mxu0
    %1787 = vmatprep.mubr.f32.mxu0 %v92
    %1788 = vmatmul.mubr.f32.gmra.mrb[0].mxu0 %v91
    %v1789 = vpop.f32.mrb[0].mxu0
    %v1790 = vadd.f32 %v1535, %v1789
    %v1791 = vpop.f32.mrb[0].mxu0
    %1792 = vmatprep.mubr.f32.mxu0 %v107
    %1793 = vmatmul.mubr.f32.gmra.mrb[0].mxu0 %v106
    %v1794 = vpop.f32.mrb[0].mxu0
    %v1795 = vadd.f32 %v1540, %v1794
    %v1796 = vpop.f32.mrb[0].mxu0
    %1797 = vmatprep.mubr.f32.mxu0 %v122
    %1798 = vmatmul.mubr.f32.gmra.mrb[0].mxu0 %v121
    %v1799 = vpop.f32.mrb[0].mxu0
    %v1800 = vadd.f32 %v1545, %v1799
    %v1801 = vpop.f32.mrb[0].mxu0
    %1802 = vmatprep.mubr.f32.mxu0 %v137
    %1803 = vmatmul.mubr.f32.gmra.mrb[0].mxu0 %v136
    %v1804 = vpop.f32.mrb[0].mxu0
    %v1805 = vadd.f32 %v1550, %v1804
    %v1806 = vpop.f32.mrb[0].mxu0
    %1807 = vmatprep.mubr.f32.mxu0 %v152
    %1808 = vmatmul.mubr.f32.gmra.mrb[0].mxu0 %v151
    %v1809 = vpop.f32.mrb[0].mxu0
    %v1810 = vadd.f32 %v1555, %v1809
    %v1811 = vpop.f32.mrb[0].mxu0
    %1812 = vmatprep.mubr.f32.mxu0 %v167
    %1813 = vmatmul.mubr.f32.gmra.mrb[0].mxu0 %v166
    %v1814 = vpop.f32.mrb[0].mxu0
    %v1815 = vadd.f32 %v1560, %v1814
    %v1816 = vpop.f32.mrb[0].mxu0
    %1817 = vmatprep.mubr.f32.mxu0 %v182
    %1818 = vmatmul.mubr.f32.gmra.mrb[0].mxu0 %v181
    %v1819 = vpop.f32.mrb[0].mxu0
    %v1820 = vadd.f32 %v1565, %v1819
    %v1821 = vpop.f32.mrb[0].mxu0
    %1822 = vmatprep.mubr.f32.mxu0 %v197
    %1823 = vmatmul.mubr.f32.gmra.mrb[0].mxu0 %v196
    %v1824 = vpop.f32.mrb[0].mxu0
    %v1825 = vadd.f32 %v1570, %v1824
    %v1826 = vpop.f32.mrb[0].mxu0
    %1827 = vmatprep.mubr.f32.mxu0 %v212
    %1828 = vmatmul.mubr.f32.gmra.mrb[0].mxu0 %v211
    %v1829 = vpop.f32.mrb[0].mxu0
    %v1830 = vadd.f32 %v1575, %v1829
    %v1831 = vpop.f32.mrb[0].mxu0
    %1832 = vmatprep.mubr.f32.mxu0 %v227
    %1833 = vmatmul.mubr.f32.gmra.mrb[0].mxu0 %v226
    %v1834 = vpop.f32.mrb[0].mxu0
    %v1835 = vadd.f32 %v1580, %v1834
    %v1836 = vpop.f32.mrb[0].mxu0
    %1837 = vmatprep.mubr.f32.mxu0 %v242
    %1838 = vmatmul.mubr.f32.gmra.mrb[0].mxu0 %v241
    %v1839 = vpop.f32.mrb[0].mxu0
    %v1840 = vadd.f32 %v1585, %v1839
    %v1841 = vpop.f32.mrb[0].mxu0
    %1842 = vmatprep.mubr.f32.mxu0 %v257
    %1843 = vmatmul.mubr.f32.gmra.mrb[0].mxu0 %v256
    %v1844 = vpop.f32.mrb[0].mxu0
    %v1845 = vadd.f32 %v1590, %v1844
    %v1846 = vpop.f32.mrb[0].mxu0
    %1847 = vmatprep.mubr.f32.mxu0 %v272
    %1848 = vmatmul.mubr.f32.gmra.mrb[0].mxu0 %v271
    %v1849 = vpop.f32.mrb[0].mxu0
    %v1850 = vadd.f32 %v1595, %v1849
    %v1851 = vpop.f32.mrb[0].mxu0
    %1852 = vmatprep.mubr.f32.mxu0 %v287
    %1853 = vmatmul.mubr.f32.gmra.mrb[0].mxu0 %v286
    %v1854 = vpop.f32.mrb[0].mxu0
    %v1855 = vadd.f32 %v1600, %v1854
    %v1856 = vpop.f32.mrb[0].mxu0
    %1857 = vmatprep.mubr.f32.mxu0 %v302
    %1858 = vmatmul.mubr.f32.gmra.mrb[0].mxu0 %v301
    %v1859 = vpop.f32.mrb[0].mxu0
    %v1860 = vadd.f32 %v1605, %v1859
    %v1861 = vpop.f32.mrb[0].mxu0
    %1862 = vmatprep.mubr.f32.mxu0 %v317
    %1863 = vmatmul.mubr.f32.gmra.mrb[0].mxu0 %v316
    %v1864 = vpop.f32.mrb[0].mxu0
    %v1865 = vadd.f32 %v1610, %v1864
    %v1866 = vpop.f32.mrb[0].mxu0
    %1867 = vmatprep.mubr.f32.mxu0 %v332
    %1868 = vmatmul.mubr.f32.gmra.mrb[0].mxu0 %v331
    %v1869 = vpop.f32.mrb[0].mxu0
    %v1870 = vadd.f32 %v1615, %v1869
    %v1871 = vpop.f32.mrb[0].mxu0
    %1872 = vmatprep.mubr.f32.mxu0 %v347
    %1873 = vmatmul.mubr.f32.gmra.mrb[0].mxu0 %v346
    %v1874 = vpop.f32.mrb[0].mxu0
    %v1875 = vadd.f32 %v1620, %v1874
    %v1876 = vpop.f32.mrb[0].mxu0
    %1877 = vmatprep.mubr.f32.mxu0 %v362
    %1878 = vmatmul.mubr.f32.gmra.mrb[0].mxu0 %v361
    %v1879 = vpop.f32.mrb[0].mxu0
    %v1880 = vadd.f32 %v1625, %v1879
    %v1881 = vpop.f32.mrb[0].mxu0
    %1882 = vmatprep.mubr.f32.mxu0 %v377
    %1883 = vmatmul.mubr.f32.gmra.mrb[0].mxu0 %v376
    %v1884 = vpop.f32.mrb[0].mxu0
    %v1885 = vadd.f32 %v1630, %v1884
    %v1886 = vpop.f32.mrb[0].mxu0
    %1887 = vmatprep.mubr.f32.mxu0 %v392
    %1888 = vmatmul.mubr.f32.gmra.mrb[0].mxu0 %v391
    %v1889 = vpop.f32.mrb[0].mxu0
    %v1890 = vadd.f32 %v1635, %v1889
    %v1891 = vpop.f32.mrb[0].mxu0
    %1892 = vmatprep.mubr.f32.mxu0 %v407
    %1893 = vmatmul.mubr.f32.gmra.mrb[0].mxu0 %v406
    %v1894 = vpop.f32.mrb[0].mxu0
    %v1895 = vadd.f32 %v1640, %v1894
    %v1896 = vpop.f32.mrb[0].mxu0
    %1897 = vmatprep.mubr.f32.mxu0 %v422
    %1898 = vmatmul.mubr.f32.gmra.mrb[0].mxu0 %v421
    %v1899 = vpop.f32.mrb[0].mxu0
    %v1900 = vadd.f32 %v1645, %v1899
    %v1901 = vpop.f32.mrb[0].mxu0
    %1902 = vmatprep.mubr.f32.mxu0 %v437
    %1903 = vmatmul.mubr.f32.gmra.mrb[0].mxu0 %v436
    %v1904 = vpop.f32.mrb[0].mxu0
    %v1905 = vadd.f32 %v1650, %v1904
    %v1906 = vpop.f32.mrb[0].mxu0
    %1907 = vmatprep.mubr.f32.mxu0 %v452
    %1908 = vmatmul.mubr.f32.gmra.mrb[0].mxu0 %v451
    %v1909 = vpop.f32.mrb[0].mxu0
    %v1910 = vadd.f32 %v1655, %v1909
    %v1911 = vpop.f32.mrb[0].mxu0
    %1912 = vmatprep.mubr.f32.mxu0 %v467
    %1913 = vmatmul.mubr.f32.gmra.mrb[0].mxu0 %v466
    %v1914 = vpop.f32.mrb[0].mxu0
    %v1915 = vadd.f32 %v1660, %v1914
    %v1916 = vpop.f32.mrb[0].mxu0
    %1917 = vmatprep.mubr.f32.mxu0 %v482
    %1918 = vmatmul.mubr.f32.gmra.mrb[0].mxu0 %v481
    %v1919 = vpop.f32.mrb[0].mxu0
    %v1920 = vadd.f32 %v1665, %v1919
    %v1921 = vpop.f32.mrb[0].mxu0
    %1922 = vmatprep.mubr.f32.mxu0 %v497
    %1923 = vmatmul.mubr.f32.gmra.mrb[0].mxu0 %v496
    %v1924 = vpop.f32.mrb[0].mxu0
    %v1925 = vadd.f32 %v1670, %v1924
    %v1926 = vpop.f32.mrb[0].mxu0
    %1927 = vmatprep.mubr.f32.mxu0 %v512
    %1928 = vmatmul.mubr.f32.gmra.mrb[0].mxu0 %v511
    %v1929 = vpop.f32.mrb[0].mxu0
    %v1930 = vadd.f32 %v1675, %v1929
    %v1931 = vpop.f32.mrb[0].mxu0
    %1932 = vmatprep.mubr.f32.mxu0 %v527
    %1933 = vmatmul.mubr.f32.gmra.mrb[0].mxu0 %v526
    %v1934 = vpop.f32.mrb[0].mxu0
    %v1935 = vadd.f32 %v1680, %v1934
    %v1936 = vpop.f32.mrb[0].mxu0
    %1937 = vmatprep.mubr.f32.mxu0 %v542
    %1938 = vmatmul.mubr.f32.gmra.mrb[0].mxu0 %v541
    %v1939 = vpop.f32.mrb[0].mxu0
    %v1940 = vadd.f32 %v1685, %v1939
    %v1941 = vpop.f32.mrb[0].mxu0
    %1942 = vmatprep.mubr.f32.mxu0 %v557
    %1943 = vmatmul.mubr.f32.gmra.mrb[0].mxu0 %v556
    %v1944 = vpop.f32.mrb[0].mxu0
    %v1945 = vadd.f32 %v1690, %v1944
    %v1946 = vpop.f32.mrb[0].mxu0
    %1947 = vmatprep.mubr.f32.mxu0 %v572
    %1948 = vmatmul.mubr.f32.gmra.mrb[0].mxu0 %v571
    %v1949 = vpop.f32.mrb[0].mxu0
    %v1950 = vadd.f32 %v1695, %v1949
    %v1951 = vpop.f32.mrb[0].mxu0
    %1952 = vmatprep.mubr.f32.mxu0 %v587
    %1953 = vmatmul.mubr.f32.gmra.mrb[0].mxu0 %v586
    %v1954 = vpop.f32.mrb[0].mxu0
    %v1955 = vadd.f32 %v1700, %v1954
    %v1956 = vpop.f32.mrb[0].mxu0
    %1957 = vdwg.mxu0
    %1958 = vmatprep.subr.mxu0 0.0
    %1959 = vmatpush1.msra.mxu0 %v723
    %1960 = vmatprep.subr.mxu0 0.0
    %1961 = vmatpush1.msra.mxu0 %v724
    %1962 = vmatprep.subr.mxu0 0.0
    %1963 = vmatpush1.msra.mxu0 %v725
    %1964 = vmatprep.subr.mxu0 0.0
    %1965 = vmatpush1.msra.mxu0 %v726
    %1966 = vmatprep.subr.mxu0 0.0
    %1967 = vmatpush1.msra.mxu0 %v727
    %1968 = vmatprep.subr.mxu0 0.0
    %1969 = vmatpush1.msra.mxu0 %v728
    %1970 = vmatprep.subr.mxu0 0.0
    %1971 = vmatpush1.msra.mxu0 %v729
    %1972 = vmatprep.subr.mxu0 0.0
    %1973 = vmatpush1.msra.mxu0 %v730
    %1974 = vmatprep.subr.mxu0 0.0
    %1975 = vmatpush1.msra.mxu0 %v731
    %1976 = vmatprep.subr.mxu0 0.0
    %1977 = vmatpush1.msra.mxu0 %v732
    %1978 = vmatprep.subr.mxu0 0.0
    %1979 = vmatpush1.msra.mxu0 %v733
    %1980 = vmatprep.subr.mxu0 0.0
    %1981 = vmatpush1.msra.mxu0 %v734
    %1982 = vmatprep.subr.mxu0 0.0
    %1983 = vmatpush1.msra.mxu0 %v735
    %1984 = vmatprep.subr.mxu0 0.0
    %1985 = vmatpush1.msra.mxu0 %v736
    %1986 = vmatprep.subr.mxu0 0.0
    %1987 = vmatpush1.msra.mxu0 %v737
    %1988 = vmatprep.subr.mxu0 0.0
    %1989 = vmatpush1.msra.mxu0 %v738
    %1990 = vmatprep.subr.mxu0 0.0
    %1991 = vmatpush1.msra.mxu0 %v739
    %1992 = vmatprep.subr.mxu0 0.0
    %1993 = vmatpush1.msra.mxu0 %v740
    %1994 = vmatprep.subr.mxu0 0.0
    %1995 = vmatpush1.msra.mxu0 %v741
    %1996 = vmatprep.subr.mxu0 0.0
    %1997 = vmatpush1.msra.mxu0 %v742
    %1998 = vmatprep.subr.mxu0 0.0
    %1999 = vmatpush1.msra.mxu0 %v743
    %2000 = vmatprep.subr.mxu0 0.0
    %2001 = vmatpush1.msra.mxu0 %v744
    %2002 = vmatprep.subr.mxu0 0.0
    %2003 = vmatpush1.msra.mxu0 %v745
    %2004 = vmatprep.subr.mxu0 0.0
    %2005 = vmatpush1.msra.mxu0 %v746
    %2006 = vmatprep.subr.mxu0 0.0
    %2007 = vmatpush1.msra.mxu0 %v747
    %2008 = vmatprep.subr.mxu0 0.0
    %2009 = vmatpush1.msra.mxu0 %v748
    %2010 = vmatprep.subr.mxu0 0.0
    %2011 = vmatpush1.msra.mxu0 %v749
    %2012 = vmatprep.subr.mxu0 0.0
    %2013 = vmatpush1.msra.mxu0 %v750
    %2014 = vmatprep.subr.mxu0 0.0
    %2015 = vmatpush1.msra.mxu0 %v751
    %2016 = vmatprep.subr.mxu0 0.0
    %2017 = vmatpush1.msra.mxu0 %v752
    %2018 = vmatprep.subr.mxu0 0.0
    %2019 = vmatpush1.msra.mxu0 %v753
    %2020 = vmatprep.subr.mxu0 0.0
    %2021 = vmatpush1.msra.mxu0 %v754
    %2022 = vmatprep.mubr.f32.mxu0 %v34
    %2023 = vmatmul.mubr.f32.gmra.mrb[0].mxu0 %v33
    %v2024 = vpop.f32.mrb[0].mxu0
    %v2025 = vadd.f32 %v1770, %v2024
    %v2026 = vpop.f32.mrb[0].mxu0
    %2027 = vmatprep.mubr.f32.mxu0 %v49
    %2028 = vmatmul.mubr.f32.gmra.mrb[0].mxu0 %v48
    %v2029 = vpop.f32.mrb[0].mxu0
    %v2030 = vadd.f32 %v1775, %v2029
    %v2031 = vpop.f32.mrb[0].mxu0
    %2032 = vmatprep.mubr.f32.mxu0 %v64
    %2033 = vmatmul.mubr.f32.gmra.mrb[0].mxu0 %v63
    %v2034 = vpop.f32.mrb[0].mxu0
    %v2035 = vadd.f32 %v1780, %v2034
    %v2036 = vpop.f32.mrb[0].mxu0
    %2037 = vmatprep.mubr.f32.mxu0 %v79
    %2038 = vmatmul.mubr.f32.gmra.mrb[0].mxu0 %v78
    %v2039 = vpop.f32.mrb[0].mxu0
    %v2040 = vadd.f32 %v1785, %v2039
    %v2041 = vpop.f32.mrb[0].mxu0
    %2042 = vmatprep.mubr.f32.mxu0 %v94
    %2043 = vmatmul.mubr.f32.gmra.mrb[0].mxu0 %v93
    %v2044 = vpop.f32.mrb[0].mxu0
    %v2045 = vadd.f32 %v1790, %v2044
    %v2046 = vpop.f32.mrb[0].mxu0
    %2047 = vmatprep.mubr.f32.mxu0 %v109
    %2048 = vmatmul.mubr.f32.gmra.mrb[0].mxu0 %v108
    %v2049 = vpop.f32.mrb[0].mxu0
    %v2050 = vadd.f32 %v1795, %v2049
    %v2051 = vpop.f32.mrb[0].mxu0
    %2052 = vmatprep.mubr.f32.mxu0 %v124
    %2053 = vmatmul.mubr.f32.gmra.mrb[0].mxu0 %v123
    %v2054 = vpop.f32.mrb[0].mxu0
    %v2055 = vadd.f32 %v1800, %v2054
    %v2056 = vpop.f32.mrb[0].mxu0
    %2057 = vmatprep.mubr.f32.mxu0 %v139
    %2058 = vmatmul.mubr.f32.gmra.mrb[0].mxu0 %v138
    %v2059 = vpop.f32.mrb[0].mxu0
    %v2060 = vadd.f32 %v1805, %v2059
    %v2061 = vpop.f32.mrb[0].mxu0
    %2062 = vmatprep.mubr.f32.mxu0 %v154
    %2063 = vmatmul.mubr.f32.gmra.mrb[0].mxu0 %v153
    %v2064 = vpop.f32.mrb[0].mxu0
    %v2065 = vadd.f32 %v1810, %v2064
    %v2066 = vpop.f32.mrb[0].mxu0
    %2067 = vmatprep.mubr.f32.mxu0 %v169
    %2068 = vmatmul.mubr.f32.gmra.mrb[0].mxu0 %v168
    %v2069 = vpop.f32.mrb[0].mxu0
    %v2070 = vadd.f32 %v1815, %v2069
    %v2071 = vpop.f32.mrb[0].mxu0
    %2072 = vmatprep.mubr.f32.mxu0 %v184
    %2073 = vmatmul.mubr.f32.gmra.mrb[0].mxu0 %v183
    %v2074 = vpop.f32.mrb[0].mxu0
    %v2075 = vadd.f32 %v1820, %v2074
    %v2076 = vpop.f32.mrb[0].mxu0
    %2077 = vmatprep.mubr.f32.mxu0 %v199
    %2078 = vmatmul.mubr.f32.gmra.mrb[0].mxu0 %v198
    %v2079 = vpop.f32.mrb[0].mxu0
    %v2080 = vadd.f32 %v1825, %v2079
    %v2081 = vpop.f32.mrb[0].mxu0
    %2082 = vmatprep.mubr.f32.mxu0 %v214
    %2083 = vmatmul.mubr.f32.gmra.mrb[0].mxu0 %v213
    %v2084 = vpop.f32.mrb[0].mxu0
    %v2085 = vadd.f32 %v1830, %v2084
    %v2086 = vpop.f32.mrb[0].mxu0
    %2087 = vmatprep.mubr.f32.mxu0 %v229
    %2088 = vmatmul.mubr.f32.gmra.mrb[0].mxu0 %v228
    %v2089 = vpop.f32.mrb[0].mxu0
    %v2090 = vadd.f32 %v1835, %v2089
    %v2091 = vpop.f32.mrb[0].mxu0
    %2092 = vmatprep.mubr.f32.mxu0 %v244
    %2093 = vmatmul.mubr.f32.gmra.mrb[0].mxu0 %v243
    %v2094 = vpop.f32.mrb[0].mxu0
    %v2095 = vadd.f32 %v1840, %v2094
    %v2096 = vpop.f32.mrb[0].mxu0
    %2097 = vmatprep.mubr.f32.mxu0 %v259
    %2098 = vmatmul.mubr.f32.gmra.mrb[0].mxu0 %v258
    %v2099 = vpop.f32.mrb[0].mxu0
    %v2100 = vadd.f32 %v1845, %v2099
    %v2101 = vpop.f32.mrb[0].mxu0
    %2102 = vmatprep.mubr.f32.mxu0 %v274
    %2103 = vmatmul.mubr.f32.gmra.mrb[0].mxu0 %v273
    %v2104 = vpop.f32.mrb[0].mxu0
    %v2105 = vadd.f32 %v1850, %v2104
    %v2106 = vpop.f32.mrb[0].mxu0
    %2107 = vmatprep.mubr.f32.mxu0 %v289
    %2108 = vmatmul.mubr.f32.gmra.mrb[0].mxu0 %v288
    %v2109 = vpop.f32.mrb[0].mxu0
    %v2110 = vadd.f32 %v1855, %v2109
    %v2111 = vpop.f32.mrb[0].mxu0
    %2112 = vmatprep.mubr.f32.mxu0 %v304
    %2113 = vmatmul.mubr.f32.gmra.mrb[0].mxu0 %v303
    %v2114 = vpop.f32.mrb[0].mxu0
    %v2115 = vadd.f32 %v1860, %v2114
    %v2116 = vpop.f32.mrb[0].mxu0
    %2117 = vmatprep.mubr.f32.mxu0 %v319
    %2118 = vmatmul.mubr.f32.gmra.mrb[0].mxu0 %v318
    %v2119 = vpop.f32.mrb[0].mxu0
    %v2120 = vadd.f32 %v1865, %v2119
    %v2121 = vpop.f32.mrb[0].mxu0
    %2122 = vmatprep.mubr.f32.mxu0 %v334
    %2123 = vmatmul.mubr.f32.gmra.mrb[0].mxu0 %v333
    %v2124 = vpop.f32.mrb[0].mxu0
    %v2125 = vadd.f32 %v1870, %v2124
    %v2126 = vpop.f32.mrb[0].mxu0
    %2127 = vmatprep.mubr.f32.mxu0 %v349
    %2128 = vmatmul.mubr.f32.gmra.mrb[0].mxu0 %v348
    %v2129 = vpop.f32.mrb[0].mxu0
    %v2130 = vadd.f32 %v1875, %v2129
    %v2131 = vpop.f32.mrb[0].mxu0
    %2132 = vmatprep.mubr.f32.mxu0 %v364
    %2133 = vmatmul.mubr.f32.gmra.mrb[0].mxu0 %v363
    %v2134 = vpop.f32.mrb[0].mxu0
    %v2135 = vadd.f32 %v1880, %v2134
    %v2136 = vpop.f32.mrb[0].mxu0
    %2137 = vmatprep.mubr.f32.mxu0 %v379
    %2138 = vmatmul.mubr.f32.gmra.mrb[0].mxu0 %v378
    %v2139 = vpop.f32.mrb[0].mxu0
    %v2140 = vadd.f32 %v1885, %v2139
    %v2141 = vpop.f32.mrb[0].mxu0
    %2142 = vmatprep.mubr.f32.mxu0 %v394
    %2143 = vmatmul.mubr.f32.gmra.mrb[0].mxu0 %v393
    %v2144 = vpop.f32.mrb[0].mxu0
    %v2145 = vadd.f32 %v1890, %v2144
    %v2146 = vpop.f32.mrb[0].mxu0
    %2147 = vmatprep.mubr.f32.mxu0 %v409
    %2148 = vmatmul.mubr.f32.gmra.mrb[0].mxu0 %v408
    %v2149 = vpop.f32.mrb[0].mxu0
    %v2150 = vadd.f32 %v1895, %v2149
    %v2151 = vpop.f32.mrb[0].mxu0
    %2152 = vmatprep.mubr.f32.mxu0 %v424
    %2153 = vmatmul.mubr.f32.gmra.mrb[0].mxu0 %v423
    %v2154 = vpop.f32.mrb[0].mxu0
    %v2155 = vadd.f32 %v1900, %v2154
    %v2156 = vpop.f32.mrb[0].mxu0
    %2157 = vmatprep.mubr.f32.mxu0 %v439
    %2158 = vmatmul.mubr.f32.gmra.mrb[0].mxu0 %v438
    %v2159 = vpop.f32.mrb[0].mxu0
    %v2160 = vadd.f32 %v1905, %v2159
    %v2161 = vpop.f32.mrb[0].mxu0
    %2162 = vmatprep.mubr.f32.mxu0 %v454
    %2163 = vmatmul.mubr.f32.gmra.mrb[0].mxu0 %v453
    %v2164 = vpop.f32.mrb[0].mxu0
    %v2165 = vadd.f32 %v1910, %v2164
    %v2166 = vpop.f32.mrb[0].mxu0
    %2167 = vmatprep.mubr.f32.mxu0 %v469
    %2168 = vmatmul.mubr.f32.gmra.mrb[0].mxu0 %v468
    %v2169 = vpop.f32.mrb[0].mxu0
    %v2170 = vadd.f32 %v1915, %v2169
    %v2171 = vpop.f32.mrb[0].mxu0
    %2172 = vmatprep.mubr.f32.mxu0 %v484
    %2173 = vmatmul.mubr.f32.gmra.mrb[0].mxu0 %v483
    %v2174 = vpop.f32.mrb[0].mxu0
    %v2175 = vadd.f32 %v1920, %v2174
    %v2176 = vpop.f32.mrb[0].mxu0
    %2177 = vmatprep.mubr.f32.mxu0 %v499
    %2178 = vmatmul.mubr.f32.gmra.mrb[0].mxu0 %v498
    %v2179 = vpop.f32.mrb[0].mxu0
    %v2180 = vadd.f32 %v1925, %v2179
    %v2181 = vpop.f32.mrb[0].mxu0
    %2182 = vmatprep.mubr.f32.mxu0 %v514
    %2183 = vmatmul.mubr.f32.gmra.mrb[0].mxu0 %v513
    %v2184 = vpop.f32.mrb[0].mxu0
    %v2185 = vadd.f32 %v1930, %v2184
    %v2186 = vpop.f32.mrb[0].mxu0
    %2187 = vmatprep.mubr.f32.mxu0 %v529
    %2188 = vmatmul.mubr.f32.gmra.mrb[0].mxu0 %v528
    %v2189 = vpop.f32.mrb[0].mxu0
    %v2190 = vadd.f32 %v1935, %v2189
    %v2191 = vpop.f32.mrb[0].mxu0
    %2192 = vmatprep.mubr.f32.mxu0 %v544
    %2193 = vmatmul.mubr.f32.gmra.mrb[0].mxu0 %v543
    %v2194 = vpop.f32.mrb[0].mxu0
    %v2195 = vadd.f32 %v1940, %v2194
    %v2196 = vpop.f32.mrb[0].mxu0
    %2197 = vmatprep.mubr.f32.mxu0 %v559
    %2198 = vmatmul.mubr.f32.gmra.mrb[0].mxu0 %v558
    %v2199 = vpop.f32.mrb[0].mxu0
    %v2200 = vadd.f32 %v1945, %v2199
    %v2201 = vpop.f32.mrb[0].mxu0
    %2202 = vmatprep.mubr.f32.mxu0 %v574
    %2203 = vmatmul.mubr.f32.gmra.mrb[0].mxu0 %v573
    %v2204 = vpop.f32.mrb[0].mxu0
    %v2205 = vadd.f32 %v1950, %v2204
    %v2206 = vpop.f32.mrb[0].mxu0
    %2207 = vmatprep.mubr.f32.mxu0 %v589
    %2208 = vmatmul.mubr.f32.gmra.mrb[0].mxu0 %v588
    %v2209 = vpop.f32.mrb[0].mxu0
    %v2210 = vadd.f32 %v1955, %v2209
    %v2211 = vpop.f32.mrb[0].mxu0
    %2212 = vdwg.mxu0
    %2213 = vmatprep.subr.mxu0 0.0
    %2214 = vmatpush1.msra.mxu0 %v755
    %2215 = vmatprep.subr.mxu0 0.0
    %2216 = vmatpush1.msra.mxu0 %v756
    %2217 = vmatprep.subr.mxu0 0.0
    %2218 = vmatpush1.msra.mxu0 %v757
    %2219 = vmatprep.subr.mxu0 0.0
    %2220 = vmatpush1.msra.mxu0 %v758
    %2221 = vmatprep.subr.mxu0 0.0
    %2222 = vmatpush1.msra.mxu0 %v759
    %2223 = vmatprep.subr.mxu0 0.0
    %2224 = vmatpush1.msra.mxu0 %v760
    %2225 = vmatprep.subr.mxu0 0.0
    %2226 = vmatpush1.msra.mxu0 %v761
    %2227 = vmatprep.subr.mxu0 0.0
    %2228 = vmatpush1.msra.mxu0 %v762
    %2229 = vmatprep.subr.mxu0 0.0
    %2230 = vmatpush1.msra.mxu0 %v763
    %2231 = vmatprep.subr.mxu0 0.0
    %2232 = vmatpush1.msra.mxu0 %v764
    %2233 = vmatprep.subr.mxu0 0.0
    %2234 = vmatpush1.msra.mxu0 %v765
    %2235 = vmatprep.subr.mxu0 0.0
    %2236 = vmatpush1.msra.mxu0 %v766
    %2237 = vmatprep.subr.mxu0 0.0
    %2238 = vmatpush1.msra.mxu0 %v767
    %2239 = vmatprep.subr.mxu0 0.0
    %2240 = vmatpush1.msra.mxu0 %v768
    %2241 = vmatprep.subr.mxu0 0.0
    %2242 = vmatpush1.msra.mxu0 %v769
    %2243 = vmatprep.subr.mxu0 0.0
    %2244 = vmatpush1.msra.mxu0 %v770
    %2245 = vmatprep.subr.mxu0 0.0
    %2246 = vmatpush1.msra.mxu0 %v771
    %2247 = vmatprep.subr.mxu0 0.0
    %2248 = vmatpush1.msra.mxu0 %v772
    %2249 = vmatprep.subr.mxu0 0.0
    %2250 = vmatpush1.msra.mxu0 %v773
    %2251 = vmatprep.subr.mxu0 0.0
    %2252 = vmatpush1.msra.mxu0 %v774
    %2253 = vmatprep.subr.mxu0 0.0
    %2254 = vmatpush1.msra.mxu0 %v775
    %2255 = vmatprep.subr.mxu0 0.0
    %2256 = vmatpush1.msra.mxu0 %v776
    %2257 = vmatprep.subr.mxu0 0.0
    %2258 = vmatpush1.msra.mxu0 %v777
    %2259 = vmatprep.subr.mxu0 0.0
    %2260 = vmatpush1.msra.mxu0 %v778
    %2261 = vmatprep.subr.mxu0 0.0
    %2262 = vmatpush1.msra.mxu0 %v779
    %2263 = vmatprep.subr.mxu0 0.0
    %2264 = vmatpush1.msra.mxu0 %v780
    %2265 = vmatprep.subr.mxu0 0.0
    %2266 = vmatpush1.msra.mxu0 %v781
    %2267 = vmatprep.subr.mxu0 0.0
    %2268 = vmatpush1.msra.mxu0 %v782
    %2269 = vmatprep.subr.mxu0 0.0
    %2270 = vmatpush1.msra.mxu0 %v783
    %2271 = vmatprep.subr.mxu0 0.0
    %2272 = vmatpush1.msra.mxu0 %v784
    %2273 = vmatprep.subr.mxu0 0.0
    %2274 = vmatpush1.msra.mxu0 %v785
    %2275 = vmatprep.subr.mxu0 0.0
    %2276 = vmatpush1.msra.mxu0 %v786
    %2277 = vmatprep.mubr.f32.mxu0 %v36
    %2278 = vmatmul.mubr.f32.gmra.mrb[0].mxu0 %v35
    %v2279 = vpop.f32.mrb[0].mxu0
    %v2280 = vadd.f32 %v2025, %v2279
    %v2281 = vpop.f32.mrb[0].mxu0
    %2282 = vmatprep.mubr.f32.mxu0 %v51
    %2283 = vmatmul.mubr.f32.gmra.mrb[0].mxu0 %v50
    %v2284 = vpop.f32.mrb[0].mxu0
    %v2285 = vadd.f32 %v2030, %v2284
    %v2286 = vpop.f32.mrb[0].mxu0
    %2287 = vmatprep.mubr.f32.mxu0 %v66
    %2288 = vmatmul.mubr.f32.gmra.mrb[0].mxu0 %v65
    %v2289 = vpop.f32.mrb[0].mxu0
    %v2290 = vadd.f32 %v2035, %v2289
    %v2291 = vpop.f32.mrb[0].mxu0
    %2292 = vmatprep.mubr.f32.mxu0 %v81
    %2293 = vmatmul.mubr.f32.gmra.mrb[0].mxu0 %v80
    %v2294 = vpop.f32.mrb[0].mxu0
    %v2295 = vadd.f32 %v2040, %v2294
    %v2296 = vpop.f32.mrb[0].mxu0
    %2297 = vmatprep.mubr.f32.mxu0 %v96
    %2298 = vmatmul.mubr.f32.gmra.mrb[0].mxu0 %v95
    %v2299 = vpop.f32.mrb[0].mxu0
    %v2300 = vadd.f32 %v2045, %v2299
    %v2301 = vpop.f32.mrb[0].mxu0
    %2302 = vmatprep.mubr.f32.mxu0 %v111
    %2303 = vmatmul.mubr.f32.gmra.mrb[0].mxu0 %v110
    %v2304 = vpop.f32.mrb[0].mxu0
    %v2305 = vadd.f32 %v2050, %v2304
    %v2306 = vpop.f32.mrb[0].mxu0
    %2307 = vmatprep.mubr.f32.mxu0 %v126
    %2308 = vmatmul.mubr.f32.gmra.mrb[0].mxu0 %v125
    %v2309 = vpop.f32.mrb[0].mxu0
    %v2310 = vadd.f32 %v2055, %v2309
    %v2311 = vpop.f32.mrb[0].mxu0
    %2312 = vmatprep.mubr.f32.mxu0 %v141
    %2313 = vmatmul.mubr.f32.gmra.mrb[0].mxu0 %v140
    %v2314 = vpop.f32.mrb[0].mxu0
    %v2315 = vadd.f32 %v2060, %v2314
    %v2316 = vpop.f32.mrb[0].mxu0
    %2317 = vmatprep.mubr.f32.mxu0 %v156
    %2318 = vmatmul.mubr.f32.gmra.mrb[0].mxu0 %v155
    %v2319 = vpop.f32.mrb[0].mxu0
    %v2320 = vadd.f32 %v2065, %v2319
    %v2321 = vpop.f32.mrb[0].mxu0
    %2322 = vmatprep.mubr.f32.mxu0 %v171
    %2323 = vmatmul.mubr.f32.gmra.mrb[0].mxu0 %v170
    %v2324 = vpop.f32.mrb[0].mxu0
    %v2325 = vadd.f32 %v2070, %v2324
    %v2326 = vpop.f32.mrb[0].mxu0
    %2327 = vmatprep.mubr.f32.mxu0 %v186
    %2328 = vmatmul.mubr.f32.gmra.mrb[0].mxu0 %v185
    %v2329 = vpop.f32.mrb[0].mxu0
    %v2330 = vadd.f32 %v2075, %v2329
    %v2331 = vpop.f32.mrb[0].mxu0
    %2332 = vmatprep.mubr.f32.mxu0 %v201
    %2333 = vmatmul.mubr.f32.gmra.mrb[0].mxu0 %v200
    %v2334 = vpop.f32.mrb[0].mxu0
    %v2335 = vadd.f32 %v2080, %v2334
    %v2336 = vpop.f32.mrb[0].mxu0
    %2337 = vmatprep.mubr.f32.mxu0 %v216
    %2338 = vmatmul.mubr.f32.gmra.mrb[0].mxu0 %v215
    %v2339 = vpop.f32.mrb[0].mxu0
    %v2340 = vadd.f32 %v2085, %v2339
    %v2341 = vpop.f32.mrb[0].mxu0
    %2342 = vmatprep.mubr.f32.mxu0 %v231
    %2343 = vmatmul.mubr.f32.gmra.mrb[0].mxu0 %v230
    %v2344 = vpop.f32.mrb[0].mxu0
    %v2345 = vadd.f32 %v2090, %v2344
    %v2346 = vpop.f32.mrb[0].mxu0
    %2347 = vmatprep.mubr.f32.mxu0 %v246
    %2348 = vmatmul.mubr.f32.gmra.mrb[0].mxu0 %v245
    %v2349 = vpop.f32.mrb[0].mxu0
    %v2350 = vadd.f32 %v2095, %v2349
    %v2351 = vpop.f32.mrb[0].mxu0
    %2352 = vmatprep.mubr.f32.mxu0 %v261
    %2353 = vmatmul.mubr.f32.gmra.mrb[0].mxu0 %v260
    %v2354 = vpop.f32.mrb[0].mxu0
    %v2355 = vadd.f32 %v2100, %v2354
    %v2356 = vpop.f32.mrb[0].mxu0
    %2357 = vmatprep.mubr.f32.mxu0 %v276
    %2358 = vmatmul.mubr.f32.gmra.mrb[0].mxu0 %v275
    %v2359 = vpop.f32.mrb[0].mxu0
    %v2360 = vadd.f32 %v2105, %v2359
    %v2361 = vpop.f32.mrb[0].mxu0
    %2362 = vmatprep.mubr.f32.mxu0 %v291
    %2363 = vmatmul.mubr.f32.gmra.mrb[0].mxu0 %v290
    %v2364 = vpop.f32.mrb[0].mxu0
    %v2365 = vadd.f32 %v2110, %v2364
    %v2366 = vpop.f32.mrb[0].mxu0
    %2367 = vmatprep.mubr.f32.mxu0 %v306
    %2368 = vmatmul.mubr.f32.gmra.mrb[0].mxu0 %v305
    %v2369 = vpop.f32.mrb[0].mxu0
    %v2370 = vadd.f32 %v2115, %v2369
    %v2371 = vpop.f32.mrb[0].mxu0
    %2372 = vmatprep.mubr.f32.mxu0 %v321
    %2373 = vmatmul.mubr.f32.gmra.mrb[0].mxu0 %v320
    %v2374 = vpop.f32.mrb[0].mxu0
    %v2375 = vadd.f32 %v2120, %v2374
    %v2376 = vpop.f32.mrb[0].mxu0
    %2377 = vmatprep.mubr.f32.mxu0 %v336
    %2378 = vmatmul.mubr.f32.gmra.mrb[0].mxu0 %v335
    %v2379 = vpop.f32.mrb[0].mxu0
    %v2380 = vadd.f32 %v2125, %v2379
    %v2381 = vpop.f32.mrb[0].mxu0
    %2382 = vmatprep.mubr.f32.mxu0 %v351
    %2383 = vmatmul.mubr.f32.gmra.mrb[0].mxu0 %v350
    %v2384 = vpop.f32.mrb[0].mxu0
    %v2385 = vadd.f32 %v2130, %v2384
    %v2386 = vpop.f32.mrb[0].mxu0
    %2387 = vmatprep.mubr.f32.mxu0 %v366
    %2388 = vmatmul.mubr.f32.gmra.mrb[0].mxu0 %v365
    %v2389 = vpop.f32.mrb[0].mxu0
    %v2390 = vadd.f32 %v2135, %v2389
    %v2391 = vpop.f32.mrb[0].mxu0
    %2392 = vmatprep.mubr.f32.mxu0 %v381
    %2393 = vmatmul.mubr.f32.gmra.mrb[0].mxu0 %v380
    %v2394 = vpop.f32.mrb[0].mxu0
    %v2395 = vadd.f32 %v2140, %v2394
    %v2396 = vpop.f32.mrb[0].mxu0
    %2397 = vmatprep.mubr.f32.mxu0 %v396
    %2398 = vmatmul.mubr.f32.gmra.mrb[0].mxu0 %v395
    %v2399 = vpop.f32.mrb[0].mxu0
    %v2400 = vadd.f32 %v2145, %v2399
    %v2401 = vpop.f32.mrb[0].mxu0
    %2402 = vmatprep.mubr.f32.mxu0 %v411
    %2403 = vmatmul.mubr.f32.gmra.mrb[0].mxu0 %v410
    %v2404 = vpop.f32.mrb[0].mxu0
    %v2405 = vadd.f32 %v2150, %v2404
    %v2406 = vpop.f32.mrb[0].mxu0
    %2407 = vmatprep.mubr.f32.mxu0 %v426
    %2408 = vmatmul.mubr.f32.gmra.mrb[0].mxu0 %v425
    %v2409 = vpop.f32.mrb[0].mxu0
    %v2410 = vadd.f32 %v2155, %v2409
    %v2411 = vpop.f32.mrb[0].mxu0
    %2412 = vmatprep.mubr.f32.mxu0 %v441
    %2413 = vmatmul.mubr.f32.gmra.mrb[0].mxu0 %v440
    %v2414 = vpop.f32.mrb[0].mxu0
    %v2415 = vadd.f32 %v2160, %v2414
    %v2416 = vpop.f32.mrb[0].mxu0
    %2417 = vmatprep.mubr.f32.mxu0 %v456
    %2418 = vmatmul.mubr.f32.gmra.mrb[0].mxu0 %v455
    %v2419 = vpop.f32.mrb[0].mxu0
    %v2420 = vadd.f32 %v2165, %v2419
    %v2421 = vpop.f32.mrb[0].mxu0
    %2422 = vmatprep.mubr.f32.mxu0 %v471
    %2423 = vmatmul.mubr.f32.gmra.mrb[0].mxu0 %v470
    %v2424 = vpop.f32.mrb[0].mxu0
    %v2425 = vadd.f32 %v2170, %v2424
    %v2426 = vpop.f32.mrb[0].mxu0
    %2427 = vmatprep.mubr.f32.mxu0 %v486
    %2428 = vmatmul.mubr.f32.gmra.mrb[0].mxu0 %v485
    %v2429 = vpop.f32.mrb[0].mxu0
    %v2430 = vadd.f32 %v2175, %v2429
    %v2431 = vpop.f32.mrb[0].mxu0
    %2432 = vmatprep.mubr.f32.mxu0 %v501
    %2433 = vmatmul.mubr.f32.gmra.mrb[0].mxu0 %v500
    %v2434 = vpop.f32.mrb[0].mxu0
    %v2435 = vadd.f32 %v2180, %v2434
    %v2436 = vpop.f32.mrb[0].mxu0
    %2437 = vmatprep.mubr.f32.mxu0 %v516
    %2438 = vmatmul.mubr.f32.gmra.mrb[0].mxu0 %v515
    %v2439 = vpop.f32.mrb[0].mxu0
    %v2440 = vadd.f32 %v2185, %v2439
    %v2441 = vpop.f32.mrb[0].mxu0
    %2442 = vmatprep.mubr.f32.mxu0 %v531
    %2443 = vmatmul.mubr.f32.gmra.mrb[0].mxu0 %v530
    %v2444 = vpop.f32.mrb[0].mxu0
    %v2445 = vadd.f32 %v2190, %v2444
    %v2446 = vpop.f32.mrb[0].mxu0
    %2447 = vmatprep.mubr.f32.mxu0 %v546
    %2448 = vmatmul.mubr.f32.gmra.mrb[0].mxu0 %v545
    %v2449 = vpop.f32.mrb[0].mxu0
    %v2450 = vadd.f32 %v2195, %v2449
    %v2451 = vpop.f32.mrb[0].mxu0
    %2452 = vmatprep.mubr.f32.mxu0 %v561
    %2453 = vmatmul.mubr.f32.gmra.mrb[0].mxu0 %v560
    %v2454 = vpop.f32.mrb[0].mxu0
    %v2455 = vadd.f32 %v2200, %v2454
    %v2456 = vpop.f32.mrb[0].mxu0
    %2457 = vmatprep.mubr.f32.mxu0 %v576
    %2458 = vmatmul.mubr.f32.gmra.mrb[0].mxu0 %v575
    %v2459 = vpop.f32.mrb[0].mxu0
    %v2460 = vadd.f32 %v2205, %v2459
    %v2461 = vpop.f32.mrb[0].mxu0
    %2462 = vmatprep.mubr.f32.mxu0 %v591
    %2463 = vmatmul.mubr.f32.gmra.mrb[0].mxu0 %v590
    %v2464 = vpop.f32.mrb[0].mxu0
    %v2465 = vadd.f32 %v2210, %v2464
    %v2466 = vpop.f32.mrb[0].mxu0
    %2467 = vdwg.mxu0
    %2468 = vmatprep.subr.mxu0 0.0
    %2469 = vmatpush1.msra.mxu0 %v787
    %2470 = vmatprep.subr.mxu0 0.0
    %2471 = vmatpush1.msra.mxu0 %v788
    %2472 = vmatprep.subr.mxu0 0.0
    %2473 = vmatpush1.msra.mxu0 %v789
    %2474 = vmatprep.subr.mxu0 0.0
    %2475 = vmatpush1.msra.mxu0 %v790
    %2476 = vmatprep.subr.mxu0 0.0
    %2477 = vmatpush1.msra.mxu0 %v791
    %2478 = vmatprep.subr.mxu0 0.0
    %2479 = vmatpush1.msra.mxu0 %v792
    %2480 = vmatprep.subr.mxu0 0.0
    %2481 = vmatpush1.msra.mxu0 %v793
    %2482 = vmatprep.subr.mxu0 0.0
    %2483 = vmatpush1.msra.mxu0 %v794
    %2484 = vmatprep.subr.mxu0 0.0
    %2485 = vmatpush1.msra.mxu0 %v795
    %2486 = vmatprep.subr.mxu0 0.0
    %2487 = vmatpush1.msra.mxu0 %v796
    %2488 = vmatprep.subr.mxu0 0.0
    %2489 = vmatpush1.msra.mxu0 %v797
    %2490 = vmatprep.subr.mxu0 0.0
    %2491 = vmatpush1.msra.mxu0 %v798
    %2492 = vmatprep.subr.mxu0 0.0
    %2493 = vmatpush1.msra.mxu0 %v799
    %2494 = vmatprep.subr.mxu0 0.0
    %2495 = vmatpush1.msra.mxu0 %v800
    %2496 = vmatprep.subr.mxu0 0.0
    %2497 = vmatpush1.msra.mxu0 %v801
    %2498 = vmatprep.subr.mxu0 0.0
    %2499 = vmatpush1.msra.mxu0 %v802
    %2500 = vmatprep.subr.mxu0 0.0
    %2501 = vmatpush1.msra.mxu0 %v803
    %2502 = vmatprep.subr.mxu0 0.0
    %2503 = vmatpush1.msra.mxu0 %v804
    %2504 = vmatprep.subr.mxu0 0.0
    %2505 = vmatpush1.msra.mxu0 %v805
    %2506 = vmatprep.subr.mxu0 0.0
    %2507 = vmatpush1.msra.mxu0 %v806
    %2508 = vmatprep.subr.mxu0 0.0
    %2509 = vmatpush1.msra.mxu0 %v807
    %2510 = vmatprep.subr.mxu0 0.0
    %2511 = vmatpush1.msra.mxu0 %v808
    %2512 = vmatprep.subr.mxu0 0.0
    %2513 = vmatpush1.msra.mxu0 %v809
    %2514 = vmatprep.subr.mxu0 0.0
    %2515 = vmatpush1.msra.mxu0 %v810
    %2516 = vmatprep.subr.mxu0 0.0
    %2517 = vmatpush1.msra.mxu0 %v811
    %2518 = vmatprep.subr.mxu0 0.0
    %2519 = vmatpush1.msra.mxu0 %v812
    %2520 = vmatprep.subr.mxu0 0.0
    %2521 = vmatpush1.msra.mxu0 %v813
    %2522 = vmatprep.subr.mxu0 0.0
    %2523 = vmatpush1.msra.mxu0 %v814
    %2524 = vmatprep.subr.mxu0 0.0
    %2525 = vmatpush1.msra.mxu0 %v815
    %2526 = vmatprep.subr.mxu0 0.0
    %2527 = vmatpush1.msra.mxu0 %v816
    %2528 = vmatprep.subr.mxu0 0.0
    %2529 = vmatpush1.msra.mxu0 %v817
    %2530 = vmatprep.subr.mxu0 0.0
    %2531 = vmatpush1.msra.mxu0 %v818
    %2532 = vmatprep.mubr.f32.mxu0 %v38
    %2533 = vmatmul.mubr.f32.gmra.mrb[0].mxu0 %v37
    %v2534 = vpop.f32.mrb[0].mxu0
    %v2535 = vadd.f32 %v2280, %v2534
    %v2536 = vpop.f32.mrb[0].mxu0
    %2537 = vmatprep.mubr.f32.mxu0 %v53
    %2538 = vmatmul.mubr.f32.gmra.mrb[0].mxu0 %v52
    %v2539 = vpop.f32.mrb[0].mxu0
    %v2540 = vadd.f32 %v2285, %v2539
    %v2541 = vpop.f32.mrb[0].mxu0
    %2542 = vmatprep.mubr.f32.mxu0 %v68
    %2543 = vmatmul.mubr.f32.gmra.mrb[0].mxu0 %v67
    %v2544 = vpop.f32.mrb[0].mxu0
    %v2545 = vadd.f32 %v2290, %v2544
    %v2546 = vpop.f32.mrb[0].mxu0
    %2547 = vmatprep.mubr.f32.mxu0 %v83
    %2548 = vmatmul.mubr.f32.gmra.mrb[0].mxu0 %v82
    %v2549 = vpop.f32.mrb[0].mxu0
    %v2550 = vadd.f32 %v2295, %v2549
    %v2551 = vpop.f32.mrb[0].mxu0
    %2552 = vmatprep.mubr.f32.mxu0 %v98
    %2553 = vmatmul.mubr.f32.gmra.mrb[0].mxu0 %v97
    %v2554 = vpop.f32.mrb[0].mxu0
    %v2555 = vadd.f32 %v2300, %v2554
    %v2556 = vpop.f32.mrb[0].mxu0
    %2557 = vmatprep.mubr.f32.mxu0 %v113
    %2558 = vmatmul.mubr.f32.gmra.mrb[0].mxu0 %v112
    %v2559 = vpop.f32.mrb[0].mxu0
    %v2560 = vadd.f32 %v2305, %v2559
    %v2561 = vpop.f32.mrb[0].mxu0
    %2562 = vmatprep.mubr.f32.mxu0 %v128
    %2563 = vmatmul.mubr.f32.gmra.mrb[0].mxu0 %v127
    %v2564 = vpop.f32.mrb[0].mxu0
    %v2565 = vadd.f32 %v2310, %v2564
    %v2566 = vpop.f32.mrb[0].mxu0
    %2567 = vmatprep.mubr.f32.mxu0 %v143
    %2568 = vmatmul.mubr.f32.gmra.mrb[0].mxu0 %v142
    %v2569 = vpop.f32.mrb[0].mxu0
    %v2570 = vadd.f32 %v2315, %v2569
    %v2571 = vpop.f32.mrb[0].mxu0
    %2572 = vmatprep.mubr.f32.mxu0 %v158
    %2573 = vmatmul.mubr.f32.gmra.mrb[0].mxu0 %v157
    %v2574 = vpop.f32.mrb[0].mxu0
    %v2575 = vadd.f32 %v2320, %v2574
    %v2576 = vpop.f32.mrb[0].mxu0
    %2577 = vmatprep.mubr.f32.mxu0 %v173
    %2578 = vmatmul.mubr.f32.gmra.mrb[0].mxu0 %v172
    %v2579 = vpop.f32.mrb[0].mxu0
    %v2580 = vadd.f32 %v2325, %v2579
    %v2581 = vpop.f32.mrb[0].mxu0
    %2582 = vmatprep.mubr.f32.mxu0 %v188
    %2583 = vmatmul.mubr.f32.gmra.mrb[0].mxu0 %v187
    %v2584 = vpop.f32.mrb[0].mxu0
    %v2585 = vadd.f32 %v2330, %v2584
    %v2586 = vpop.f32.mrb[0].mxu0
    %2587 = vmatprep.mubr.f32.mxu0 %v203
    %2588 = vmatmul.mubr.f32.gmra.mrb[0].mxu0 %v202
    %v2589 = vpop.f32.mrb[0].mxu0
    %v2590 = vadd.f32 %v2335, %v2589
    %v2591 = vpop.f32.mrb[0].mxu0
    %2592 = vmatprep.mubr.f32.mxu0 %v218
    %2593 = vmatmul.mubr.f32.gmra.mrb[0].mxu0 %v217
    %v2594 = vpop.f32.mrb[0].mxu0
    %v2595 = vadd.f32 %v2340, %v2594
    %v2596 = vpop.f32.mrb[0].mxu0
    %2597 = vmatprep.mubr.f32.mxu0 %v233
    %2598 = vmatmul.mubr.f32.gmra.mrb[0].mxu0 %v232
    %v2599 = vpop.f32.mrb[0].mxu0
    %v2600 = vadd.f32 %v2345, %v2599
    %v2601 = vpop.f32.mrb[0].mxu0
    %2602 = vmatprep.mubr.f32.mxu0 %v248
    %2603 = vmatmul.mubr.f32.gmra.mrb[0].mxu0 %v247
    %v2604 = vpop.f32.mrb[0].mxu0
    %v2605 = vadd.f32 %v2350, %v2604
    %v2606 = vpop.f32.mrb[0].mxu0
    %2607 = vmatprep.mubr.f32.mxu0 %v263
    %2608 = vmatmul.mubr.f32.gmra.mrb[0].mxu0 %v262
    %v2609 = vpop.f32.mrb[0].mxu0
    %v2610 = vadd.f32 %v2355, %v2609
    %v2611 = vpop.f32.mrb[0].mxu0
    %2612 = vmatprep.mubr.f32.mxu0 %v278
    %2613 = vmatmul.mubr.f32.gmra.mrb[0].mxu0 %v277
    %v2614 = vpop.f32.mrb[0].mxu0
    %v2615 = vadd.f32 %v2360, %v2614
    %v2616 = vpop.f32.mrb[0].mxu0
    %2617 = vmatprep.mubr.f32.mxu0 %v293
    %2618 = vmatmul.mubr.f32.gmra.mrb[0].mxu0 %v292
    %v2619 = vpop.f32.mrb[0].mxu0
    %v2620 = vadd.f32 %v2365, %v2619
    %v2621 = vpop.f32.mrb[0].mxu0
    %2622 = vmatprep.mubr.f32.mxu0 %v308
    %2623 = vmatmul.mubr.f32.gmra.mrb[0].mxu0 %v307
    %v2624 = vpop.f32.mrb[0].mxu0
    %v2625 = vadd.f32 %v2370, %v2624
    %v2626 = vpop.f32.mrb[0].mxu0
    %2627 = vmatprep.mubr.f32.mxu0 %v323
    %2628 = vmatmul.mubr.f32.gmra.mrb[0].mxu0 %v322
    %v2629 = vpop.f32.mrb[0].mxu0
    %v2630 = vadd.f32 %v2375, %v2629
    %v2631 = vpop.f32.mrb[0].mxu0
    %2632 = vmatprep.mubr.f32.mxu0 %v338
    %2633 = vmatmul.mubr.f32.gmra.mrb[0].mxu0 %v337
    %v2634 = vpop.f32.mrb[0].mxu0
    %v2635 = vadd.f32 %v2380, %v2634
    %v2636 = vpop.f32.mrb[0].mxu0
    %2637 = vmatprep.mubr.f32.mxu0 %v353
    %2638 = vmatmul.mubr.f32.gmra.mrb[0].mxu0 %v352
    %v2639 = vpop.f32.mrb[0].mxu0
    %v2640 = vadd.f32 %v2385, %v2639
    %v2641 = vpop.f32.mrb[0].mxu0
    %2642 = vmatprep.mubr.f32.mxu0 %v368
    %2643 = vmatmul.mubr.f32.gmra.mrb[0].mxu0 %v367
    %v2644 = vpop.f32.mrb[0].mxu0
    %v2645 = vadd.f32 %v2390, %v2644
    %v2646 = vpop.f32.mrb[0].mxu0
    %2647 = vmatprep.mubr.f32.mxu0 %v383
    %2648 = vmatmul.mubr.f32.gmra.mrb[0].mxu0 %v382
    %v2649 = vpop.f32.mrb[0].mxu0
    %v2650 = vadd.f32 %v2395, %v2649
    %v2651 = vpop.f32.mrb[0].mxu0
    %2652 = vmatprep.mubr.f32.mxu0 %v398
    %2653 = vmatmul.mubr.f32.gmra.mrb[0].mxu0 %v397
    %v2654 = vpop.f32.mrb[0].mxu0
    %v2655 = vadd.f32 %v2400, %v2654
    %v2656 = vpop.f32.mrb[0].mxu0
    %2657 = vmatprep.mubr.f32.mxu0 %v413
    %2658 = vmatmul.mubr.f32.gmra.mrb[0].mxu0 %v412
    %v2659 = vpop.f32.mrb[0].mxu0
    %v2660 = vadd.f32 %v2405, %v2659
    %v2661 = vpop.f32.mrb[0].mxu0
    %2662 = vmatprep.mubr.f32.mxu0 %v428
    %2663 = vmatmul.mubr.f32.gmra.mrb[0].mxu0 %v427
    %v2664 = vpop.f32.mrb[0].mxu0
    %v2665 = vadd.f32 %v2410, %v2664
    %v2666 = vpop.f32.mrb[0].mxu0
    %2667 = vmatprep.mubr.f32.mxu0 %v443
    %2668 = vmatmul.mubr.f32.gmra.mrb[0].mxu0 %v442
    %v2669 = vpop.f32.mrb[0].mxu0
    %v2670 = vadd.f32 %v2415, %v2669
    %v2671 = vpop.f32.mrb[0].mxu0
    %2672 = vmatprep.mubr.f32.mxu0 %v458
    %2673 = vmatmul.mubr.f32.gmra.mrb[0].mxu0 %v457
    %v2674 = vpop.f32.mrb[0].mxu0
    %v2675 = vadd.f32 %v2420, %v2674
    %v2676 = vpop.f32.mrb[0].mxu0
    %2677 = vmatprep.mubr.f32.mxu0 %v473
    %2678 = vmatmul.mubr.f32.gmra.mrb[0].mxu0 %v472
    %v2679 = vpop.f32.mrb[0].mxu0
    %v2680 = vadd.f32 %v2425, %v2679
    %v2681 = vpop.f32.mrb[0].mxu0
    %2682 = vmatprep.mubr.f32.mxu0 %v488
    %2683 = vmatmul.mubr.f32.gmra.mrb[0].mxu0 %v487
    %v2684 = vpop.f32.mrb[0].mxu0
    %v2685 = vadd.f32 %v2430, %v2684
    %v2686 = vpop.f32.mrb[0].mxu0
    %2687 = vmatprep.mubr.f32.mxu0 %v503
    %2688 = vmatmul.mubr.f32.gmra.mrb[0].mxu0 %v502
    %v2689 = vpop.f32.mrb[0].mxu0
    %v2690 = vadd.f32 %v2435, %v2689
    %v2691 = vpop.f32.mrb[0].mxu0
    %2692 = vmatprep.mubr.f32.mxu0 %v518
    %2693 = vmatmul.mubr.f32.gmra.mrb[0].mxu0 %v517
    %v2694 = vpop.f32.mrb[0].mxu0
    %v2695 = vadd.f32 %v2440, %v2694
    %v2696 = vpop.f32.mrb[0].mxu0
    %2697 = vmatprep.mubr.f32.mxu0 %v533
    %2698 = vmatmul.mubr.f32.gmra.mrb[0].mxu0 %v532
    %v2699 = vpop.f32.mrb[0].mxu0
    %v2700 = vadd.f32 %v2445, %v2699
    %v2701 = vpop.f32.mrb[0].mxu0
    %2702 = vmatprep.mubr.f32.mxu0 %v548
    %2703 = vmatmul.mubr.f32.gmra.mrb[0].mxu0 %v547
    %v2704 = vpop.f32.mrb[0].mxu0
    %v2705 = vadd.f32 %v2450, %v2704
    %v2706 = vpop.f32.mrb[0].mxu0
    %2707 = vmatprep.mubr.f32.mxu0 %v563
    %2708 = vmatmul.mubr.f32.gmra.mrb[0].mxu0 %v562
    %v2709 = vpop.f32.mrb[0].mxu0
    %v2710 = vadd.f32 %v2455, %v2709
    %v2711 = vpop.f32.mrb[0].mxu0
    %2712 = vmatprep.mubr.f32.mxu0 %v578
    %2713 = vmatmul.mubr.f32.gmra.mrb[0].mxu0 %v577
    %v2714 = vpop.f32.mrb[0].mxu0
    %v2715 = vadd.f32 %v2460, %v2714
    %v2716 = vpop.f32.mrb[0].mxu0
    %2717 = vmatprep.mubr.f32.mxu0 %v593
    %2718 = vmatmul.mubr.f32.gmra.mrb[0].mxu0 %v592
    %v2719 = vpop.f32.mrb[0].mxu0
    %v2720 = vadd.f32 %v2465, %v2719
    %v2721 = vpop.f32.mrb[0].mxu0
    %2722 = vdwg.mxu0
    %2723 = vmatprep.subr.mxu0 0.0
    %2724 = vmatpush1.msra.mxu0 %v819
    %2725 = vmatprep.subr.mxu0 0.0
    %2726 = vmatpush1.msra.mxu0 %v820
    %2727 = vmatprep.subr.mxu0 0.0
    %2728 = vmatpush1.msra.mxu0 %v821
    %2729 = vmatprep.subr.mxu0 0.0
    %2730 = vmatpush1.msra.mxu0 %v822
    %2731 = vmatprep.subr.mxu0 0.0
    %2732 = vmatpush1.msra.mxu0 0.0
    %2733 = vmatprep.subr.mxu0 0.0
    %2734 = vmatpush1.msra.mxu0 0.0
    %2735 = vmatprep.subr.mxu0 0.0
    %2736 = vmatpush1.msra.mxu0 0.0
    %2737 = vmatprep.subr.mxu0 0.0
    %2738 = vmatpush1.msra.mxu0 0.0
    %2739 = vmatprep.subr.mxu0 0.0
    %2740 = vmatpush1.msra.mxu0 0.0
    %2741 = vmatprep.subr.mxu0 0.0
    %2742 = vmatpush1.msra.mxu0 0.0
    %2743 = vmatprep.subr.mxu0 0.0
    %2744 = vmatpush1.msra.mxu0 0.0
    %2745 = vmatprep.subr.mxu0 0.0
    %2746 = vmatpush1.msra.mxu0 0.0
    %2747 = vmatprep.subr.mxu0 0.0
    %2748 = vmatpush1.msra.mxu0 0.0
    %2749 = vmatprep.subr.mxu0 0.0
    %2750 = vmatpush1.msra.mxu0 0.0
    %2751 = vmatprep.subr.mxu0 0.0
    %2752 = vmatpush1.msra.mxu0 0.0
    %2753 = vmatprep.subr.mxu0 0.0
    %2754 = vmatpush1.msra.mxu0 0.0
    %2755 = vmatprep.subr.mxu0 0.0
    %2756 = vmatpush1.msra.mxu0 0.0
    %2757 = vmatprep.subr.mxu0 0.0
    %2758 = vmatpush1.msra.mxu0 0.0
    %2759 = vmatprep.subr.mxu0 0.0
    %2760 = vmatpush1.msra.mxu0 0.0
    %2761 = vmatprep.subr.mxu0 0.0
    %2762 = vmatpush1.msra.mxu0 0.0
    %2763 = vmatprep.subr.mxu0 0.0
    %2764 = vmatpush1.msra.mxu0 0.0
    %2765 = vmatprep.subr.mxu0 0.0
    %2766 = vmatpush1.msra.mxu0 0.0
    %2767 = vmatprep.subr.mxu0 0.0
    %2768 = vmatpush1.msra.mxu0 0.0
    %2769 = vmatprep.subr.mxu0 0.0
    %2770 = vmatpush1.msra.mxu0 0.0
    %2771 = vmatprep.subr.mxu0 0.0
    %2772 = vmatpush1.msra.mxu0 0.0
    %2773 = vmatprep.subr.mxu0 0.0
    %2774 = vmatpush1.msra.mxu0 0.0
    %2775 = vmatprep.subr.mxu0 0.0
    %2776 = vmatpush1.msra.mxu0 0.0
    %2777 = vmatprep.subr.mxu0 0.0
    %2778 = vmatpush1.msra.mxu0 0.0
    %2779 = vmatprep.subr.mxu0 0.0
    %2780 = vmatpush1.msra.mxu0 0.0
    %2781 = vmatprep.subr.mxu0 0.0
    %2782 = vmatpush1.msra.mxu0 0.0
    %2783 = vmatprep.subr.mxu0 0.0
    %2784 = vmatpush1.msra.mxu0 0.0
    %2785 = vmatprep.subr.mxu0 0.0
    %2786 = vmatpush1.msra.mxu0 0.0
    %2787 = vmatprep.mubr.f32.mxu0 0.0
    %2788 = vmatmul.mubr.f32.gmra.mrb[0].mxu0 %v825
    %v2789 = vpop.f32.mrb[0].mxu0
    %v2790 = vadd.f32 %v2535, %v2789
    %v2791 = vpop.f32.mrb[0].mxu0
    %2792 = vmatprep.mubr.f32.mxu0 0.0
    %2793 = vmatmul.mubr.f32.gmra.mrb[0].mxu0 %v828
    %v2794 = vpop.f32.mrb[0].mxu0
    %v2795 = vadd.f32 %v2540, %v2794
    %v2796 = vpop.f32.mrb[0].mxu0
    %2797 = vmatprep.mubr.f32.mxu0 0.0
    %2798 = vmatmul.mubr.f32.gmra.mrb[0].mxu0 %v831
    %v2799 = vpop.f32.mrb[0].mxu0
    %v2800 = vadd.f32 %v2545, %v2799
    %v2801 = vpop.f32.mrb[0].mxu0
    %2802 = vmatprep.mubr.f32.mxu0 0.0
    %2803 = vmatmul.mubr.f32.gmra.mrb[0].mxu0 %v834
    %v2804 = vpop.f32.mrb[0].mxu0
    %v2805 = vadd.f32 %v2550, %v2804
    %v2806 = vpop.f32.mrb[0].mxu0
    %2807 = vmatprep.mubr.f32.mxu0 0.0
    %2808 = vmatmul.mubr.f32.gmra.mrb[0].mxu0 %v837
    %v2809 = vpop.f32.mrb[0].mxu0
    %v2810 = vadd.f32 %v2555, %v2809
    %v2811 = vpop.f32.mrb[0].mxu0
    %2812 = vmatprep.mubr.f32.mxu0 0.0
    %2813 = vmatmul.mubr.f32.gmra.mrb[0].mxu0 %v840
    %v2814 = vpop.f32.mrb[0].mxu0
    %v2815 = vadd.f32 %v2560, %v2814
    %v2816 = vpop.f32.mrb[0].mxu0
    %2817 = vmatprep.mubr.f32.mxu0 0.0
    %2818 = vmatmul.mubr.f32.gmra.mrb[0].mxu0 %v843
    %v2819 = vpop.f32.mrb[0].mxu0
    %v2820 = vadd.f32 %v2565, %v2819
    %v2821 = vpop.f32.mrb[0].mxu0
    %2822 = vmatprep.mubr.f32.mxu0 0.0
    %2823 = vmatmul.mubr.f32.gmra.mrb[0].mxu0 %v846
    %v2824 = vpop.f32.mrb[0].mxu0
    %v2825 = vadd.f32 %v2570, %v2824
    %v2826 = vpop.f32.mrb[0].mxu0
    %2827 = vmatprep.mubr.f32.mxu0 0.0
    %2828 = vmatmul.mubr.f32.gmra.mrb[0].mxu0 %v849
    %v2829 = vpop.f32.mrb[0].mxu0
    %v2830 = vadd.f32 %v2575, %v2829
    %v2831 = vpop.f32.mrb[0].mxu0
    %2832 = vmatprep.mubr.f32.mxu0 0.0
    %2833 = vmatmul.mubr.f32.gmra.mrb[0].mxu0 %v852
    %v2834 = vpop.f32.mrb[0].mxu0
    %v2835 = vadd.f32 %v2580, %v2834
    %v2836 = vpop.f32.mrb[0].mxu0
    %2837 = vmatprep.mubr.f32.mxu0 0.0
    %2838 = vmatmul.mubr.f32.gmra.mrb[0].mxu0 %v855
    %v2839 = vpop.f32.mrb[0].mxu0
    %v2840 = vadd.f32 %v2585, %v2839
    %v2841 = vpop.f32.mrb[0].mxu0
    %2842 = vmatprep.mubr.f32.mxu0 0.0
    %2843 = vmatmul.mubr.f32.gmra.mrb[0].mxu0 %v858
    %v2844 = vpop.f32.mrb[0].mxu0
    %v2845 = vadd.f32 %v2590, %v2844
    %v2846 = vpop.f32.mrb[0].mxu0
    %2847 = vmatprep.mubr.f32.mxu0 0.0
    %2848 = vmatmul.mubr.f32.gmra.mrb[0].mxu0 %v861
    %v2849 = vpop.f32.mrb[0].mxu0
    %v2850 = vadd.f32 %v2595, %v2849
    %v2851 = vpop.f32.mrb[0].mxu0
    %2852 = vmatprep.mubr.f32.mxu0 0.0
    %2853 = vmatmul.mubr.f32.gmra.mrb[0].mxu0 %v864
    %v2854 = vpop.f32.mrb[0].mxu0
    %v2855 = vadd.f32 %v2600, %v2854
    %v2856 = vpop.f32.mrb[0].mxu0
    %2857 = vmatprep.mubr.f32.mxu0 0.0
    %2858 = vmatmul.mubr.f32.gmra.mrb[0].mxu0 %v867
    %v2859 = vpop.f32.mrb[0].mxu0
    %v2860 = vadd.f32 %v2605, %v2859
    %v2861 = vpop.f32.mrb[0].mxu0
    %2862 = vmatprep.mubr.f32.mxu0 0.0
    %2863 = vmatmul.mubr.f32.gmra.mrb[0].mxu0 %v870
    %v2864 = vpop.f32.mrb[0].mxu0
    %v2865 = vadd.f32 %v2610, %v2864
    %v2866 = vpop.f32.mrb[0].mxu0
    %2867 = vmatprep.mubr.f32.mxu0 0.0
    %2868 = vmatmul.mubr.f32.gmra.mrb[0].mxu0 %v873
    %v2869 = vpop.f32.mrb[0].mxu0
    %v2870 = vadd.f32 %v2615, %v2869
    %v2871 = vpop.f32.mrb[0].mxu0
    %2872 = vmatprep.mubr.f32.mxu0 0.0
    %2873 = vmatmul.mubr.f32.gmra.mrb[0].mxu0 %v876
    %v2874 = vpop.f32.mrb[0].mxu0
    %v2875 = vadd.f32 %v2620, %v2874
    %v2876 = vpop.f32.mrb[0].mxu0
    %2877 = vmatprep.mubr.f32.mxu0 0.0
    %2878 = vmatmul.mubr.f32.gmra.mrb[0].mxu0 %v879
    %v2879 = vpop.f32.mrb[0].mxu0
    %v2880 = vadd.f32 %v2625, %v2879
    %v2881 = vpop.f32.mrb[0].mxu0
    %2882 = vmatprep.mubr.f32.mxu0 0.0
    %2883 = vmatmul.mubr.f32.gmra.mrb[0].mxu0 %v882
    %v2884 = vpop.f32.mrb[0].mxu0
    %v2885 = vadd.f32 %v2630, %v2884
    %v2886 = vpop.f32.mrb[0].mxu0
    %2887 = vmatprep.mubr.f32.mxu0 0.0
    %2888 = vmatmul.mubr.f32.gmra.mrb[0].mxu0 %v885
    %v2889 = vpop.f32.mrb[0].mxu0
    %v2890 = vadd.f32 %v2635, %v2889
    %v2891 = vpop.f32.mrb[0].mxu0
    %2892 = vmatprep.mubr.f32.mxu0 0.0
    %2893 = vmatmul.mubr.f32.gmra.mrb[0].mxu0 %v888
    %v2894 = vpop.f32.mrb[0].mxu0
    %v2895 = vadd.f32 %v2640, %v2894
    %v2896 = vpop.f32.mrb[0].mxu0
    %2897 = vmatprep.mubr.f32.mxu0 0.0
    %2898 = vmatmul.mubr.f32.gmra.mrb[0].mxu0 %v891
    %v2899 = vpop.f32.mrb[0].mxu0
    %v2900 = vadd.f32 %v2645, %v2899
    %v2901 = vpop.f32.mrb[0].mxu0
    %2902 = vmatprep.mubr.f32.mxu0 0.0
    %2903 = vmatmul.mubr.f32.gmra.mrb[0].mxu0 %v894
    %v2904 = vpop.f32.mrb[0].mxu0
    %v2905 = vadd.f32 %v2650, %v2904
    %v2906 = vpop.f32.mrb[0].mxu0
    %2907 = vmatprep.mubr.f32.mxu0 0.0
    %2908 = vmatmul.mubr.f32.gmra.mrb[0].mxu0 %v897
    %v2909 = vpop.f32.mrb[0].mxu0
    %v2910 = vadd.f32 %v2655, %v2909
    %v2911 = vpop.f32.mrb[0].mxu0
    %2912 = vmatprep.mubr.f32.mxu0 0.0
    %2913 = vmatmul.mubr.f32.gmra.mrb[0].mxu0 %v900
    %v2914 = vpop.f32.mrb[0].mxu0
    %v2915 = vadd.f32 %v2660, %v2914
    %v2916 = vpop.f32.mrb[0].mxu0
    %2917 = vmatprep.mubr.f32.mxu0 0.0
    %2918 = vmatmul.mubr.f32.gmra.mrb[0].mxu0 %v903
    %v2919 = vpop.f32.mrb[0].mxu0
    %v2920 = vadd.f32 %v2665, %v2919
    %v2921 = vpop.f32.mrb[0].mxu0
    %2922 = vmatprep.mubr.f32.mxu0 0.0
    %2923 = vmatmul.mubr.f32.gmra.mrb[0].mxu0 %v906
    %v2924 = vpop.f32.mrb[0].mxu0
    %v2925 = vadd.f32 %v2670, %v2924
    %v2926 = vpop.f32.mrb[0].mxu0
    %2927 = vmatprep.mubr.f32.mxu0 0.0
    %2928 = vmatmul.mubr.f32.gmra.mrb[0].mxu0 %v909
    %v2929 = vpop.f32.mrb[0].mxu0
    %v2930 = vadd.f32 %v2675, %v2929
    %v2931 = vpop.f32.mrb[0].mxu0
    %2932 = vmatprep.mubr.f32.mxu0 0.0
    %2933 = vmatmul.mubr.f32.gmra.mrb[0].mxu0 %v912
    %v2934 = vpop.f32.mrb[0].mxu0
    %v2935 = vadd.f32 %v2680, %v2934
    %v2936 = vpop.f32.mrb[0].mxu0
    %2937 = vmatprep.mubr.f32.mxu0 0.0
    %2938 = vmatmul.mubr.f32.gmra.mrb[0].mxu0 %v915
    %v2939 = vpop.f32.mrb[0].mxu0
    %v2940 = vadd.f32 %v2685, %v2939
    %v2941 = vpop.f32.mrb[0].mxu0
    %2942 = vmatprep.mubr.f32.mxu0 0.0
    %2943 = vmatmul.mubr.f32.gmra.mrb[0].mxu0 %v918
    %v2944 = vpop.f32.mrb[0].mxu0
    %v2945 = vadd.f32 %v2690, %v2944
    %v2946 = vpop.f32.mrb[0].mxu0
    %2947 = vmatprep.mubr.f32.mxu0 0.0
    %2948 = vmatmul.mubr.f32.gmra.mrb[0].mxu0 %v921
    %v2949 = vpop.f32.mrb[0].mxu0
    %v2950 = vadd.f32 %v2695, %v2949
    %v2951 = vpop.f32.mrb[0].mxu0
    %2952 = vmatprep.mubr.f32.mxu0 0.0
    %2953 = vmatmul.mubr.f32.gmra.mrb[0].mxu0 %v924
    %v2954 = vpop.f32.mrb[0].mxu0
    %v2955 = vadd.f32 %v2700, %v2954
    %v2956 = vpop.f32.mrb[0].mxu0
    %2957 = vmatprep.mubr.f32.mxu0 0.0
    %2958 = vmatmul.mubr.f32.gmra.mrb[0].mxu0 %v927
    %v2959 = vpop.f32.mrb[0].mxu0
    %v2960 = vadd.f32 %v2705, %v2959
    %v2961 = vpop.f32.mrb[0].mxu0
    %2962 = vmatprep.mubr.f32.mxu0 0.0
    %2963 = vmatmul.mubr.f32.gmra.mrb[0].mxu0 %v930
    %v2964 = vpop.f32.mrb[0].mxu0
    %v2965 = vadd.f32 %v2710, %v2964
    %v2966 = vpop.f32.mrb[0].mxu0
    %2967 = vmatprep.mubr.f32.mxu0 0.0
    %2968 = vmatmul.mubr.f32.gmra.mrb[0].mxu0 %v933
    %v2969 = vpop.f32.mrb[0].mxu0
    %v2970 = vadd.f32 %v2715, %v2969
    %v2971 = vpop.f32.mrb[0].mxu0
    %2972 = vmatprep.mubr.f32.mxu0 0.0
    %2973 = vmatmul.mubr.f32.gmra.mrb[0].mxu0 %v936
    %v2974 = vpop.f32.mrb[0].mxu0
    %v2975 = vadd.f32 %v2720, %v2974
    %v2976 = vpop.f32.mrb[0].mxu0
    %2977 = vdwg.mxu0
    %vm2978 = vcmask 400384
    %2979 = vst.msk [vmem:[%s2] sm:$0xff] %vm2978, %v2790
    %2980 = vst.msk [vmem:[%s2 + $0x8] sm:$0xff] %vm2978, %v2795
    %2981 = vst.msk [vmem:[%s2 + $0x10] sm:$0xff] %vm2978, %v2800
    %2982 = vst.msk [vmem:[%s2 + $0x18] sm:$0xff] %vm2978, %v2805
    %2983 = vst.msk [vmem:[%s2 + $0x20] sm:$0xff] %vm2978, %v2810
    %2984 = vst.msk [vmem:[%s2 + $0x28] sm:$0xff] %vm2978, %v2815
    %2985 = vst.msk [vmem:[%s2 + $0x30] sm:$0xff] %vm2978, %v2820
    %2986 = vst.msk [vmem:[%s2 + $0x38] sm:$0xff] %vm2978, %v2825
    %2987 = vst.msk [vmem:[%s2 + $0x40] sm:$0xff] %vm2978, %v2830
    %2988 = vst.msk [vmem:[%s2 + $0x48] sm:$0xff] %vm2978, %v2835
    %2989 = vst.msk [vmem:[%s2 + $0x50] sm:$0xff] %vm2978, %v2840
    %2990 = vst.msk [vmem:[%s2 + $0x58] sm:$0xff] %vm2978, %v2845
    %2991 = vst.msk [vmem:[%s2 + $0x60] sm:$0xff] %vm2978, %v2850
    %2992 = vst.msk [vmem:[%s2 + $0x68] sm:$0xff] %vm2978, %v2855
    %2993 = vst.msk [vmem:[%s2 + $0x70] sm:$0xff] %vm2978, %v2860
    %2994 = vst.msk [vmem:[%s2 + $0x78] sm:$0xff] %vm2978, %v2865
    %2995 = vst.msk [vmem:[%s2 + $0x80] sm:$0xff] %vm2978, %v2870
    %2996 = vst.msk [vmem:[%s2 + $0x88] sm:$0xff] %vm2978, %v2875
    %2997 = vst.msk [vmem:[%s2 + $0x90] sm:$0xff] %vm2978, %v2880
    %2998 = vst.msk [vmem:[%s2 + $0x98] sm:$0xff] %vm2978, %v2885
    %2999 = vst.msk [vmem:[%s2 + $0xa0] sm:$0xff] %vm2978, %v2890
    %3000 = vst.msk [vmem:[%s2 + $0xa8] sm:$0xff] %vm2978, %v2895
    %3001 = vst.msk [vmem:[%s2 + $0xb0] sm:$0xff] %vm2978, %v2900
    %3002 = vst.msk [vmem:[%s2 + $0xb8] sm:$0xff] %vm2978, %v2905
    %3003 = vst.msk [vmem:[%s2 + $0xc0] sm:$0xff] %vm2978, %v2910
    %3004 = vst.msk [vmem:[%s2 + $0xc8] sm:$0xff] %vm2978, %v2915
    %3005 = vst.msk [vmem:[%s2 + $0xd0] sm:$0xff] %vm2978, %v2920
    %3006 = vst.msk [vmem:[%s2 + $0xd8] sm:$0xff] %vm2978, %v2925
    %3007 = vst.msk [vmem:[%s2 + $0xe0] sm:$0xff] %vm2978, %v2930
    %3008 = vst.msk [vmem:[%s2 + $0xe8] sm:$0xff] %vm2978, %v2935
    %3009 = vst.msk [vmem:[%s2 + $0xf0] sm:$0xff] %vm2978, %v2940
    %3010 = vst.msk [vmem:[%s2 + $0xf8] sm:$0xff] %vm2978, %v2945
    %3011 = vst.msk [vmem:[%s2 + $0x100] sm:$0xff] %vm2978, %v2950
    %3012 = vst.msk [vmem:[%s2 + $0x108] sm:$0xff] %vm2978, %v2955
    %3013 = vst.msk [vmem:[%s2 + $0x110] sm:$0xff] %vm2978, %v2960
    %3014 = vst.msk [vmem:[%s2 + $0x118] sm:$0xff] %vm2978, %v2965
    %3015 = vst.msk [vmem:[%s2 + $0x120] sm:$0xff] %vm2978, %v2970
    %3016 = vst.msk [vmem:[%s2 + $0x128] sm:$0xff] %vm2978, %v2975
    // Predicated region
    $region14: #{tpu_custom_call.1} parent=1 // pred_check
      _
    $region15: #{tpu_custom_call.1} parent=1 // pred_check_branch
      %3018 = sbr.rel (0) target = $region17
    $region16: #{tpu_custom_call.1} parent=1 // pred_region
      _
    $region17: #{tpu_custom_call.1} parent=1 // pred_fallthru
      _
    // Predicated region
    $region18: #{tpu_custom_call.1} parent=1 // pred_check
      _
    $region19: #{tpu_custom_call.1} parent=1 // pred_check_branch
      %3020 = sbr.rel (0) target = $region21
    $region20: #{tpu_custom_call.1} parent=1 // pred_region
      _
    $region21: #{tpu_custom_call.1} parent=1 // pred_fallthru
      _
    %3021 = vsyncpa [#allocation3], 1

</llo_original>
